<compile_context>
chip_gen: v7x
topology: tpu7x:2x2x1
jax: 0.10.0
libtpu: 0.0.40
codegen_flags: <defaults>
</compile_context>

<pallas_src>
import jax
import jax.numpy as jnp
from jax import lax
from jax.experimental import pallas as pl
from jax.experimental.pallas import tpu as pltpu


def _round_up(x, m):
    return ((x + m - 1) // m) * m


def _pick_time_chunk(T, cap=32):
    """Largest divisor of T that is <= cap (bounds the gx scratch size)."""
    for c in range(min(T, cap), 0, -1):
        if T % c == 0:
            return c
    return T


# ----------------------------------------------------------------------------
# Fused kernel: all LSTM layers + both Bayesian heads, single launch, no grid.
# ----------------------------------------------------------------------------
def _make_fused_kernel(num_layers, T, Tc, Bp, Hp, O, in_dims, unroll):
    nc = T // Tc
    rows_per_chunk = Tc * Bp

    def kernel(*args):
        x_ref = args[0]                               # (T*Bp, I0p)  bf16, VMEM
        layer_refs = args[1:1 + 3 * num_layers]       # [w_ih(HBM), w_hh(HBM), bias(VMEM)]
        hw_ref = args[1 + 3 * num_layers]             # (Hp, 2*O)    f32
        hb_ref = args[2 + 3 * num_layers]             # (1, 2*O)     f32
        out_ref = args[3 + 3 * num_layers]            # (Bp, 2*O)    f32  [mu | sigma]
        wih_buf, whh_buf, gx_scr, seq_scr, dma_sem = args[4 + 3 * num_layers:]

        wih_hbm = [layer_refs[3 * l + 0] for l in range(num_layers)]
        whh_hbm = [layer_refs[3 * l + 1] for l in range(num_layers)]
        b_refs = [layer_refs[3 * l + 2] for l in range(num_layers)]

        # Manual double-buffered streaming of the big LSTM weights: layer l+1's
        # DMA is issued before layer l's compute, so it hides behind it.
        copies = []
        for l in range(num_layers):
            slot = l % 2
            copies.append((
                pltpu.make_async_copy(wih_hbm[l],
                                      wih_buf.at[slot, :in_dims[l], :],
                                      dma_sem.at[slot, 0]),
                pltpu.make_async_copy(whh_hbm[l],
                                      whh_buf.at[slot],
                                      dma_sem.at[slot, 1]),
            ))
        copies[0][0].start()
        copies[0][1].start()

        h_last = jnp.zeros((Bp, Hp), jnp.float32)

        for layer in range(num_layers):
            slot = layer % 2
            in_dim = in_dims[layer]
            write_seq = layer < num_layers - 1        # only needed as next layer's input

            copies[layer][0].wait()
            copies[layer][1].wait()
            if layer + 1 < num_layers:
                copies[layer + 1][0].start()
                copies[layer + 1][1].start()

            def chunk_body(ck, carry, layer=layer, slot=slot,
                           in_dim=in_dim, write_seq=write_seq):
                # Hoisted input projection for this time-chunk: one (Tc*Bp, in)
                # x (in, 4Hp) bf16 matmul, f32 accumulation, bias folded once.
                # TODO(synk): overlap this projection with the previous chunk's
                # recurrence via pltpu.emit_pipeline / a 2-deep gx buffer.
                row0 = pl.multiple_of(ck * rows_per_chunk, rows_per_chunk)
                if layer == 0:
                    xin = x_ref[pl.ds(row0, rows_per_chunk), :]
                else:
                    xin = seq_scr[pl.ds(row0, rows_per_chunk), :]
                gx = jnp.dot(xin, wih_buf[slot, :in_dim, :],
                             preferred_element_type=jnp.float32)
                gx_scr[...] = gx + b_refs[layer][...]

                def step(t, hc):
                    h_prev, c_prev = hc
                    r = pl.multiple_of(t * Bp, Bp)
                    # Small recurrent matmul on the serial path: bf16 LHS/RHS,
                    # f32 accumulation.
                    gates = gx_scr[pl.ds(r, Bp), :] + jnp.dot(
                        h_prev.astype(jnp.bfloat16), whh_buf[slot],
                        preferred_element_type=jnp.float32)
                    # PyTorch gate order i | f | g | o; Hp multiple of 128 so
                    # every slice is lane-aligned.
                    # TODO(synk): bf16 gate activations (~2x EUP on v6e/v7x)
                    # left out to keep f32 accuracy on all chip generations.
                    i_g = jax.nn.sigmoid(gates[:, 0 * Hp:1 * Hp])
                    f_g = jax.nn.sigmoid(gates[:, 1 * Hp:2 * Hp])
                    g_g = jnp.tanh(gates[:, 2 * Hp:3 * Hp])
                    o_g = jax.nn.sigmoid(gates[:, 3 * Hp:4 * Hp])
                    c_new = f_g * c_prev + i_g * g_g
                    h_new = o_g * jnp.tanh(c_new)
                    if write_seq:
                        seq_scr[pl.ds(row0 + r, Bp), :] = h_new.astype(jnp.bfloat16)
                    return (h_new, c_new)

                return lax.fori_loop(0, Tc, step, carry, unroll=unroll)

            init = (jnp.zeros((Bp, Hp), jnp.float32),
                    jnp.zeros((Bp, Hp), jnp.float32))
            h_last, _ = lax.fori_loop(0, nc, chunk_body, init)

        # Both (pre-sampled) Bayesian heads fused: one matmul, one dense store.
        y = jnp.dot(h_last, hw_ref[...],
                    preferred_element_type=jnp.float32) + hb_ref[...]  # (Bp, 2*O)
        col = lax.broadcasted_iota(jnp.int32, y.shape, 1)
        # exp() also touches the mu half but the select discards it (no UB).
        out_ref[...] = jnp.where(col >= O, jnp.exp(y), y)

    return kernel


# ----------------------------------------------------------------------------
# Parameter packing: PyTorch-layout weights -> padded, transposed, bf16 layout.
# ----------------------------------------------------------------------------
def _pack_lstm_layer(w_ih, w_hh, b_ih, b_hh, H, Hp, in_dim, in_pad):
    """w_ih: (4H, in_dim); w_hh: (4H, H); b_*: (4H,).  Gate order i|f|g|o."""
    def pad_gate_rows(w):                              # (4H, X) -> (4Hp, X)
        X = w.shape[1]
        wg = w.reshape(4, H, X)
        wg = jnp.pad(wg, ((0, 0), (0, Hp - H), (0, 0)))
        return wg.reshape(4 * Hp, X)

    w_ih_p = pad_gate_rows(w_ih)                                   # (4Hp, in_dim)
    w_ih_p = jnp.pad(w_ih_p, ((0, 0), (0, in_pad - in_dim)))       # (4Hp, in_pad)
    w_hh_p = pad_gate_rows(w_hh)                                   # (4Hp, H)
    w_hh_p = jnp.pad(w_hh_p, ((0, 0), (0, Hp - H)))                # (4Hp, Hp)
    bias_p = pad_gate_rows((b_ih + b_hh).reshape(4 * H, 1))        # (4Hp, 1)
    return dict(w_ih_t=w_ih_p.T.astype(jnp.bfloat16),              # (in_pad, 4Hp)
                w_hh_t=w_hh_p.T.astype(jnp.bfloat16),              # (Hp, 4Hp)
                bias=bias_p.reshape(1, 4 * Hp).astype(jnp.float32))


def _pack_heads(w_fc, b_fc, w_sg, b_sg, H, Hp):
    """w_*: (O, H); b_*: (O,).  -> (Hp, 2O), (1, 2O) with [fc | sigma] columns."""
    O = w_fc.shape[0]
    w = jnp.concatenate([w_fc, w_sg], axis=0)          # (2O, H)
    w = jnp.pad(w, ((0, 0), (0, Hp - H)))              # (2O, Hp)
    b = jnp.concatenate([b_fc, b_sg], axis=0)          # (2O,)
    return w.T.astype(jnp.float32), b.reshape(1, 2 * O).astype(jnp.float32)


def init_params(key, input_size, hidden_size, output_size, num_layers,
                prior_sigma=0.1):
    """Returns (kernel_params, raw_pytorch_layout_params)."""
    H = hidden_size
    Hp = _round_up(H, 128)
    I0p = _round_up(input_size, 16)          # bf16 sublane packing for the x / W_ih rows
    bound = 1.0 / float(H) ** 0.5

    layers, raw_layers = [], []
    for layer in range(num_layers):
        in_dim = input_size if layer == 0 else H
        in_pad = I0p if layer == 0 else Hp
        key, k1, k2, k3, k4 = jax.random.split(key, 5)
        w_ih = jax.random.uniform(k1, (4 * H, in_dim), jnp.float32, -bound, bound)
        w_hh = jax.random.uniform(k2, (4 * H, H), jnp.float32, -bound, bound)
        b_ih = jax.random.uniform(k3, (4 * H,), jnp.float32, -bound, bound)
        b_hh = jax.random.uniform(k4, (4 * H,), jnp.float32, -bound, bound)
        layers.append(_pack_lstm_layer(w_ih, w_hh, b_ih, b_hh, H, Hp, in_dim, in_pad))
        raw_layers.append((w_ih, w_hh, b_ih, b_hh))

    def sample_bayes_linear(k, in_f, out_f):
        # torchbnn BayesLinear-style sampling: W = W_mu + exp(W_log_sigma) * eps
        k_mu, k_bmu, k_we, k_be = jax.random.split(k, 4)
        w_mu = jax.random.normal(k_mu, (out_f, in_f), jnp.float32) * 0.1
        b_mu = jax.random.normal(k_bmu, (out_f,), jnp.float32) * 0.1
        w_ls = jnp.full((out_f, in_f), jnp.log(prior_sigma), jnp.float32)
        b_ls = jnp.full((out_f,), jnp.log(prior_sigma), jnp.float32)
        w = w_mu + jnp.exp(w_ls) * jax.random.normal(k_we, (out_f, in_f), jnp.float32)
        b = b_mu + jnp.exp(b_ls) * jax.random.normal(k_be, (out_f,), jnp.float32)
        return w, b

    key, k_fc, k_sg = jax.random.split(key, 3)
    w_fc, b_fc = sample_bayes_linear(k_fc, H, output_size)
    w_sg, b_sg = sample_bayes_linear(k_sg, H, output_size)
    heads_w, heads_b = _pack_heads(w_fc, b_fc, w_sg, b_sg, H, Hp)

    params = {"lstm": layers, "heads_w": heads_w, "heads_b": heads_b}
    raw = {"lstm": raw_layers, "w_fc": w_fc, "b_fc": b_fc,
           "w_sg": w_sg, "b_sg": b_sg}
    return params, raw


# ----------------------------------------------------------------------------
# Forward pass: one pallas_call for the whole module.
# ----------------------------------------------------------------------------
@jax.jit
def lstm_bnn_forward(x_bti, params):
    # x_bti: (B, T, I) batch-first, like the PyTorch module.
    B, T, I = x_bti.shape
    # Pad batch to a multiple of 16 (bf16 sublane packing + more MXU rows).
    # Callers should batch multiple sequences / MC samples to fill this further.
    Bp = _round_up(max(B, 1), 16)
    Hp = params["lstm"][0]["w_hh_t"].shape[0]
    I0p = params["lstm"][0]["w_ih_t"].shape[0]
    O = params["heads_w"].shape[1] // 2
    num_layers = len(params["lstm"])
    Tc = _pick_time_chunk(T)
    nc = T // Tc
    Imax = max(I0p, Hp)
    in_dims = [I0p] + [Hp] * (num_layers - 1)
    unroll = max(1, min(Tc, 8))                       # partial, not full, unroll

    x = jnp.transpose(x_bti, (1, 0, 2)).astype(jnp.float32)        # (T, B, I)
    x = jnp.pad(x, ((0, 0), (0, Bp - B), (0, I0p - I)))            # (T, Bp, I0p)
    x = x.reshape(T * Bp, I0p).astype(jnp.bfloat16)                # flat, bf16

    flat_weights = []
    for lp in params["lstm"]:
        flat_weights += [lp["w_ih_t"], lp["w_hh_t"], lp["bias"]]

    vmem_spec = pl.BlockSpec(memory_space=pltpu.MemorySpace.VMEM)
    hbm_spec = pl.BlockSpec(memory_space=pl.ANY)     # big weights stay in HBM, streamed
    in_specs = [vmem_spec]
    for _ in range(num_layers):
        in_specs += [hbm_spec, hbm_spec, vmem_spec]
    in_specs += [vmem_spec, vmem_spec]

    scratch_shapes = [
        pltpu.VMEM((2, Imax, 4 * Hp), jnp.bfloat16),   # double-buffered W_ih
        pltpu.VMEM((2, Hp, 4 * Hp), jnp.bfloat16),     # double-buffered W_hh
        pltpu.VMEM((Tc * Bp, 4 * Hp), jnp.float32),    # per-chunk gate projection
        pltpu.VMEM((T * Bp, Hp), jnp.bfloat16),        # inter-layer hidden sequence
        pltpu.SemaphoreType.DMA((2, 2)),               # [slot, {w_ih, w_hh}]
    ]

    # Explicit VMEM budget sized from the actual footprint (with headroom),
    # clamped so it is valid on v5e/v6e (128 MiB) and v7x (64 MiB).
    vmem_bytes = (T * Bp * I0p * 2
                  + 2 * Imax * 4 * Hp * 2 + 2 * Hp * 4 * Hp * 2
                  + Tc * Bp * 4 * Hp * 4 + T * Bp * Hp * 2
                  + num_layers * 4 * Hp * 4
                  + Hp * 2 * O * 4 + 2 * O * 4 + Bp * 2 * O * 4)
    vmem_limit = int(min(max(2 * vmem_bytes + (2 << 20), 32 << 20), 64 << 20))

    kernel = _make_fused_kernel(num_layers, T, Tc, Bp, Hp, O, in_dims, unroll)
    out = pl.pallas_call(
        kernel,
        out_shape=jax.ShapeDtypeStruct((Bp, 2 * O), jnp.float32),
        in_specs=in_specs,
        out_specs=vmem_spec,
        scratch_shapes=scratch_shapes,
        compiler_params=pltpu.CompilerParams(vmem_limit_bytes=vmem_limit),
    )(x, *flat_weights, params["heads_w"], params["heads_b"])

    mu = out[:B, :O]
    sigma = out[:B, O:]
    return mu, sigma


# ----------------------------------------------------------------------------
# Pure-JAX reference (unpadded, f32, PyTorch-layout math) for a sanity check.
# ----------------------------------------------------------------------------
def _reference_forward(x_bti, raw):
    B, T, _ = x_bti.shape
    h_seq = x_bti.astype(jnp.float32)
    for (w_ih, w_hh, b_ih, b_hh) in raw["lstm"]:
        H = w_hh.shape[1]
        h = jnp.zeros((B, H), jnp.float32)
        c = jnp.zeros((B, H), jnp.float32)
        outs = []
        for t in range(T):
            g = h_seq[:, t, :] @ w_ih.T + h @ w_hh.T + b_ih + b_hh
            i = jax.nn.sigmoid(g[:, 0 * H:1 * H])
            f = jax.nn.sigmoid(g[:, 1 * H:2 * H])
            gg = jnp.tanh(g[:, 2 * H:3 * H])
            o = jax.nn.sigmoid(g[:, 3 * H:4 * H])
            c = f * c + i * gg
            h = o * jnp.tanh(c)
            outs.append(h)
        h_seq = jnp.stack(outs, axis=1)
    h_last = h_seq[:, -1, :]
    mu = h_last @ raw["w_fc"].T + raw["b_fc"]
    sigma = jnp.exp(h_last @ raw["w_sg"].T + raw["b_sg"])
    return mu, sigma


if __name__ == "__main__":
    B, T = 2, 8
    input_size, hidden_size, output_size, num_layers = 16, 32, 4, 2

    key = jax.random.PRNGKey(0)
    k_params, k_x = jax.random.split(key)
    params, raw = init_params(k_params, input_size, hidden_size, output_size,
                              num_layers)
    x = jax.random.normal(k_x, (B, T, input_size), jnp.float32)

    mu, sigma = lstm_bnn_forward(x, params)
    jax.block_until_ready((mu, sigma))

    assert mu.shape == (B, output_size) and sigma.shape == (B, output_size)
    assert bool(jnp.all(jnp.isfinite(mu))) and bool(jnp.all(sigma > 0))

    # Tolerance accounts for the bf16 weight/activation path (f32 accumulation).
    mu_ref, sigma_ref = _reference_forward(x, raw)
    assert bool(jnp.allclose(mu, mu_ref, rtol=5e-2, atol=5e-2))
    assert bool(jnp.allclose(sigma, sigma_ref, rtol=5e-2, atol=5e-2))

    print("KERNEL_OK")
</pallas_src>

<mosaic_0001>
module attributes {stable_mosaic.version = 11 : i64} {
  func.func @kernel(%arg0: memref<128x16xbf16, #tpu.memory_space<vmem>>, %arg1: memref<16x512xbf16, #tpu.memory_space<any>>, %arg2: memref<128x512xbf16, #tpu.memory_space<any>>, %arg3: memref<1x512xf32, #tpu.memory_space<vmem>>, %arg4: memref<128x512xbf16, #tpu.memory_space<any>>, %arg5: memref<128x512xbf16, #tpu.memory_space<any>>, %arg6: memref<1x512xf32, #tpu.memory_space<vmem>>, %arg7: memref<128x8xf32, #tpu.memory_space<vmem>>, %arg8: memref<1x8xf32, #tpu.memory_space<vmem>>, %arg9: memref<16x8xf32, #tpu.memory_space<vmem>>, %arg10: memref<2x128x512xbf16, #tpu.memory_space<vmem>>, %arg11: memref<2x128x512xbf16, #tpu.memory_space<vmem>>, %arg12: memref<128x512xf32, #tpu.memory_space<vmem>>, %arg13: memref<128x128xbf16, #tpu.memory_space<vmem>>, %arg14: memref<2x2x!tpu.dma_semaphore, #tpu.memory_space<semaphore_mem>>) attributes {dimension_semantics = [], scalar_prefetch = 0 : i64, scratch_operands = 5 : i64, tpu.core_type = #tpu.core_type<tc>} {
    %c0_i32 = arith.constant 0 : i32
    %c0_i32_0 = arith.constant 0 : i32
    %c0_i32_1 = arith.constant 0 : i32
    %c0_i32_2 = arith.constant 0 : i32
    %c0_i32_3 = arith.constant 0 : i32
    %0 = tpu.memref_slice %arg10[%c0_i32, %c0_i32_2, %c0_i32_3] : memref<2x128x512xbf16, #tpu.memory_space<vmem>> -> memref<1x16x512xbf16, #tpu.memory_space<vmem>>
    %1 = tpu.memref_squeeze %0 : memref<1x16x512xbf16, #tpu.memory_space<vmem>> -> memref<16x512xbf16, #tpu.memory_space<vmem>>
    %2 = tpu.memref_slice %arg14[%c0_i32_0, %c0_i32_1] : memref<2x2x!tpu.dma_semaphore, #tpu.memory_space<semaphore_mem>> -> memref<1x1x!tpu.dma_semaphore, #tpu.memory_space<semaphore_mem>>
    %3 = tpu.memref_squeeze %2 : memref<1x1x!tpu.dma_semaphore, #tpu.memory_space<semaphore_mem>> -> memref<!tpu.dma_semaphore, #tpu.memory_space<semaphore_mem>>
    tpu.enqueue_dma source(%arg1 : memref<16x512xbf16, #tpu.memory_space<any>>) target(%1 : memref<16x512xbf16, #tpu.memory_space<vmem>>) target_semaphore(%3 : memref<!tpu.dma_semaphore, #tpu.memory_space<semaphore_mem>>)
    %c0_i32_4 = arith.constant 0 : i32
    %c0_i32_5 = arith.constant 0 : i32
    %c1_i32 = arith.constant 1 : i32
    %c0_i32_6 = arith.constant 0 : i32
    %c0_i32_7 = arith.constant 0 : i32
    %4 = tpu.memref_slice %arg11[%c0_i32_4, %c0_i32_6, %c0_i32_7] : memref<2x128x512xbf16, #tpu.memory_space<vmem>> -> memref<1x128x512xbf16, #tpu.memory_space<vmem>>
    %5 = tpu.memref_squeeze %4 : memref<1x128x512xbf16, #tpu.memory_space<vmem>> -> memref<128x512xbf16, #tpu.memory_space<vmem>>
    %6 = tpu.memref_slice %arg14[%c0_i32_5, %c1_i32] : memref<2x2x!tpu.dma_semaphore, #tpu.memory_space<semaphore_mem>> -> memref<1x1x!tpu.dma_semaphore, #tpu.memory_space<semaphore_mem>>
    %7 = tpu.memref_squeeze %6 : memref<1x1x!tpu.dma_semaphore, #tpu.memory_space<semaphore_mem>> -> memref<!tpu.dma_semaphore, #tpu.memory_space<semaphore_mem>>
    tpu.enqueue_dma source(%arg2 : memref<128x512xbf16, #tpu.memory_space<any>>) target(%5 : memref<128x512xbf16, #tpu.memory_space<vmem>>) target_semaphore(%7 : memref<!tpu.dma_semaphore, #tpu.memory_space<semaphore_mem>>)
    %c0_i32_8 = arith.constant 0 : i32
    %c0_i32_9 = arith.constant 0 : i32
    %c0_i32_10 = arith.constant 0 : i32
    %c0_i32_11 = arith.constant 0 : i32
    %c0_i32_12 = arith.constant 0 : i32
    %8 = tpu.memref_slice %arg10[%c0_i32_8, %c0_i32_11, %c0_i32_12] : memref<2x128x512xbf16, #tpu.memory_space<vmem>> -> memref<1x16x512xbf16, #tpu.memory_space<vmem>>
    %9 = tpu.memref_squeeze %8 : memref<1x16x512xbf16, #tpu.memory_space<vmem>> -> memref<16x512xbf16, #tpu.memory_space<vmem>>
    %10 = tpu.memref_slice %arg14[%c0_i32_9, %c0_i32_10] : memref<2x2x!tpu.dma_semaphore, #tpu.memory_space<semaphore_mem>> -> memref<1x1x!tpu.dma_semaphore, #tpu.memory_space<semaphore_mem>>
    %11 = tpu.memref_squeeze %10 : memref<1x1x!tpu.dma_semaphore, #tpu.memory_space<semaphore_mem>> -> memref<!tpu.dma_semaphore, #tpu.memory_space<semaphore_mem>>
    tpu.wait_dma2 semaphore(%11 : memref<!tpu.dma_semaphore, #tpu.memory_space<semaphore_mem>>) src(%arg1 : memref<16x512xbf16, #tpu.memory_space<any>>) dst(%9 : memref<16x512xbf16, #tpu.memory_space<vmem>>)
    %c0_i32_13 = arith.constant 0 : i32
    %c0_i32_14 = arith.constant 0 : i32
    %c1_i32_15 = arith.constant 1 : i32
    %c0_i32_16 = arith.constant 0 : i32
    %c0_i32_17 = arith.constant 0 : i32
    %12 = tpu.memref_slice %arg11[%c0_i32_13, %c0_i32_16, %c0_i32_17] : memref<2x128x512xbf16, #tpu.memory_space<vmem>> -> memref<1x128x512xbf16, #tpu.memory_space<vmem>>
    %13 = tpu.memref_squeeze %12 : memref<1x128x512xbf16, #tpu.memory_space<vmem>> -> memref<128x512xbf16, #tpu.memory_space<vmem>>
    %14 = tpu.memref_slice %arg14[%c0_i32_14, %c1_i32_15] : memref<2x2x!tpu.dma_semaphore, #tpu.memory_space<semaphore_mem>> -> memref<1x1x!tpu.dma_semaphore, #tpu.memory_space<semaphore_mem>>
    %15 = tpu.memref_squeeze %14 : memref<1x1x!tpu.dma_semaphore, #tpu.memory_space<semaphore_mem>> -> memref<!tpu.dma_semaphore, #tpu.memory_space<semaphore_mem>>
    tpu.wait_dma2 semaphore(%15 : memref<!tpu.dma_semaphore, #tpu.memory_space<semaphore_mem>>) src(%arg2 : memref<128x512xbf16, #tpu.memory_space<any>>) dst(%13 : memref<128x512xbf16, #tpu.memory_space<vmem>>)
    %c1_i32_18 = arith.constant 1 : i32
    %c1_i32_19 = arith.constant 1 : i32
    %c0_i32_20 = arith.constant 0 : i32
    %c0_i32_21 = arith.constant 0 : i32
    %c0_i32_22 = arith.constant 0 : i32
    %16 = tpu.memref_slice %arg10[%c1_i32_18, %c0_i32_21, %c0_i32_22] : memref<2x128x512xbf16, #tpu.memory_space<vmem>> -> memref<1x128x512xbf16, #tpu.memory_space<vmem>>
    %17 = tpu.memref_squeeze %16 : memref<1x128x512xbf16, #tpu.memory_space<vmem>> -> memref<128x512xbf16, #tpu.memory_space<vmem>>
    %18 = tpu.memref_slice %arg14[%c1_i32_19, %c0_i32_20] : memref<2x2x!tpu.dma_semaphore, #tpu.memory_space<semaphore_mem>> -> memref<1x1x!tpu.dma_semaphore, #tpu.memory_space<semaphore_mem>>
    %19 = tpu.memref_squeeze %18 : memref<1x1x!tpu.dma_semaphore, #tpu.memory_space<semaphore_mem>> -> memref<!tpu.dma_semaphore, #tpu.memory_space<semaphore_mem>>
    tpu.enqueue_dma source(%arg4 : memref<128x512xbf16, #tpu.memory_space<any>>) target(%17 : memref<128x512xbf16, #tpu.memory_space<vmem>>) target_semaphore(%19 : memref<!tpu.dma_semaphore, #tpu.memory_space<semaphore_mem>>)
    %c1_i32_23 = arith.constant 1 : i32
    %c1_i32_24 = arith.constant 1 : i32
    %c1_i32_25 = arith.constant 1 : i32
    %c0_i32_26 = arith.constant 0 : i32
    %c0_i32_27 = arith.constant 0 : i32
    %20 = tpu.memref_slice %arg11[%c1_i32_23, %c0_i32_26, %c0_i32_27] : memref<2x128x512xbf16, #tpu.memory_space<vmem>> -> memref<1x128x512xbf16, #tpu.memory_space<vmem>>
    %21 = tpu.memref_squeeze %20 : memref<1x128x512xbf16, #tpu.memory_space<vmem>> -> memref<128x512xbf16, #tpu.memory_space<vmem>>
    %22 = tpu.memref_slice %arg14[%c1_i32_24, %c1_i32_25] : memref<2x2x!tpu.dma_semaphore, #tpu.memory_space<semaphore_mem>> -> memref<1x1x!tpu.dma_semaphore, #tpu.memory_space<semaphore_mem>>
    %23 = tpu.memref_squeeze %22 : memref<1x1x!tpu.dma_semaphore, #tpu.memory_space<semaphore_mem>> -> memref<!tpu.dma_semaphore, #tpu.memory_space<semaphore_mem>>
    tpu.enqueue_dma source(%arg5 : memref<128x512xbf16, #tpu.memory_space<any>>) target(%21 : memref<128x512xbf16, #tpu.memory_space<vmem>>) target_semaphore(%23 : memref<!tpu.dma_semaphore, #tpu.memory_space<semaphore_mem>>)
    %cst = arith.constant 0.000000e+00 : f32
    %24 = vector.broadcast %cst : f32 to vector<16x128xf32>
    %cst_28 = arith.constant 0.000000e+00 : f32
    %25 = vector.broadcast %cst_28 : f32 to vector<16x128xf32>
    %c0_i32_29 = arith.constant 0 : i32
    %c128_i32 = arith.constant 128 : i32
    %26 = arith.muli %c0_i32_29, %c128_i32 : i32
    %27 = tpu.assume_multiple %26, 128 : i32
    %28 = arith.index_cast %27 : i32 to index
    %c0 = arith.constant 0 : index
    %29 = vector.load %arg0[%28, %c0] : memref<128x16xbf16, #tpu.memory_space<vmem>>, vector<128x16xbf16>
    %c0_30 = arith.constant 0 : index
    %c0_31 = arith.constant 0 : index
    %c0_32 = arith.constant 0 : index
    %30 = vector.load %arg10[%c0_30, %c0_31, %c0_32] : memref<2x128x512xbf16, #tpu.memory_space<vmem>>, vector<1x16x512xbf16>
    %31 = vector.shape_cast %30 : vector<1x16x512xbf16> to vector<16x512xbf16>
    %cst_33 = arith.constant dense<0.000000e+00> : vector<128x512xf32>
    %32 = tpu.matmul %29, %31, %cst_33 {dimension_numbers = #tpu.dot_dimension_numbers<[1], [0], [0], [1], [0, 0, 1, 1], [], []>} : vector<128x16xbf16>, vector<16x512xbf16>, vector<128x512xf32> -> vector<128x512xf32>
    %c0_34 = arith.constant 0 : index
    %c0_35 = arith.constant 0 : index
    %33 = vector.load %arg3[%c0_34, %c0_35] : memref<1x512xf32, #tpu.memory_space<vmem>>, vector<1x512xf32>
    %34 = vector.broadcast %33 : vector<1x512xf32> to vector<128x512xf32>
    %35 = arith.addf %32, %34 : vector<128x512xf32>
    %c0_36 = arith.constant 0 : index
    %c0_37 = arith.constant 0 : index
    %36 = vector.load %arg12[%c0_36, %c0_37] : memref<128x512xf32, #tpu.memory_space<vmem>>, vector<128x512xf32>
    tpu.vector_store %arg12[%c0_36, %c0_37], %35 {strides = array<i32>} : memref<128x512xf32, #tpu.memory_space<vmem>>, vector<128x512xf32>,
    %c0_i32_38 = arith.constant 0 : i32
    %c16_i32 = arith.constant 16 : i32
    %37 = arith.muli %c0_i32_38, %c16_i32 : i32
    %38 = tpu.assume_multiple %37, 16 : i32
    %39 = arith.index_cast %38 : i32 to index
    %c0_39 = arith.constant 0 : index
    %40 = vector.load %arg12[%39, %c0_39] : memref<128x512xf32, #tpu.memory_space<vmem>>, vector<16x512xf32>
    %41 = arith.truncf %24 : vector<16x128xf32> to vector<16x128xbf16>
    %c0_40 = arith.constant 0 : index
    %c0_41 = arith.constant 0 : index
    %c0_42 = arith.constant 0 : index
    %42 = vector.load %arg11[%c0_40, %c0_41, %c0_42] : memref<2x128x512xbf16, #tpu.memory_space<vmem>>, vector<1x128x512xbf16>
    %43 = vector.shape_cast %42 : vector<1x128x512xbf16> to vector<128x512xbf16>
    %cst_43 = arith.constant dense<0.000000e+00> : vector<16x512xf32>
    %44 = tpu.matmul %41, %43, %cst_43 {dimension_numbers = #tpu.dot_dimension_numbers<[1], [0], [0], [1], [0, 0, 1, 1], [], []>} : vector<16x128xbf16>, vector<128x512xbf16>, vector<16x512xf32> -> vector<16x512xf32>
    %45 = arith.addf %40, %44 : vector<16x512xf32>
    %46 = vector.extract_strided_slice %45 {offsets = [0, 0], sizes = [16, 128], strides = [1, 1]} : vector<16x512xf32> to vector<16x128xf32>
    %47 = arith.negf %46 : vector<16x128xf32>
    %48 = math.exp %47 : vector<16x128xf32>
    %cst_44 = arith.constant 1.000000e+00 : f32
    %49 = vector.broadcast %cst_44 : f32 to vector<16x128xf32>
    %50 = arith.addf %49, %48 : vector<16x128xf32>
    %51 = arith.divf %49, %50 : vector<16x128xf32>
    %52 = vector.extract_strided_slice %45 {offsets = [0, 128], sizes = [16, 128], strides = [1, 1]} : vector<16x512xf32> to vector<16x128xf32>
    %53 = arith.negf %52 : vector<16x128xf32>
    %54 = math.exp %53 : vector<16x128xf32>
    %cst_45 = arith.constant 1.000000e+00 : f32
    %55 = vector.broadcast %cst_45 : f32 to vector<16x128xf32>
    %56 = arith.addf %55, %54 : vector<16x128xf32>
    %57 = arith.divf %55, %56 : vector<16x128xf32>
    %58 = vector.extract_strided_slice %45 {offsets = [0, 256], sizes = [16, 128], strides = [1, 1]} : vector<16x512xf32> to vector<16x128xf32>
    %59 = math.tanh %58 : vector<16x128xf32>
    %60 = vector.extract_strided_slice %45 {offsets = [0, 384], sizes = [16, 128], strides = [1, 1]} : vector<16x512xf32> to vector<16x128xf32>
    %61 = arith.negf %60 : vector<16x128xf32>
    %62 = math.exp %61 : vector<16x128xf32>
    %cst_46 = arith.constant 1.000000e+00 : f32
    %63 = vector.broadcast %cst_46 : f32 to vector<16x128xf32>
    %64 = arith.addf %63, %62 : vector<16x128xf32>
    %65 = arith.divf %63, %64 : vector<16x128xf32>
    %66 = arith.mulf %57, %25 : vector<16x128xf32>
    %67 = arith.mulf %51, %59 : vector<16x128xf32>
    %68 = arith.addf %66, %67 : vector<16x128xf32>
    %69 = math.tanh %68 : vector<16x128xf32>
    %70 = arith.mulf %65, %69 : vector<16x128xf32>
    %71 = arith.truncf %70 : vector<16x128xf32> to vector<16x128xbf16>
    %72 = arith.addi %27, %38 : i32
    %73 = arith.index_cast %72 : i32 to index
    %c0_47 = arith.constant 0 : index
    %74 = vector.load %arg13[%73, %c0_47] : memref<128x128xbf16, #tpu.memory_space<vmem>>, vector<16x128xbf16>
    tpu.vector_store %arg13[%73, %c0_47], %71 {strides = array<i32>} : memref<128x128xbf16, #tpu.memory_space<vmem>>, vector<16x128xbf16>,
    %c1_i32_48 = arith.constant 1 : i32
    %c16_i32_49 = arith.constant 16 : i32
    %75 = arith.muli %c1_i32_48, %c16_i32_49 : i32
    %76 = tpu.assume_multiple %75, 16 : i32
    %77 = arith.index_cast %76 : i32 to index
    %c0_50 = arith.constant 0 : index
    %78 = vector.load %arg12[%77, %c0_50] : memref<128x512xf32, #tpu.memory_space<vmem>>, vector<16x512xf32>
    %79 = arith.truncf %70 : vector<16x128xf32> to vector<16x128xbf16>
    %c0_51 = arith.constant 0 : index
    %c0_52 = arith.constant 0 : index
    %c0_53 = arith.constant 0 : index
    %80 = vector.load %arg11[%c0_51, %c0_52, %c0_53] : memref<2x128x512xbf16, #tpu.memory_space<vmem>>, vector<1x128x512xbf16>
    %81 = vector.shape_cast %80 : vector<1x128x512xbf16> to vector<128x512xbf16>
    %cst_54 = arith.constant dense<0.000000e+00> : vector<16x512xf32>
    %82 = tpu.matmul %79, %81, %cst_54 {dimension_numbers = #tpu.dot_dimension_numbers<[1], [0], [0], [1], [0, 0, 1, 1], [], []>} : vector<16x128xbf16>, vector<128x512xbf16>, vector<16x512xf32> -> vector<16x512xf32>
    %83 = arith.addf %78, %82 : vector<16x512xf32>
    %84 = vector.extract_strided_slice %83 {offsets = [0, 0], sizes = [16, 128], strides = [1, 1]} : vector<16x512xf32> to vector<16x128xf32>
    %85 = arith.negf %84 : vector<16x128xf32>
    %86 = math.exp %85 : vector<16x128xf32>
    %cst_55 = arith.constant 1.000000e+00 : f32
    %87 = vector.broadcast %cst_55 : f32 to vector<16x128xf32>
    %88 = arith.addf %87, %86 : vector<16x128xf32>
    %89 = arith.divf %87, %88 : vector<16x128xf32>
    %90 = vector.extract_strided_slice %83 {offsets = [0, 128], sizes = [16, 128], strides = [1, 1]} : vector<16x512xf32> to vector<16x128xf32>
    %91 = arith.negf %90 : vector<16x128xf32>
    %92 = math.exp %91 : vector<16x128xf32>
    %cst_56 = arith.constant 1.000000e+00 : f32
    %93 = vector.broadcast %cst_56 : f32 to vector<16x128xf32>
    %94 = arith.addf %93, %92 : vector<16x128xf32>
    %95 = arith.divf %93, %94 : vector<16x128xf32>
    %96 = vector.extract_strided_slice %83 {offsets = [0, 256], sizes = [16, 128], strides = [1, 1]} : vector<16x512xf32> to vector<16x128xf32>
    %97 = math.tanh %96 : vector<16x128xf32>
    %98 = vector.extract_strided_slice %83 {offsets = [0, 384], sizes = [16, 128], strides = [1, 1]} : vector<16x512xf32> to vector<16x128xf32>
    %99 = arith.negf %98 : vector<16x128xf32>
    %100 = math.exp %99 : vector<16x128xf32>
    %cst_57 = arith.constant 1.000000e+00 : f32
    %101 = vector.broadcast %cst_57 : f32 to vector<16x128xf32>
    %102 = arith.addf %101, %100 : vector<16x128xf32>
    %103 = arith.divf %101, %102 : vector<16x128xf32>
    %104 = arith.mulf %95, %68 : vector<16x128xf32>
    %105 = arith.mulf %89, %97 : vector<16x128xf32>
    %106 = arith.addf %104, %105 : vector<16x128xf32>
    %107 = math.tanh %106 : vector<16x128xf32>
    %108 = arith.mulf %103, %107 : vector<16x128xf32>
    %109 = arith.truncf %108 : vector<16x128xf32> to vector<16x128xbf16>
    %110 = arith.addi %27, %76 : i32
    %111 = arith.index_cast %110 : i32 to index
    %c0_58 = arith.constant 0 : index
    %112 = vector.load %arg13[%111, %c0_58] : memref<128x128xbf16, #tpu.memory_space<vmem>>, vector<16x128xbf16>
    tpu.vector_store %arg13[%111, %c0_58], %109 {strides = array<i32>} : memref<128x128xbf16, #tpu.memory_space<vmem>>, vector<16x128xbf16>,
    %c2_i32 = arith.constant 2 : i32
    %c16_i32_59 = arith.constant 16 : i32
    %113 = arith.muli %c2_i32, %c16_i32_59 : i32
    %114 = tpu.assume_multiple %113, 16 : i32
    %115 = arith.index_cast %114 : i32 to index
    %c0_60 = arith.constant 0 : index
    %116 = vector.load %arg12[%115, %c0_60] : memref<128x512xf32, #tpu.memory_space<vmem>>, vector<16x512xf32>
    %117 = arith.truncf %108 : vector<16x128xf32> to vector<16x128xbf16>
    %c0_61 = arith.constant 0 : index
    %c0_62 = arith.constant 0 : index
    %c0_63 = arith.constant 0 : index
    %118 = vector.load %arg11[%c0_61, %c0_62, %c0_63] : memref<2x128x512xbf16, #tpu.memory_space<vmem>>, vector<1x128x512xbf16>
    %119 = vector.shape_cast %118 : vector<1x128x512xbf16> to vector<128x512xbf16>
    %cst_64 = arith.constant dense<0.000000e+00> : vector<16x512xf32>
    %120 = tpu.matmul %117, %119, %cst_64 {dimension_numbers = #tpu.dot_dimension_numbers<[1], [0], [0], [1], [0, 0, 1, 1], [], []>} : vector<16x128xbf16>, vector<128x512xbf16>, vector<16x512xf32> -> vector<16x512xf32>
    %121 = arith.addf %116, %120 : vector<16x512xf32>
    %122 = vector.extract_strided_slice %121 {offsets = [0, 0], sizes = [16, 128], strides = [1, 1]} : vector<16x512xf32> to vector<16x128xf32>
    %123 = arith.negf %122 : vector<16x128xf32>
    %124 = math.exp %123 : vector<16x128xf32>
    %cst_65 = arith.constant 1.000000e+00 : f32
    %125 = vector.broadcast %cst_65 : f32 to vector<16x128xf32>
    %126 = arith.addf %125, %124 : vector<16x128xf32>
    %127 = arith.divf %125, %126 : vector<16x128xf32>
    %128 = vector.extract_strided_slice %121 {offsets = [0, 128], sizes = [16, 128], strides = [1, 1]} : vector<16x512xf32> to vector<16x128xf32>
    %129 = arith.negf %128 : vector<16x128xf32>
    %130 = math.exp %129 : vector<16x128xf32>
    %cst_66 = arith.constant 1.000000e+00 : f32
    %131 = vector.broadcast %cst_66 : f32 to vector<16x128xf32>
    %132 = arith.addf %131, %130 : vector<16x128xf32>
    %133 = arith.divf %131, %132 : vector<16x128xf32>
    %134 = vector.extract_strided_slice %121 {offsets = [0, 256], sizes = [16, 128], strides = [1, 1]} : vector<16x512xf32> to vector<16x128xf32>
    %135 = math.tanh %134 : vector<16x128xf32>
    %136 = vector.extract_strided_slice %121 {offsets = [0, 384], sizes = [16, 128], strides = [1, 1]} : vector<16x512xf32> to vector<16x128xf32>
    %137 = arith.negf %136 : vector<16x128xf32>
    %138 = math.exp %137 : vector<16x128xf32>
    %cst_67 = arith.constant 1.000000e+00 : f32
    %139 = vector.broadcast %cst_67 : f32 to vector<16x128xf32>
    %140 = arith.addf %139, %138 : vector<16x128xf32>
    %141 = arith.divf %139, %140 : vector<16x128xf32>
    %142 = arith.mulf %133, %106 : vector<16x128xf32>
    %143 = arith.mulf %127, %135 : vector<16x128xf32>
    %144 = arith.addf %142, %143 : vector<16x128xf32>
    %145 = math.tanh %144 : vector<16x128xf32>
    %146 = arith.mulf %141, %145 : vector<16x128xf32>
    %147 = arith.truncf %146 : vector<16x128xf32> to vector<16x128xbf16>
    %148 = arith.addi %27, %114 : i32
    %149 = arith.index_cast %148 : i32 to index
    %c0_68 = arith.constant 0 : index
    %150 = vector.load %arg13[%149, %c0_68] : memref<128x128xbf16, #tpu.memory_space<vmem>>, vector<16x128xbf16>
    tpu.vector_store %arg13[%149, %c0_68], %147 {strides = array<i32>} : memref<128x128xbf16, #tpu.memory_space<vmem>>, vector<16x128xbf16>,
    %c3_i32 = arith.constant 3 : i32
    %c16_i32_69 = arith.constant 16 : i32
    %151 = arith.muli %c3_i32, %c16_i32_69 : i32
    %152 = tpu.assume_multiple %151, 16 : i32
    %153 = arith.index_cast %152 : i32 to index
    %c0_70 = arith.constant 0 : index
    %154 = vector.load %arg12[%153, %c0_70] : memref<128x512xf32, #tpu.memory_space<vmem>>, vector<16x512xf32>
    %155 = arith.truncf %146 : vector<16x128xf32> to vector<16x128xbf16>
    %c0_71 = arith.constant 0 : index
    %c0_72 = arith.constant 0 : index
    %c0_73 = arith.constant 0 : index
    %156 = vector.load %arg11[%c0_71, %c0_72, %c0_73] : memref<2x128x512xbf16, #tpu.memory_space<vmem>>, vector<1x128x512xbf16>
    %157 = vector.shape_cast %156 : vector<1x128x512xbf16> to vector<128x512xbf16>
    %cst_74 = arith.constant dense<0.000000e+00> : vector<16x512xf32>
    %158 = tpu.matmul %155, %157, %cst_74 {dimension_numbers = #tpu.dot_dimension_numbers<[1], [0], [0], [1], [0, 0, 1, 1], [], []>} : vector<16x128xbf16>, vector<128x512xbf16>, vector<16x512xf32> -> vector<16x512xf32>
    %159 = arith.addf %154, %158 : vector<16x512xf32>
    %160 = vector.extract_strided_slice %159 {offsets = [0, 0], sizes = [16, 128], strides = [1, 1]} : vector<16x512xf32> to vector<16x128xf32>
    %161 = arith.negf %160 : vector<16x128xf32>
    %162 = math.exp %161 : vector<16x128xf32>
    %cst_75 = arith.constant 1.000000e+00 : f32
    %163 = vector.broadcast %cst_75 : f32 to vector<16x128xf32>
    %164 = arith.addf %163, %162 : vector<16x128xf32>
    %165 = arith.divf %163, %164 : vector<16x128xf32>
    %166 = vector.extract_strided_slice %159 {offsets = [0, 128], sizes = [16, 128], strides = [1, 1]} : vector<16x512xf32> to vector<16x128xf32>
    %167 = arith.negf %166 : vector<16x128xf32>
    %168 = math.exp %167 : vector<16x128xf32>
    %cst_76 = arith.constant 1.000000e+00 : f32
    %169 = vector.broadcast %cst_76 : f32 to vector<16x128xf32>
    %170 = arith.addf %169, %168 : vector<16x128xf32>
    %171 = arith.divf %169, %170 : vector<16x128xf32>
    %172 = vector.extract_strided_slice %159 {offsets = [0, 256], sizes = [16, 128], strides = [1, 1]} : vector<16x512xf32> to vector<16x128xf32>
    %173 = math.tanh %172 : vector<16x128xf32>
    %174 = vector.extract_strided_slice %159 {offsets = [0, 384], sizes = [16, 128], strides = [1, 1]} : vector<16x512xf32> to vector<16x128xf32>
    %175 = arith.negf %174 : vector<16x128xf32>
    %176 = math.exp %175 : vector<16x128xf32>
    %cst_77 = arith.constant 1.000000e+00 : f32
    %177 = vector.broadcast %cst_77 : f32 to vector<16x128xf32>
    %178 = arith.addf %177, %176 : vector<16x128xf32>
    %179 = arith.divf %177, %178 : vector<16x128xf32>
    %180 = arith.mulf %171, %144 : vector<16x128xf32>
    %181 = arith.mulf %165, %173 : vector<16x128xf32>
    %182 = arith.addf %180, %181 : vector<16x128xf32>
    %183 = math.tanh %182 : vector<16x128xf32>
    %184 = arith.mulf %179, %183 : vector<16x128xf32>
    %185 = arith.truncf %184 : vector<16x128xf32> to vector<16x128xbf16>
    %186 = arith.addi %27, %152 : i32
    %187 = arith.index_cast %186 : i32 to index
    %c0_78 = arith.constant 0 : index
    %188 = vector.load %arg13[%187, %c0_78] : memref<128x128xbf16, #tpu.memory_space<vmem>>, vector<16x128xbf16>
    tpu.vector_store %arg13[%187, %c0_78], %185 {strides = array<i32>} : memref<128x128xbf16, #tpu.memory_space<vmem>>, vector<16x128xbf16>,
    %c4_i32 = arith.constant 4 : i32
    %c16_i32_79 = arith.constant 16 : i32
    %189 = arith.muli %c4_i32, %c16_i32_79 : i32
    %190 = tpu.assume_multiple %189, 16 : i32
    %191 = arith.index_cast %190 : i32 to index
    %c0_80 = arith.constant 0 : index
    %192 = vector.load %arg12[%191, %c0_80] : memref<128x512xf32, #tpu.memory_space<vmem>>, vector<16x512xf32>
    %193 = arith.truncf %184 : vector<16x128xf32> to vector<16x128xbf16>
    %c0_81 = arith.constant 0 : index
    %c0_82 = arith.constant 0 : index
    %c0_83 = arith.constant 0 : index
    %194 = vector.load %arg11[%c0_81, %c0_82, %c0_83] : memref<2x128x512xbf16, #tpu.memory_space<vmem>>, vector<1x128x512xbf16>
    %195 = vector.shape_cast %194 : vector<1x128x512xbf16> to vector<128x512xbf16>
    %cst_84 = arith.constant dense<0.000000e+00> : vector<16x512xf32>
    %196 = tpu.matmul %193, %195, %cst_84 {dimension_numbers = #tpu.dot_dimension_numbers<[1], [0], [0], [1], [0, 0, 1, 1], [], []>} : vector<16x128xbf16>, vector<128x512xbf16>, vector<16x512xf32> -> vector<16x512xf32>
    %197 = arith.addf %192, %196 : vector<16x512xf32>
    %198 = vector.extract_strided_slice %197 {offsets = [0, 0], sizes = [16, 128], strides = [1, 1]} : vector<16x512xf32> to vector<16x128xf32>
    %199 = arith.negf %198 : vector<16x128xf32>
    %200 = math.exp %199 : vector<16x128xf32>
    %cst_85 = arith.constant 1.000000e+00 : f32
    %201 = vector.broadcast %cst_85 : f32 to vector<16x128xf32>
    %202 = arith.addf %201, %200 : vector<16x128xf32>
    %203 = arith.divf %201, %202 : vector<16x128xf32>
    %204 = vector.extract_strided_slice %197 {offsets = [0, 128], sizes = [16, 128], strides = [1, 1]} : vector<16x512xf32> to vector<16x128xf32>
    %205 = arith.negf %204 : vector<16x128xf32>
    %206 = math.exp %205 : vector<16x128xf32>
    %cst_86 = arith.constant 1.000000e+00 : f32
    %207 = vector.broadcast %cst_86 : f32 to vector<16x128xf32>
    %208 = arith.addf %207, %206 : vector<16x128xf32>
    %209 = arith.divf %207, %208 : vector<16x128xf32>
    %210 = vector.extract_strided_slice %197 {offsets = [0, 256], sizes = [16, 128], strides = [1, 1]} : vector<16x512xf32> to vector<16x128xf32>
    %211 = math.tanh %210 : vector<16x128xf32>
    %212 = vector.extract_strided_slice %197 {offsets = [0, 384], sizes = [16, 128], strides = [1, 1]} : vector<16x512xf32> to vector<16x128xf32>
    %213 = arith.negf %212 : vector<16x128xf32>
    %214 = math.exp %213 : vector<16x128xf32>
    %cst_87 = arith.constant 1.000000e+00 : f32
    %215 = vector.broadcast %cst_87 : f32 to vector<16x128xf32>
    %216 = arith.addf %215, %214 : vector<16x128xf32>
    %217 = arith.divf %215, %216 : vector<16x128xf32>
    %218 = arith.mulf %209, %182 : vector<16x128xf32>
    %219 = arith.mulf %203, %211 : vector<16x128xf32>
    %220 = arith.addf %218, %219 : vector<16x128xf32>
    %221 = math.tanh %220 : vector<16x128xf32>
    %222 = arith.mulf %217, %221 : vector<16x128xf32>
    %223 = arith.truncf %222 : vector<16x128xf32> to vector<16x128xbf16>
    %224 = arith.addi %27, %190 : i32
    %225 = arith.index_cast %224 : i32 to index
    %c0_88 = arith.constant 0 : index
    %226 = vector.load %arg13[%225, %c0_88] : memref<128x128xbf16, #tpu.memory_space<vmem>>, vector<16x128xbf16>
    tpu.vector_store %arg13[%225, %c0_88], %223 {strides = array<i32>} : memref<128x128xbf16, #tpu.memory_space<vmem>>, vector<16x128xbf16>,
    %c5_i32 = arith.constant 5 : i32
    %c16_i32_89 = arith.constant 16 : i32
    %227 = arith.muli %c5_i32, %c16_i32_89 : i32
    %228 = tpu.assume_multiple %227, 16 : i32
    %229 = arith.index_cast %228 : i32 to index
    %c0_90 = arith.constant 0 : index
    %230 = vector.load %arg12[%229, %c0_90] : memref<128x512xf32, #tpu.memory_space<vmem>>, vector<16x512xf32>
    %231 = arith.truncf %222 : vector<16x128xf32> to vector<16x128xbf16>
    %c0_91 = arith.constant 0 : index
    %c0_92 = arith.constant 0 : index
    %c0_93 = arith.constant 0 : index
    %232 = vector.load %arg11[%c0_91, %c0_92, %c0_93] : memref<2x128x512xbf16, #tpu.memory_space<vmem>>, vector<1x128x512xbf16>
    %233 = vector.shape_cast %232 : vector<1x128x512xbf16> to vector<128x512xbf16>
    %cst_94 = arith.constant dense<0.000000e+00> : vector<16x512xf32>
    %234 = tpu.matmul %231, %233, %cst_94 {dimension_numbers = #tpu.dot_dimension_numbers<[1], [0], [0], [1], [0, 0, 1, 1], [], []>} : vector<16x128xbf16>, vector<128x512xbf16>, vector<16x512xf32> -> vector<16x512xf32>
    %235 = arith.addf %230, %234 : vector<16x512xf32>
    %236 = vector.extract_strided_slice %235 {offsets = [0, 0], sizes = [16, 128], strides = [1, 1]} : vector<16x512xf32> to vector<16x128xf32>
    %237 = arith.negf %236 : vector<16x128xf32>
    %238 = math.exp %237 : vector<16x128xf32>
    %cst_95 = arith.constant 1.000000e+00 : f32
    %239 = vector.broadcast %cst_95 : f32 to vector<16x128xf32>
    %240 = arith.addf %239, %238 : vector<16x128xf32>
    %241 = arith.divf %239, %240 : vector<16x128xf32>
    %242 = vector.extract_strided_slice %235 {offsets = [0, 128], sizes = [16, 128], strides = [1, 1]} : vector<16x512xf32> to vector<16x128xf32>
    %243 = arith.negf %242 : vector<16x128xf32>
    %244 = math.exp %243 : vector<16x128xf32>
    %cst_96 = arith.constant 1.000000e+00 : f32
    %245 = vector.broadcast %cst_96 : f32 to vector<16x128xf32>
    %246 = arith.addf %245, %244 : vector<16x128xf32>
    %247 = arith.divf %245, %246 : vector<16x128xf32>
    %248 = vector.extract_strided_slice %235 {offsets = [0, 256], sizes = [16, 128], strides = [1, 1]} : vector<16x512xf32> to vector<16x128xf32>
    %249 = math.tanh %248 : vector<16x128xf32>
    %250 = vector.extract_strided_slice %235 {offsets = [0, 384], sizes = [16, 128], strides = [1, 1]} : vector<16x512xf32> to vector<16x128xf32>
    %251 = arith.negf %250 : vector<16x128xf32>
    %252 = math.exp %251 : vector<16x128xf32>
    %cst_97 = arith.constant 1.000000e+00 : f32
    %253 = vector.broadcast %cst_97 : f32 to vector<16x128xf32>
    %254 = arith.addf %253, %252 : vector<16x128xf32>
    %255 = arith.divf %253, %254 : vector<16x128xf32>
    %256 = arith.mulf %247, %220 : vector<16x128xf32>
    %257 = arith.mulf %241, %249 : vector<16x128xf32>
    %258 = arith.addf %256, %257 : vector<16x128xf32>
    %259 = math.tanh %258 : vector<16x128xf32>
    %260 = arith.mulf %255, %259 : vector<16x128xf32>
    %261 = arith.truncf %260 : vector<16x128xf32> to vector<16x128xbf16>
    %262 = arith.addi %27, %228 : i32
    %263 = arith.index_cast %262 : i32 to index
    %c0_98 = arith.constant 0 : index
    %264 = vector.load %arg13[%263, %c0_98] : memref<128x128xbf16, #tpu.memory_space<vmem>>, vector<16x128xbf16>
    tpu.vector_store %arg13[%263, %c0_98], %261 {strides = array<i32>} : memref<128x128xbf16, #tpu.memory_space<vmem>>, vector<16x128xbf16>,
    %c6_i32 = arith.constant 6 : i32
    %c16_i32_99 = arith.constant 16 : i32
    %265 = arith.muli %c6_i32, %c16_i32_99 : i32
    %266 = tpu.assume_multiple %265, 16 : i32
    %267 = arith.index_cast %266 : i32 to index
    %c0_100 = arith.constant 0 : index
    %268 = vector.load %arg12[%267, %c0_100] : memref<128x512xf32, #tpu.memory_space<vmem>>, vector<16x512xf32>
    %269 = arith.truncf %260 : vector<16x128xf32> to vector<16x128xbf16>
    %c0_101 = arith.constant 0 : index
    %c0_102 = arith.constant 0 : index
    %c0_103 = arith.constant 0 : index
    %270 = vector.load %arg11[%c0_101, %c0_102, %c0_103] : memref<2x128x512xbf16, #tpu.memory_space<vmem>>, vector<1x128x512xbf16>
    %271 = vector.shape_cast %270 : vector<1x128x512xbf16> to vector<128x512xbf16>
    %cst_104 = arith.constant dense<0.000000e+00> : vector<16x512xf32>
    %272 = tpu.matmul %269, %271, %cst_104 {dimension_numbers = #tpu.dot_dimension_numbers<[1], [0], [0], [1], [0, 0, 1, 1], [], []>} : vector<16x128xbf16>, vector<128x512xbf16>, vector<16x512xf32> -> vector<16x512xf32>
    %273 = arith.addf %268, %272 : vector<16x512xf32>
    %274 = vector.extract_strided_slice %273 {offsets = [0, 0], sizes = [16, 128], strides = [1, 1]} : vector<16x512xf32> to vector<16x128xf32>
    %275 = arith.negf %274 : vector<16x128xf32>
    %276 = math.exp %275 : vector<16x128xf32>
    %cst_105 = arith.constant 1.000000e+00 : f32
    %277 = vector.broadcast %cst_105 : f32 to vector<16x128xf32>
    %278 = arith.addf %277, %276 : vector<16x128xf32>
    %279 = arith.divf %277, %278 : vector<16x128xf32>
    %280 = vector.extract_strided_slice %273 {offsets = [0, 128], sizes = [16, 128], strides = [1, 1]} : vector<16x512xf32> to vector<16x128xf32>
    %281 = arith.negf %280 : vector<16x128xf32>
    %282 = math.exp %281 : vector<16x128xf32>
    %cst_106 = arith.constant 1.000000e+00 : f32
    %283 = vector.broadcast %cst_106 : f32 to vector<16x128xf32>
    %284 = arith.addf %283, %282 : vector<16x128xf32>
    %285 = arith.divf %283, %284 : vector<16x128xf32>
    %286 = vector.extract_strided_slice %273 {offsets = [0, 256], sizes = [16, 128], strides = [1, 1]} : vector<16x512xf32> to vector<16x128xf32>
    %287 = math.tanh %286 : vector<16x128xf32>
    %288 = vector.extract_strided_slice %273 {offsets = [0, 384], sizes = [16, 128], strides = [1, 1]} : vector<16x512xf32> to vector<16x128xf32>
    %289 = arith.negf %288 : vector<16x128xf32>
    %290 = math.exp %289 : vector<16x128xf32>
    %cst_107 = arith.constant 1.000000e+00 : f32
    %291 = vector.broadcast %cst_107 : f32 to vector<16x128xf32>
    %292 = arith.addf %291, %290 : vector<16x128xf32>
    %293 = arith.divf %291, %292 : vector<16x128xf32>
    %294 = arith.mulf %285, %258 : vector<16x128xf32>
    %295 = arith.mulf %279, %287 : vector<16x128xf32>
    %296 = arith.addf %294, %295 : vector<16x128xf32>
    %297 = math.tanh %296 : vector<16x128xf32>
    %298 = arith.mulf %293, %297 : vector<16x128xf32>
    %299 = arith.truncf %298 : vector<16x128xf32> to vector<16x128xbf16>
    %300 = arith.addi %27, %266 : i32
    %301 = arith.index_cast %300 : i32 to index
    %c0_108 = arith.constant 0 : index
    %302 = vector.load %arg13[%301, %c0_108] : memref<128x128xbf16, #tpu.memory_space<vmem>>, vector<16x128xbf16>
    tpu.vector_store %arg13[%301, %c0_108], %299 {strides = array<i32>} : memref<128x128xbf16, #tpu.memory_space<vmem>>, vector<16x128xbf16>,
    %c7_i32 = arith.constant 7 : i32
    %c16_i32_109 = arith.constant 16 : i32
    %303 = arith.muli %c7_i32, %c16_i32_109 : i32
    %304 = tpu.assume_multiple %303, 16 : i32
    %305 = arith.index_cast %304 : i32 to index
    %c0_110 = arith.constant 0 : index
    %306 = vector.load %arg12[%305, %c0_110] : memref<128x512xf32, #tpu.memory_space<vmem>>, vector<16x512xf32>
    %307 = arith.truncf %298 : vector<16x128xf32> to vector<16x128xbf16>
    %c0_111 = arith.constant 0 : index
    %c0_112 = arith.constant 0 : index
    %c0_113 = arith.constant 0 : index
    %308 = vector.load %arg11[%c0_111, %c0_112, %c0_113] : memref<2x128x512xbf16, #tpu.memory_space<vmem>>, vector<1x128x512xbf16>
    %309 = vector.shape_cast %308 : vector<1x128x512xbf16> to vector<128x512xbf16>
    %cst_114 = arith.constant dense<0.000000e+00> : vector<16x512xf32>
    %310 = tpu.matmul %307, %309, %cst_114 {dimension_numbers = #tpu.dot_dimension_numbers<[1], [0], [0], [1], [0, 0, 1, 1], [], []>} : vector<16x128xbf16>, vector<128x512xbf16>, vector<16x512xf32> -> vector<16x512xf32>
    %311 = arith.addf %306, %310 : vector<16x512xf32>
    %312 = vector.extract_strided_slice %311 {offsets = [0, 0], sizes = [16, 128], strides = [1, 1]} : vector<16x512xf32> to vector<16x128xf32>
    %313 = arith.negf %312 : vector<16x128xf32>
    %314 = math.exp %313 : vector<16x128xf32>
    %cst_115 = arith.constant 1.000000e+00 : f32
    %315 = vector.broadcast %cst_115 : f32 to vector<16x128xf32>
    %316 = arith.addf %315, %314 : vector<16x128xf32>
    %317 = arith.divf %315, %316 : vector<16x128xf32>
    %318 = vector.extract_strided_slice %311 {offsets = [0, 128], sizes = [16, 128], strides = [1, 1]} : vector<16x512xf32> to vector<16x128xf32>
    %319 = arith.negf %318 : vector<16x128xf32>
    %320 = math.exp %319 : vector<16x128xf32>
    %cst_116 = arith.constant 1.000000e+00 : f32
    %321 = vector.broadcast %cst_116 : f32 to vector<16x128xf32>
    %322 = arith.addf %321, %320 : vector<16x128xf32>
    %323 = arith.divf %321, %322 : vector<16x128xf32>
    %324 = vector.extract_strided_slice %311 {offsets = [0, 256], sizes = [16, 128], strides = [1, 1]} : vector<16x512xf32> to vector<16x128xf32>
    %325 = math.tanh %324 : vector<16x128xf32>
    %326 = vector.extract_strided_slice %311 {offsets = [0, 384], sizes = [16, 128], strides = [1, 1]} : vector<16x512xf32> to vector<16x128xf32>
    %327 = arith.negf %326 : vector<16x128xf32>
    %328 = math.exp %327 : vector<16x128xf32>
    %cst_117 = arith.constant 1.000000e+00 : f32
    %329 = vector.broadcast %cst_117 : f32 to vector<16x128xf32>
    %330 = arith.addf %329, %328 : vector<16x128xf32>
    %331 = arith.divf %329, %330 : vector<16x128xf32>
    %332 = arith.mulf %323, %296 : vector<16x128xf32>
    %333 = arith.mulf %317, %325 : vector<16x128xf32>
    %334 = arith.addf %332, %333 : vector<16x128xf32>
    %335 = math.tanh %334 : vector<16x128xf32>
    %336 = arith.mulf %331, %335 : vector<16x128xf32>
    %337 = arith.truncf %336 : vector<16x128xf32> to vector<16x128xbf16>
    %338 = arith.addi %27, %304 : i32
    %339 = arith.index_cast %338 : i32 to index
    %c0_118 = arith.constant 0 : index
    %340 = vector.load %arg13[%339, %c0_118] : memref<128x128xbf16, #tpu.memory_space<vmem>>, vector<16x128xbf16>
    tpu.vector_store %arg13[%339, %c0_118], %337 {strides = array<i32>} : memref<128x128xbf16, #tpu.memory_space<vmem>>, vector<16x128xbf16>,
    %c8_i32 = arith.constant 8 : i32
    %c1_i32_119 = arith.constant 1 : i32
    %c1_i32_120 = arith.constant 1 : i32
    %c1_i32_121 = arith.constant 1 : i32
    %c0_i32_122 = arith.constant 0 : i32
    %c0_i32_123 = arith.constant 0 : i32
    %c0_i32_124 = arith.constant 0 : i32
    %341 = tpu.memref_slice %arg10[%c1_i32_120, %c0_i32_123, %c0_i32_124] : memref<2x128x512xbf16, #tpu.memory_space<vmem>> -> memref<1x128x512xbf16, #tpu.memory_space<vmem>>
    %342 = tpu.memref_squeeze %341 : memref<1x128x512xbf16, #tpu.memory_space<vmem>> -> memref<128x512xbf16, #tpu.memory_space<vmem>>
    %343 = tpu.memref_slice %arg14[%c1_i32_121, %c0_i32_122] : memref<2x2x!tpu.dma_semaphore, #tpu.memory_space<semaphore_mem>> -> memref<1x1x!tpu.dma_semaphore, #tpu.memory_space<semaphore_mem>>
    %344 = tpu.memref_squeeze %343 : memref<1x1x!tpu.dma_semaphore, #tpu.memory_space<semaphore_mem>> -> memref<!tpu.dma_semaphore, #tpu.memory_space<semaphore_mem>>
    tpu.wait_dma2 semaphore(%344 : memref<!tpu.dma_semaphore, #tpu.memory_space<semaphore_mem>>) src(%arg4 : memref<128x512xbf16, #tpu.memory_space<any>>) dst(%342 : memref<128x512xbf16, #tpu.memory_space<vmem>>)
    %c1_i32_125 = arith.constant 1 : i32
    %c1_i32_126 = arith.constant 1 : i32
    %c1_i32_127 = arith.constant 1 : i32
    %c0_i32_128 = arith.constant 0 : i32
    %c0_i32_129 = arith.constant 0 : i32
    %345 = tpu.memref_slice %arg11[%c1_i32_125, %c0_i32_128, %c0_i32_129] : memref<2x128x512xbf16, #tpu.memory_space<vmem>> -> memref<1x128x512xbf16, #tpu.memory_space<vmem>>
    %346 = tpu.memref_squeeze %345 : memref<1x128x512xbf16, #tpu.memory_space<vmem>> -> memref<128x512xbf16, #tpu.memory_space<vmem>>
    %347 = tpu.memref_slice %arg14[%c1_i32_126, %c1_i32_127] : memref<2x2x!tpu.dma_semaphore, #tpu.memory_space<semaphore_mem>> -> memref<1x1x!tpu.dma_semaphore, #tpu.memory_space<semaphore_mem>>
    %348 = tpu.memref_squeeze %347 : memref<1x1x!tpu.dma_semaphore, #tpu.memory_space<semaphore_mem>> -> memref<!tpu.dma_semaphore, #tpu.memory_space<semaphore_mem>>
    tpu.wait_dma2 semaphore(%348 : memref<!tpu.dma_semaphore, #tpu.memory_space<semaphore_mem>>) src(%arg5 : memref<128x512xbf16, #tpu.memory_space<any>>) dst(%346 : memref<128x512xbf16, #tpu.memory_space<vmem>>)
    %cst_130 = arith.constant 0.000000e+00 : f32
    %349 = vector.broadcast %cst_130 : f32 to vector<16x128xf32>
    %cst_131 = arith.constant 0.000000e+00 : f32
    %350 = vector.broadcast %cst_131 : f32 to vector<16x128xf32>
    %c0_i32_132 = arith.constant 0 : i32
    %c128_i32_133 = arith.constant 128 : i32
    %351 = arith.muli %c0_i32_132, %c128_i32_133 : i32
    %352 = tpu.assume_multiple %351, 128 : i32
    %353 = arith.index_cast %352 : i32 to index
    %c0_134 = arith.constant 0 : index
    %354 = vector.load %arg13[%353, %c0_134] : memref<128x128xbf16, #tpu.memory_space<vmem>>, vector<128x128xbf16>
    %c1 = arith.constant 1 : index
    %c0_135 = arith.constant 0 : index
    %c0_136 = arith.constant 0 : index
    %355 = vector.load %arg10[%c1, %c0_135, %c0_136] : memref<2x128x512xbf16, #tpu.memory_space<vmem>>, vector<1x128x512xbf16>
    %356 = vector.shape_cast %355 : vector<1x128x512xbf16> to vector<128x512xbf16>
    %cst_137 = arith.constant dense<0.000000e+00> : vector<128x512xf32>
    %357 = tpu.matmul %354, %356, %cst_137 {dimension_numbers = #tpu.dot_dimension_numbers<[1], [0], [0], [1], [0, 0, 1, 1], [], []>} : vector<128x128xbf16>, vector<128x512xbf16>, vector<128x512xf32> -> vector<128x512xf32>
    %c0_138 = arith.constant 0 : index
    %c0_139 = arith.constant 0 : index
    %358 = vector.load %arg6[%c0_138, %c0_139] : memref<1x512xf32, #tpu.memory_space<vmem>>, vector<1x512xf32>
    %359 = vector.broadcast %358 : vector<1x512xf32> to vector<128x512xf32>
    %360 = arith.addf %357, %359 : vector<128x512xf32>
    %c0_140 = arith.constant 0 : index
    %c0_141 = arith.constant 0 : index
    %361 = vector.load %arg12[%c0_140, %c0_141] : memref<128x512xf32, #tpu.memory_space<vmem>>, vector<128x512xf32>
    tpu.vector_store %arg12[%c0_140, %c0_141], %360 {strides = array<i32>} : memref<128x512xf32, #tpu.memory_space<vmem>>, vector<128x512xf32>,
    %c0_i32_142 = arith.constant 0 : i32
    %c16_i32_143 = arith.constant 16 : i32
    %362 = arith.muli %c0_i32_142, %c16_i32_143 : i32
    %363 = tpu.assume_multiple %362, 16 : i32
    %364 = arith.index_cast %363 : i32 to index
    %c0_144 = arith.constant 0 : index
    %365 = vector.load %arg12[%364, %c0_144] : memref<128x512xf32, #tpu.memory_space<vmem>>, vector<16x512xf32>
    %366 = arith.truncf %349 : vector<16x128xf32> to vector<16x128xbf16>
    %c1_145 = arith.constant 1 : index
    %c0_146 = arith.constant 0 : index
    %c0_147 = arith.constant 0 : index
    %367 = vector.load %arg11[%c1_145, %c0_146, %c0_147] : memref<2x128x512xbf16, #tpu.memory_space<vmem>>, vector<1x128x512xbf16>
    %368 = vector.shape_cast %367 : vector<1x128x512xbf16> to vector<128x512xbf16>
    %cst_148 = arith.constant dense<0.000000e+00> : vector<16x512xf32>
    %369 = tpu.matmul %366, %368, %cst_148 {dimension_numbers = #tpu.dot_dimension_numbers<[1], [0], [0], [1], [0, 0, 1, 1], [], []>} : vector<16x128xbf16>, vector<128x512xbf16>, vector<16x512xf32> -> vector<16x512xf32>
    %370 = arith.addf %365, %369 : vector<16x512xf32>
    %371 = vector.extract_strided_slice %370 {offsets = [0, 0], sizes = [16, 128], strides = [1, 1]} : vector<16x512xf32> to vector<16x128xf32>
    %372 = arith.negf %371 : vector<16x128xf32>
    %373 = math.exp %372 : vector<16x128xf32>
    %cst_149 = arith.constant 1.000000e+00 : f32
    %374 = vector.broadcast %cst_149 : f32 to vector<16x128xf32>
    %375 = arith.addf %374, %373 : vector<16x128xf32>
    %376 = arith.divf %374, %375 : vector<16x128xf32>
    %377 = vector.extract_strided_slice %370 {offsets = [0, 128], sizes = [16, 128], strides = [1, 1]} : vector<16x512xf32> to vector<16x128xf32>
    %378 = arith.negf %377 : vector<16x128xf32>
    %379 = math.exp %378 : vector<16x128xf32>
    %cst_150 = arith.constant 1.000000e+00 : f32
    %380 = vector.broadcast %cst_150 : f32 to vector<16x128xf32>
    %381 = arith.addf %380, %379 : vector<16x128xf32>
    %382 = arith.divf %380, %381 : vector<16x128xf32>
    %383 = vector.extract_strided_slice %370 {offsets = [0, 256], sizes = [16, 128], strides = [1, 1]} : vector<16x512xf32> to vector<16x128xf32>
    %384 = math.tanh %383 : vector<16x128xf32>
    %385 = vector.extract_strided_slice %370 {offsets = [0, 384], sizes = [16, 128], strides = [1, 1]} : vector<16x512xf32> to vector<16x128xf32>
    %386 = arith.negf %385 : vector<16x128xf32>
    %387 = math.exp %386 : vector<16x128xf32>
    %cst_151 = arith.constant 1.000000e+00 : f32
    %388 = vector.broadcast %cst_151 : f32 to vector<16x128xf32>
    %389 = arith.addf %388, %387 : vector<16x128xf32>
    %390 = arith.divf %388, %389 : vector<16x128xf32>
    %391 = arith.mulf %382, %350 : vector<16x128xf32>
    %392 = arith.mulf %376, %384 : vector<16x128xf32>
    %393 = arith.addf %391, %392 : vector<16x128xf32>
    %394 = math.tanh %393 : vector<16x128xf32>
    %395 = arith.mulf %390, %394 : vector<16x128xf32>
    %c1_i32_152 = arith.constant 1 : i32
    %c16_i32_153 = arith.constant 16 : i32
    %396 = arith.muli %c1_i32_152, %c16_i32_153 : i32
    %397 = tpu.assume_multiple %396, 16 : i32
    %398 = arith.index_cast %397 : i32 to index
    %c0_154 = arith.constant 0 : index
    %399 = vector.load %arg12[%398, %c0_154] : memref<128x512xf32, #tpu.memory_space<vmem>>, vector<16x512xf32>
    %400 = arith.truncf %395 : vector<16x128xf32> to vector<16x128xbf16>
    %c1_155 = arith.constant 1 : index
    %c0_156 = arith.constant 0 : index
    %c0_157 = arith.constant 0 : index
    %401 = vector.load %arg11[%c1_155, %c0_156, %c0_157] : memref<2x128x512xbf16, #tpu.memory_space<vmem>>, vector<1x128x512xbf16>
    %402 = vector.shape_cast %401 : vector<1x128x512xbf16> to vector<128x512xbf16>
    %cst_158 = arith.constant dense<0.000000e+00> : vector<16x512xf32>
    %403 = tpu.matmul %400, %402, %cst_158 {dimension_numbers = #tpu.dot_dimension_numbers<[1], [0], [0], [1], [0, 0, 1, 1], [], []>} : vector<16x128xbf16>, vector<128x512xbf16>, vector<16x512xf32> -> vector<16x512xf32>
    %404 = arith.addf %399, %403 : vector<16x512xf32>
    %405 = vector.extract_strided_slice %404 {offsets = [0, 0], sizes = [16, 128], strides = [1, 1]} : vector<16x512xf32> to vector<16x128xf32>
    %406 = arith.negf %405 : vector<16x128xf32>
    %407 = math.exp %406 : vector<16x128xf32>
    %cst_159 = arith.constant 1.000000e+00 : f32
    %408 = vector.broadcast %cst_159 : f32 to vector<16x128xf32>
    %409 = arith.addf %408, %407 : vector<16x128xf32>
    %410 = arith.divf %408, %409 : vector<16x128xf32>
    %411 = vector.extract_strided_slice %404 {offsets = [0, 128], sizes = [16, 128], strides = [1, 1]} : vector<16x512xf32> to vector<16x128xf32>
    %412 = arith.negf %411 : vector<16x128xf32>
    %413 = math.exp %412 : vector<16x128xf32>
    %cst_160 = arith.constant 1.000000e+00 : f32
    %414 = vector.broadcast %cst_160 : f32 to vector<16x128xf32>
    %415 = arith.addf %414, %413 : vector<16x128xf32>
    %416 = arith.divf %414, %415 : vector<16x128xf32>
    %417 = vector.extract_strided_slice %404 {offsets = [0, 256], sizes = [16, 128], strides = [1, 1]} : vector<16x512xf32> to vector<16x128xf32>
    %418 = math.tanh %417 : vector<16x128xf32>
    %419 = vector.extract_strided_slice %404 {offsets = [0, 384], sizes = [16, 128], strides = [1, 1]} : vector<16x512xf32> to vector<16x128xf32>
    %420 = arith.negf %419 : vector<16x128xf32>
    %421 = math.exp %420 : vector<16x128xf32>
    %cst_161 = arith.constant 1.000000e+00 : f32
    %422 = vector.broadcast %cst_161 : f32 to vector<16x128xf32>
    %423 = arith.addf %422, %421 : vector<16x128xf32>
    %424 = arith.divf %422, %423 : vector<16x128xf32>
    %425 = arith.mulf %416, %393 : vector<16x128xf32>
    %426 = arith.mulf %410, %418 : vector<16x128xf32>
    %427 = arith.addf %425, %426 : vector<16x128xf32>
    %428 = math.tanh %427 : vector<16x128xf32>
    %429 = arith.mulf %424, %428 : vector<16x128xf32>
    %c2_i32_162 = arith.constant 2 : i32
    %c16_i32_163 = arith.constant 16 : i32
    %430 = arith.muli %c2_i32_162, %c16_i32_163 : i32
    %431 = tpu.assume_multiple %430, 16 : i32
    %432 = arith.index_cast %431 : i32 to index
    %c0_164 = arith.constant 0 : index
    %433 = vector.load %arg12[%432, %c0_164] : memref<128x512xf32, #tpu.memory_space<vmem>>, vector<16x512xf32>
    %434 = arith.truncf %429 : vector<16x128xf32> to vector<16x128xbf16>
    %c1_165 = arith.constant 1 : index
    %c0_166 = arith.constant 0 : index
    %c0_167 = arith.constant 0 : index
    %435 = vector.load %arg11[%c1_165, %c0_166, %c0_167] : memref<2x128x512xbf16, #tpu.memory_space<vmem>>, vector<1x128x512xbf16>
    %436 = vector.shape_cast %435 : vector<1x128x512xbf16> to vector<128x512xbf16>
    %cst_168 = arith.constant dense<0.000000e+00> : vector<16x512xf32>
    %437 = tpu.matmul %434, %436, %cst_168 {dimension_numbers = #tpu.dot_dimension_numbers<[1], [0], [0], [1], [0, 0, 1, 1], [], []>} : vector<16x128xbf16>, vector<128x512xbf16>, vector<16x512xf32> -> vector<16x512xf32>
    %438 = arith.addf %433, %437 : vector<16x512xf32>
    %439 = vector.extract_strided_slice %438 {offsets = [0, 0], sizes = [16, 128], strides = [1, 1]} : vector<16x512xf32> to vector<16x128xf32>
    %440 = arith.negf %439 : vector<16x128xf32>
    %441 = math.exp %440 : vector<16x128xf32>
    %cst_169 = arith.constant 1.000000e+00 : f32
    %442 = vector.broadcast %cst_169 : f32 to vector<16x128xf32>
    %443 = arith.addf %442, %441 : vector<16x128xf32>
    %444 = arith.divf %442, %443 : vector<16x128xf32>
    %445 = vector.extract_strided_slice %438 {offsets = [0, 128], sizes = [16, 128], strides = [1, 1]} : vector<16x512xf32> to vector<16x128xf32>
    %446 = arith.negf %445 : vector<16x128xf32>
    %447 = math.exp %446 : vector<16x128xf32>
    %cst_170 = arith.constant 1.000000e+00 : f32
    %448 = vector.broadcast %cst_170 : f32 to vector<16x128xf32>
    %449 = arith.addf %448, %447 : vector<16x128xf32>
    %450 = arith.divf %448, %449 : vector<16x128xf32>
    %451 = vector.extract_strided_slice %438 {offsets = [0, 256], sizes = [16, 128], strides = [1, 1]} : vector<16x512xf32> to vector<16x128xf32>
    %452 = math.tanh %451 : vector<16x128xf32>
    %453 = vector.extract_strided_slice %438 {offsets = [0, 384], sizes = [16, 128], strides = [1, 1]} : vector<16x512xf32> to vector<16x128xf32>
    %454 = arith.negf %453 : vector<16x128xf32>
    %455 = math.exp %454 : vector<16x128xf32>
    %cst_171 = arith.constant 1.000000e+00 : f32
    %456 = vector.broadcast %cst_171 : f32 to vector<16x128xf32>
    %457 = arith.addf %456, %455 : vector<16x128xf32>
    %458 = arith.divf %456, %457 : vector<16x128xf32>
    %459 = arith.mulf %450, %427 : vector<16x128xf32>
    %460 = arith.mulf %444, %452 : vector<16x128xf32>
    %461 = arith.addf %459, %460 : vector<16x128xf32>
    %462 = math.tanh %461 : vector<16x128xf32>
    %463 = arith.mulf %458, %462 : vector<16x128xf32>
    %c3_i32_172 = arith.constant 3 : i32
    %c16_i32_173 = arith.constant 16 : i32
    %464 = arith.muli %c3_i32_172, %c16_i32_173 : i32
    %465 = tpu.assume_multiple %464, 16 : i32
    %466 = arith.index_cast %465 : i32 to index
    %c0_174 = arith.constant 0 : index
    %467 = vector.load %arg12[%466, %c0_174] : memref<128x512xf32, #tpu.memory_space<vmem>>, vector<16x512xf32>
    %468 = arith.truncf %463 : vector<16x128xf32> to vector<16x128xbf16>
    %c1_175 = arith.constant 1 : index
    %c0_176 = arith.constant 0 : index
    %c0_177 = arith.constant 0 : index
    %469 = vector.load %arg11[%c1_175, %c0_176, %c0_177] : memref<2x128x512xbf16, #tpu.memory_space<vmem>>, vector<1x128x512xbf16>
    %470 = vector.shape_cast %469 : vector<1x128x512xbf16> to vector<128x512xbf16>
    %cst_178 = arith.constant dense<0.000000e+00> : vector<16x512xf32>
    %471 = tpu.matmul %468, %470, %cst_178 {dimension_numbers = #tpu.dot_dimension_numbers<[1], [0], [0], [1], [0, 0, 1, 1], [], []>} : vector<16x128xbf16>, vector<128x512xbf16>, vector<16x512xf32> -> vector<16x512xf32>
    %472 = arith.addf %467, %471 : vector<16x512xf32>
    %473 = vector.extract_strided_slice %472 {offsets = [0, 0], sizes = [16, 128], strides = [1, 1]} : vector<16x512xf32> to vector<16x128xf32>
    %474 = arith.negf %473 : vector<16x128xf32>
    %475 = math.exp %474 : vector<16x128xf32>
    %cst_179 = arith.constant 1.000000e+00 : f32
    %476 = vector.broadcast %cst_179 : f32 to vector<16x128xf32>
    %477 = arith.addf %476, %475 : vector<16x128xf32>
    %478 = arith.divf %476, %477 : vector<16x128xf32>
    %479 = vector.extract_strided_slice %472 {offsets = [0, 128], sizes = [16, 128], strides = [1, 1]} : vector<16x512xf32> to vector<16x128xf32>
    %480 = arith.negf %479 : vector<16x128xf32>
    %481 = math.exp %480 : vector<16x128xf32>
    %cst_180 = arith.constant 1.000000e+00 : f32
    %482 = vector.broadcast %cst_180 : f32 to vector<16x128xf32>
    %483 = arith.addf %482, %481 : vector<16x128xf32>
    %484 = arith.divf %482, %483 : vector<16x128xf32>
    %485 = vector.extract_strided_slice %472 {offsets = [0, 256], sizes = [16, 128], strides = [1, 1]} : vector<16x512xf32> to vector<16x128xf32>
    %486 = math.tanh %485 : vector<16x128xf32>
    %487 = vector.extract_strided_slice %472 {offsets = [0, 384], sizes = [16, 128], strides = [1, 1]} : vector<16x512xf32> to vector<16x128xf32>
    %488 = arith.negf %487 : vector<16x128xf32>
    %489 = math.exp %488 : vector<16x128xf32>
    %cst_181 = arith.constant 1.000000e+00 : f32
    %490 = vector.broadcast %cst_181 : f32 to vector<16x128xf32>
    %491 = arith.addf %490, %489 : vector<16x128xf32>
    %492 = arith.divf %490, %491 : vector<16x128xf32>
    %493 = arith.mulf %484, %461 : vector<16x128xf32>
    %494 = arith.mulf %478, %486 : vector<16x128xf32>
    %495 = arith.addf %493, %494 : vector<16x128xf32>
    %496 = math.tanh %495 : vector<16x128xf32>
    %497 = arith.mulf %492, %496 : vector<16x128xf32>
    %c4_i32_182 = arith.constant 4 : i32
    %c16_i32_183 = arith.constant 16 : i32
    %498 = arith.muli %c4_i32_182, %c16_i32_183 : i32
    %499 = tpu.assume_multiple %498, 16 : i32
    %500 = arith.index_cast %499 : i32 to index
    %c0_184 = arith.constant 0 : index
    %501 = vector.load %arg12[%500, %c0_184] : memref<128x512xf32, #tpu.memory_space<vmem>>, vector<16x512xf32>
    %502 = arith.truncf %497 : vector<16x128xf32> to vector<16x128xbf16>
    %c1_185 = arith.constant 1 : index
    %c0_186 = arith.constant 0 : index
    %c0_187 = arith.constant 0 : index
    %503 = vector.load %arg11[%c1_185, %c0_186, %c0_187] : memref<2x128x512xbf16, #tpu.memory_space<vmem>>, vector<1x128x512xbf16>
    %504 = vector.shape_cast %503 : vector<1x128x512xbf16> to vector<128x512xbf16>
    %cst_188 = arith.constant dense<0.000000e+00> : vector<16x512xf32>
    %505 = tpu.matmul %502, %504, %cst_188 {dimension_numbers = #tpu.dot_dimension_numbers<[1], [0], [0], [1], [0, 0, 1, 1], [], []>} : vector<16x128xbf16>, vector<128x512xbf16>, vector<16x512xf32> -> vector<16x512xf32>
    %506 = arith.addf %501, %505 : vector<16x512xf32>
    %507 = vector.extract_strided_slice %506 {offsets = [0, 0], sizes = [16, 128], strides = [1, 1]} : vector<16x512xf32> to vector<16x128xf32>
    %508 = arith.negf %507 : vector<16x128xf32>
    %509 = math.exp %508 : vector<16x128xf32>
    %cst_189 = arith.constant 1.000000e+00 : f32
    %510 = vector.broadcast %cst_189 : f32 to vector<16x128xf32>
    %511 = arith.addf %510, %509 : vector<16x128xf32>
    %512 = arith.divf %510, %511 : vector<16x128xf32>
    %513 = vector.extract_strided_slice %506 {offsets = [0, 128], sizes = [16, 128], strides = [1, 1]} : vector<16x512xf32> to vector<16x128xf32>
    %514 = arith.negf %513 : vector<16x128xf32>
    %515 = math.exp %514 : vector<16x128xf32>
    %cst_190 = arith.constant 1.000000e+00 : f32
    %516 = vector.broadcast %cst_190 : f32 to vector<16x128xf32>
    %517 = arith.addf %516, %515 : vector<16x128xf32>
    %518 = arith.divf %516, %517 : vector<16x128xf32>
    %519 = vector.extract_strided_slice %506 {offsets = [0, 256], sizes = [16, 128], strides = [1, 1]} : vector<16x512xf32> to vector<16x128xf32>
    %520 = math.tanh %519 : vector<16x128xf32>
    %521 = vector.extract_strided_slice %506 {offsets = [0, 384], sizes = [16, 128], strides = [1, 1]} : vector<16x512xf32> to vector<16x128xf32>
    %522 = arith.negf %521 : vector<16x128xf32>
    %523 = math.exp %522 : vector<16x128xf32>
    %cst_191 = arith.constant 1.000000e+00 : f32
    %524 = vector.broadcast %cst_191 : f32 to vector<16x128xf32>
    %525 = arith.addf %524, %523 : vector<16x128xf32>
    %526 = arith.divf %524, %525 : vector<16x128xf32>
    %527 = arith.mulf %518, %495 : vector<16x128xf32>
    %528 = arith.mulf %512, %520 : vector<16x128xf32>
    %529 = arith.addf %527, %528 : vector<16x128xf32>
    %530 = math.tanh %529 : vector<16x128xf32>
    %531 = arith.mulf %526, %530 : vector<16x128xf32>
    %c5_i32_192 = arith.constant 5 : i32
    %c16_i32_193 = arith.constant 16 : i32
    %532 = arith.muli %c5_i32_192, %c16_i32_193 : i32
    %533 = tpu.assume_multiple %532, 16 : i32
    %534 = arith.index_cast %533 : i32 to index
    %c0_194 = arith.constant 0 : index
    %535 = vector.load %arg12[%534, %c0_194] : memref<128x512xf32, #tpu.memory_space<vmem>>, vector<16x512xf32>
    %536 = arith.truncf %531 : vector<16x128xf32> to vector<16x128xbf16>
    %c1_195 = arith.constant 1 : index
    %c0_196 = arith.constant 0 : index
    %c0_197 = arith.constant 0 : index
    %537 = vector.load %arg11[%c1_195, %c0_196, %c0_197] : memref<2x128x512xbf16, #tpu.memory_space<vmem>>, vector<1x128x512xbf16>
    %538 = vector.shape_cast %537 : vector<1x128x512xbf16> to vector<128x512xbf16>
    %cst_198 = arith.constant dense<0.000000e+00> : vector<16x512xf32>
    %539 = tpu.matmul %536, %538, %cst_198 {dimension_numbers = #tpu.dot_dimension_numbers<[1], [0], [0], [1], [0, 0, 1, 1], [], []>} : vector<16x128xbf16>, vector<128x512xbf16>, vector<16x512xf32> -> vector<16x512xf32>
    %540 = arith.addf %535, %539 : vector<16x512xf32>
    %541 = vector.extract_strided_slice %540 {offsets = [0, 0], sizes = [16, 128], strides = [1, 1]} : vector<16x512xf32> to vector<16x128xf32>
    %542 = arith.negf %541 : vector<16x128xf32>
    %543 = math.exp %542 : vector<16x128xf32>
    %cst_199 = arith.constant 1.000000e+00 : f32
    %544 = vector.broadcast %cst_199 : f32 to vector<16x128xf32>
    %545 = arith.addf %544, %543 : vector<16x128xf32>
    %546 = arith.divf %544, %545 : vector<16x128xf32>
    %547 = vector.extract_strided_slice %540 {offsets = [0, 128], sizes = [16, 128], strides = [1, 1]} : vector<16x512xf32> to vector<16x128xf32>
    %548 = arith.negf %547 : vector<16x128xf32>
    %549 = math.exp %548 : vector<16x128xf32>
    %cst_200 = arith.constant 1.000000e+00 : f32
    %550 = vector.broadcast %cst_200 : f32 to vector<16x128xf32>
    %551 = arith.addf %550, %549 : vector<16x128xf32>
    %552 = arith.divf %550, %551 : vector<16x128xf32>
    %553 = vector.extract_strided_slice %540 {offsets = [0, 256], sizes = [16, 128], strides = [1, 1]} : vector<16x512xf32> to vector<16x128xf32>
    %554 = math.tanh %553 : vector<16x128xf32>
    %555 = vector.extract_strided_slice %540 {offsets = [0, 384], sizes = [16, 128], strides = [1, 1]} : vector<16x512xf32> to vector<16x128xf32>
    %556 = arith.negf %555 : vector<16x128xf32>
    %557 = math.exp %556 : vector<16x128xf32>
    %cst_201 = arith.constant 1.000000e+00 : f32
    %558 = vector.broadcast %cst_201 : f32 to vector<16x128xf32>
    %559 = arith.addf %558, %557 : vector<16x128xf32>
    %560 = arith.divf %558, %559 : vector<16x128xf32>
    %561 = arith.mulf %552, %529 : vector<16x128xf32>
    %562 = arith.mulf %546, %554 : vector<16x128xf32>
    %563 = arith.addf %561, %562 : vector<16x128xf32>
    %564 = math.tanh %563 : vector<16x128xf32>
    %565 = arith.mulf %560, %564 : vector<16x128xf32>
    %c6_i32_202 = arith.constant 6 : i32
    %c16_i32_203 = arith.constant 16 : i32
    %566 = arith.muli %c6_i32_202, %c16_i32_203 : i32
    %567 = tpu.assume_multiple %566, 16 : i32
    %568 = arith.index_cast %567 : i32 to index
    %c0_204 = arith.constant 0 : index
    %569 = vector.load %arg12[%568, %c0_204] : memref<128x512xf32, #tpu.memory_space<vmem>>, vector<16x512xf32>
    %570 = arith.truncf %565 : vector<16x128xf32> to vector<16x128xbf16>
    %c1_205 = arith.constant 1 : index
    %c0_206 = arith.constant 0 : index
    %c0_207 = arith.constant 0 : index
    %571 = vector.load %arg11[%c1_205, %c0_206, %c0_207] : memref<2x128x512xbf16, #tpu.memory_space<vmem>>, vector<1x128x512xbf16>
    %572 = vector.shape_cast %571 : vector<1x128x512xbf16> to vector<128x512xbf16>
    %cst_208 = arith.constant dense<0.000000e+00> : vector<16x512xf32>
    %573 = tpu.matmul %570, %572, %cst_208 {dimension_numbers = #tpu.dot_dimension_numbers<[1], [0], [0], [1], [0, 0, 1, 1], [], []>} : vector<16x128xbf16>, vector<128x512xbf16>, vector<16x512xf32> -> vector<16x512xf32>
    %574 = arith.addf %569, %573 : vector<16x512xf32>
    %575 = vector.extract_strided_slice %574 {offsets = [0, 0], sizes = [16, 128], strides = [1, 1]} : vector<16x512xf32> to vector<16x128xf32>
    %576 = arith.negf %575 : vector<16x128xf32>
    %577 = math.exp %576 : vector<16x128xf32>
    %cst_209 = arith.constant 1.000000e+00 : f32
    %578 = vector.broadcast %cst_209 : f32 to vector<16x128xf32>
    %579 = arith.addf %578, %577 : vector<16x128xf32>
    %580 = arith.divf %578, %579 : vector<16x128xf32>
    %581 = vector.extract_strided_slice %574 {offsets = [0, 128], sizes = [16, 128], strides = [1, 1]} : vector<16x512xf32> to vector<16x128xf32>
    %582 = arith.negf %581 : vector<16x128xf32>
    %583 = math.exp %582 : vector<16x128xf32>
    %cst_210 = arith.constant 1.000000e+00 : f32
    %584 = vector.broadcast %cst_210 : f32 to vector<16x128xf32>
    %585 = arith.addf %584, %583 : vector<16x128xf32>
    %586 = arith.divf %584, %585 : vector<16x128xf32>
    %587 = vector.extract_strided_slice %574 {offsets = [0, 256], sizes = [16, 128], strides = [1, 1]} : vector<16x512xf32> to vector<16x128xf32>
    %588 = math.tanh %587 : vector<16x128xf32>
    %589 = vector.extract_strided_slice %574 {offsets = [0, 384], sizes = [16, 128], strides = [1, 1]} : vector<16x512xf32> to vector<16x128xf32>
    %590 = arith.negf %589 : vector<16x128xf32>
    %591 = math.exp %590 : vector<16x128xf32>
    %cst_211 = arith.constant 1.000000e+00 : f32
    %592 = vector.broadcast %cst_211 : f32 to vector<16x128xf32>
    %593 = arith.addf %592, %591 : vector<16x128xf32>
    %594 = arith.divf %592, %593 : vector<16x128xf32>
    %595 = arith.mulf %586, %563 : vector<16x128xf32>
    %596 = arith.mulf %580, %588 : vector<16x128xf32>
    %597 = arith.addf %595, %596 : vector<16x128xf32>
    %598 = math.tanh %597 : vector<16x128xf32>
    %599 = arith.mulf %594, %598 : vector<16x128xf32>
    %c7_i32_212 = arith.constant 7 : i32
    %c16_i32_213 = arith.constant 16 : i32
    %600 = arith.muli %c7_i32_212, %c16_i32_213 : i32
    %601 = tpu.assume_multiple %600, 16 : i32
    %602 = arith.index_cast %601 : i32 to index
    %c0_214 = arith.constant 0 : index
    %603 = vector.load %arg12[%602, %c0_214] : memref<128x512xf32, #tpu.memory_space<vmem>>, vector<16x512xf32>
    %604 = arith.truncf %599 : vector<16x128xf32> to vector<16x128xbf16>
    %c1_215 = arith.constant 1 : index
    %c0_216 = arith.constant 0 : index
    %c0_217 = arith.constant 0 : index
    %605 = vector.load %arg11[%c1_215, %c0_216, %c0_217] : memref<2x128x512xbf16, #tpu.memory_space<vmem>>, vector<1x128x512xbf16>
    %606 = vector.shape_cast %605 : vector<1x128x512xbf16> to vector<128x512xbf16>
    %cst_218 = arith.constant dense<0.000000e+00> : vector<16x512xf32>
    %607 = tpu.matmul %604, %606, %cst_218 {dimension_numbers = #tpu.dot_dimension_numbers<[1], [0], [0], [1], [0, 0, 1, 1], [], []>} : vector<16x128xbf16>, vector<128x512xbf16>, vector<16x512xf32> -> vector<16x512xf32>
    %608 = arith.addf %603, %607 : vector<16x512xf32>
    %609 = vector.extract_strided_slice %608 {offsets = [0, 0], sizes = [16, 128], strides = [1, 1]} : vector<16x512xf32> to vector<16x128xf32>
    %610 = arith.negf %609 : vector<16x128xf32>
    %611 = math.exp %610 : vector<16x128xf32>
    %cst_219 = arith.constant 1.000000e+00 : f32
    %612 = vector.broadcast %cst_219 : f32 to vector<16x128xf32>
    %613 = arith.addf %612, %611 : vector<16x128xf32>
    %614 = arith.divf %612, %613 : vector<16x128xf32>
    %615 = vector.extract_strided_slice %608 {offsets = [0, 128], sizes = [16, 128], strides = [1, 1]} : vector<16x512xf32> to vector<16x128xf32>
    %616 = arith.negf %615 : vector<16x128xf32>
    %617 = math.exp %616 : vector<16x128xf32>
    %cst_220 = arith.constant 1.000000e+00 : f32
    %618 = vector.broadcast %cst_220 : f32 to vector<16x128xf32>
    %619 = arith.addf %618, %617 : vector<16x128xf32>
    %620 = arith.divf %618, %619 : vector<16x128xf32>
    %621 = vector.extract_strided_slice %608 {offsets = [0, 256], sizes = [16, 128], strides = [1, 1]} : vector<16x512xf32> to vector<16x128xf32>
    %622 = math.tanh %621 : vector<16x128xf32>
    %623 = vector.extract_strided_slice %608 {offsets = [0, 384], sizes = [16, 128], strides = [1, 1]} : vector<16x512xf32> to vector<16x128xf32>
    %624 = arith.negf %623 : vector<16x128xf32>
    %625 = math.exp %624 : vector<16x128xf32>
    %cst_221 = arith.constant 1.000000e+00 : f32
    %626 = vector.broadcast %cst_221 : f32 to vector<16x128xf32>
    %627 = arith.addf %626, %625 : vector<16x128xf32>
    %628 = arith.divf %626, %627 : vector<16x128xf32>
    %629 = arith.mulf %620, %597 : vector<16x128xf32>
    %630 = arith.mulf %614, %622 : vector<16x128xf32>
    %631 = arith.addf %629, %630 : vector<16x128xf32>
    %632 = math.tanh %631 : vector<16x128xf32>
    %633 = arith.mulf %628, %632 : vector<16x128xf32>
    %c8_i32_222 = arith.constant 8 : i32
    %c1_i32_223 = arith.constant 1 : i32
    %c0_224 = arith.constant 0 : index
    %c0_225 = arith.constant 0 : index
    %634 = vector.load %arg7[%c0_224, %c0_225] : memref<128x8xf32, #tpu.memory_space<vmem>>, vector<128x8xf32>
    %cst_226 = arith.constant dense<0.000000e+00> : vector<16x8xf32>
    %635 = tpu.matmul %633, %634, %cst_226 {dimension_numbers = #tpu.dot_dimension_numbers<[1], [0], [0], [1], [0, 0, 1, 1], [], []>} : vector<16x128xf32>, vector<128x8xf32>, vector<16x8xf32> -> vector<16x8xf32>
    %c0_227 = arith.constant 0 : index
    %c0_228 = arith.constant 0 : index
    %636 = vector.load %arg8[%c0_227, %c0_228] : memref<1x8xf32, #tpu.memory_space<vmem>>, vector<1x8xf32>
    %637 = vector.broadcast %636 : vector<1x8xf32> to vector<16x8xf32>
    %638 = arith.addf %635, %637 : vector<16x8xf32>
    %639 = tpu.iota {dimensions = array<i32: 1>} : vector<16x8xi32>
    %c4_i32_229 = arith.constant 4 : i32
    %640 = vector.broadcast %c4_i32_229 : i32 to vector<16x8xi32>
    %641 = arith.cmpi sge, %639, %640 : vector<16x8xi32>
    %642 = math.exp %638 : vector<16x8xf32>
    %643 = arith.select %641, %642, %638 : vector<16x8xi1>, vector<16x8xf32>
    %c0_230 = arith.constant 0 : index
    %c0_231 = arith.constant 0 : index
    %644 = vector.load %arg9[%c0_230, %c0_231] : memref<16x8xf32, #tpu.memory_space<vmem>>, vector<16x8xf32>
    tpu.vector_store %arg9[%c0_230, %c0_231], %643 {strides = array<i32>} : memref<16x8xf32, #tpu.memory_space<vmem>>, vector<16x8xf32>,
    return
  }
}

</mosaic_0001>

<llo_original>
// kernel: lstm_bnn_forward.1
$region0: #{lstm_bnn_forward.1}
  #allocation0 [shape = 'u32[]', space=smem, size = 0x4, offset = 0x4, fixed_abs, tag = 'smem constant byte address 0x4 - core index']
  #allocation1 [shape = 'u32[144,128]{1,0:T(1,128)}', space=vmem, size = 0x12000, scoped, tag = 'internal scratch']
  #allocation2 [shape = 'bf16[2,128,512]{2,1,0:T(16,128)(2,1)}', space=vmem, size = 0x40000, scoped, tag = 'scratch operand']
  #allocation3 [shape = 'bf16[2,128,512]{2,1,0:T(16,128)(2,1)}', space=vmem, size = 0x40000, scoped, tag = 'scratch operand']
  #allocation4 [shape = 'f32[128,512]{1,0:T(8,128)}', space=vmem, size = 0x40000, scoped, tag = 'scratch operand']
  #allocation5 [shape = 'bf16[128,128]{1,0:T(16,128)(2,1)}', space=vmem, size = 0x8000, scoped, tag = 'scratch operand']
  #allocation6 [shape = 's32[4]{0}', space=sflag, size = 0x10, scoped, tag = 'scratch operand']
  #allocation7 [shape = 's32[]', space=sflag, size = 0x4, offset = 0, fixed_abs, tag = 'sflag constant byte address 0x0 - dummy sync flag']
  #allocation9 [shape = 's32[]', space=sflag, size = 0x4, offset = 0, fixed_abs, tag = 'sflag constant byte address 0x0 - dummy sync flag']
  #allocation10 [shape = 's32[]', space=sflag, size = 0x4, offset = 0, fixed_abs, tag = 'sflag constant byte address 0x0 - dummy sync flag']
  #allocation12 [shape = 's32[]', space=sflag, size = 0x4, offset = 0, fixed_abs, tag = 'sflag constant byte address 0x0 - dummy sync flag']
  %s0 = inlined_call_operand.vmem [shape: bf16[128,16], index: 0, kind: input, shape index: {}]
  %s1 = inlined_call_operand.hbm [shape: bf16[16,512], index: 1, kind: input, shape index: {}]
  %s2 = inlined_call_operand.vmem [shape: bf16[128,512], index: 2, kind: input, shape index: {}]
  %s3 = inlined_call_operand.vmem [shape: f32[1,512], index: 3, kind: input, shape index: {}]
  %s4 = inlined_call_operand.hbm [shape: bf16[128,512], index: 4, kind: input, shape index: {}]
  %s5 = inlined_call_operand.hbm [shape: bf16[128,512], index: 5, kind: input, shape index: {}]
  %s6 = inlined_call_operand.vmem [shape: f32[1,512], index: 6, kind: input, shape index: {}]
  %s7 = inlined_call_operand.vmem [shape: f32[128,8], index: 7, kind: input, shape index: {}]
  %s8 = inlined_call_operand.vmem [shape: f32[1,8], index: 8, kind: input, shape index: {}]
  %s9 = inlined_call_operand.vmem [shape: f32[16,8], index: 9, kind: output, shape index: {}]
  %s10 = sld [smem:[#allocation0]]
  $region67: #{lstm_bnn_forward.1} parent=0
    _
  %s12 = ssub.s32 1, %s10
  %s13 = scalar_select 0, %s12, %s10
  $region1: #{lstm_bnn_forward.1} parent=0
    #allocation8 [shape = 'u32[6]{0}', space=smem, size = 0x18, scoped, tag = 'DMA stride descriptor']
    #allocation11 [shape = 'u32[9]{0}', space=smem, size = 0x24, scoped, tag = 'DMA stride descriptor']
    #allocation13 [shape = 'u32[9]{0}', space=smem, size = 0x24, scoped, tag = 'DMA stride descriptor']
    // Predicated region
    $region2: #{lstm_bnn_forward.1} parent=1 // pred_check
      _
    $region3: #{lstm_bnn_forward.1} parent=1 // pred_check_branch
      %15 = sbr.rel (0) target = $region5
    $region4: #{lstm_bnn_forward.1} parent=1 // pred_region
      _
    $region5: #{lstm_bnn_forward.1} parent=1 // pred_fallthru
      _
    // Predicated region
    $region6: #{lstm_bnn_forward.1} parent=1 // pred_check
      _
    $region7: #{lstm_bnn_forward.1} parent=1 // pred_check_branch
      %17 = sbr.rel (0) target = $region9
    $region8: #{lstm_bnn_forward.1} parent=1 // pred_region
      _
    $region9: #{lstm_bnn_forward.1} parent=1 // pred_fallthru
      _
    // Predicated region
    $region10: #{lstm_bnn_forward.1} parent=1 // pred_check
      _
    $region11: #{lstm_bnn_forward.1} parent=1 // pred_check_branch
      %19 = sbr.rel (0) target = $region13
    $region12: #{lstm_bnn_forward.1} parent=1 // pred_region
      _
    $region13: #{lstm_bnn_forward.1} parent=1 // pred_fallthru
      _
    // Predicated region
    $region14: #{lstm_bnn_forward.1} parent=1 // pred_check
      _
    $region15: #{lstm_bnn_forward.1} parent=1 // pred_check_branch
      %21 = sbr.rel (0) target = $region17
    $region16: #{lstm_bnn_forward.1} parent=1 // pred_region
      _
    $region17: #{lstm_bnn_forward.1} parent=1 // pred_fallthru
      _
    // Predicated region
    $region18: #{lstm_bnn_forward.1} parent=1 // pred_check
      _
    $region19: #{lstm_bnn_forward.1} parent=1 // pred_check_branch
      %23 = sbr.rel (0) target = $region21
    $region20: #{lstm_bnn_forward.1} parent=1 // pred_region
      _
    $region21: #{lstm_bnn_forward.1} parent=1 // pred_fallthru
      _
    %s26 = sshll.u32 1, 14
    %s27 = sxor.u32 4294967295, %s26
    %s29 = sld [smem:[#allocation0]]
    %s30 = sadd.s32 2, %s29
    %s32 = sshll.u32 7, 26
    %s33 = sxor.u32 4294967295, %s32
    %s34 = sand.u32 0, %s33
    %s35 = sshll.u32 %s30, 26
    %s36 = sor.u32 %s34, %s35
    %s37 = sshll.u32 [#allocation2], 4
    %s38 = int_to_ptr.vmem [resolvable:$true] %s37
    %41 = sst [smem:[#allocation8]] 64
    %s42 = scalar_lea.smem [#allocation8], 1
    %43 = sst [smem:[%s42]] 128
    %s44 = scalar_lea.smem [#allocation8], 2
    %45 = sst [smem:[%s44]] 2
    %s46 = scalar_lea.smem [#allocation8], 3
    %47 = sst [smem:[%s46]] 256
    %s48 = scalar_lea.smem [#allocation8], 4
    %49 = sst [smem:[%s48]] 64
    %s50 = scalar_lea.smem [#allocation8], 5
    %51 = sst [smem:[%s50]] 4
    %53 = dma.general %s1, 512, %s38, [#allocation6], [#allocation7], [#allocation8], %s36, 0
    %s54 = scalar_lea.sflag [#allocation6], 1
    %p56 = scmp.lt.u32.totalorder 4, 8
    %p57 = pneg %p56
    // Predicated region
    $region22: #{lstm_bnn_forward.1} parent=1 // pred_check
      _
    $region23: #{lstm_bnn_forward.1} parent=1 // pred_check_branch
      %59 = sbr.rel (%p56) target = $region25
    $region24: #{lstm_bnn_forward.1} parent=1 // pred_region
      %s200 = sand.u32 4, 7
      %p201 = scmp.eq.s32.totalorder %s200, 0
      %p202 = pneg %p201
      // Predicated region
      $region37: #{lstm_bnn_forward.1} parent=24 // pred_check
        _
      $region38: #{lstm_bnn_forward.1} parent=24 // pred_check_branch
        %204 = sbr.rel (%p201) target = $region40
      $region39: #{lstm_bnn_forward.1} parent=24 // pred_region
        %s205 = sand.u32 4, 7
        %s206 = ssub.s32 4, %s205
        %s207 = scalar_lea.vmem %s2, %s206
        %s208 = ssub.s32 4, %s205
        %s209 = scalar_lea.vmem [#allocation3], %s208
        loop: start=0, step=1, limit=1
        $region41: #{lstm_bnn_forward.1} parent=39 // loop_pre_header
          _
        $region42: #{lstm_bnn_forward.1} parent=39 // loop_header
          %s211 = sphi 0, %s215
          %p212 = scmp.ge.s32.totalorder %s211, 1
          %s216 = sphi %s2, %s2
          %s217 = sphi [#allocation3], [#allocation3]
        $region43: #{lstm_bnn_forward.1} parent=39 // loop_header_branch
          %214 = sbr.rel (%p212) target = $region47
        $region44: #{lstm_bnn_forward.1} parent=39 // loop_body
          _
        $region45: #{lstm_bnn_forward.1} parent=39 // loop_footer
          %s215 = sadd.s32 1, %s211
        $region46: #{lstm_bnn_forward.1} parent=39 // loop_footer_branch
          %210 = sbr.rel target = $region42
        $region47: #{lstm_bnn_forward.1} parent=39 // loop_exit
          _
        %s218 = sshllo.u32 0, %s205
        loop: start=0, step=1, limit=1
        $region48: #{lstm_bnn_forward.1} parent=39 // loop_pre_header
          _
        $region49: #{lstm_bnn_forward.1} parent=39 // loop_header
          %s220 = sphi 0, %s224
          %p221 = scmp.ge.s32.totalorder %s220, 1
          %s225 = sphi %s207, %s207
          %s226 = sphi %s209, %s209
        $region50: #{lstm_bnn_forward.1} parent=39 // loop_header_branch
          %223 = sbr.rel (%p221) target = $region54
        $region51: #{lstm_bnn_forward.1} parent=39 // loop_body
          %v227 = vld [vmem:[%s225] sm:%s218]
          %228 = vst [vmem:[%s226] sm:%s218] %v227
          %v229 = vld [vmem:[%s225 + $0x10] sm:%s218]
          %230 = vst [vmem:[%s226 + $0x4] sm:%s218] %v229
          %v231 = vld [vmem:[%s225 + $0x4] sm:%s218]
          %232 = vst [vmem:[%s226 + $0x8] sm:%s218] %v231
          %v233 = vld [vmem:[%s225 + $0x14] sm:%s218]
          %234 = vst [vmem:[%s226 + $0xc] sm:%s218] %v233
          %v235 = vld [vmem:[%s225 + $0x8] sm:%s218]
          %236 = vst [vmem:[%s226 + $0x10] sm:%s218] %v235
          %v237 = vld [vmem:[%s225 + $0x18] sm:%s218]
          %238 = vst [vmem:[%s226 + $0x14] sm:%s218] %v237
          %v239 = vld [vmem:[%s225 + $0xc] sm:%s218]
          %240 = vst [vmem:[%s226 + $0x18] sm:%s218] %v239
          %v241 = vld [vmem:[%s225 + $0x1c] sm:%s218]
          %242 = vst [vmem:[%s226 + $0x1c] sm:%s218] %v241
          %v243 = vld [vmem:[%s225 + $0x20] sm:%s218]
          %244 = vst [vmem:[%s226 + $0x20] sm:%s218] %v243
          %v245 = vld [vmem:[%s225 + $0x30] sm:%s218]
          %246 = vst [vmem:[%s226 + $0x24] sm:%s218] %v245
          %v247 = vld [vmem:[%s225 + $0x24] sm:%s218]
          %248 = vst [vmem:[%s226 + $0x28] sm:%s218] %v247
          %v249 = vld [vmem:[%s225 + $0x34] sm:%s218]
          %250 = vst [vmem:[%s226 + $0x2c] sm:%s218] %v249
          %v251 = vld [vmem:[%s225 + $0x28] sm:%s218]
          %252 = vst [vmem:[%s226 + $0x30] sm:%s218] %v251
          %v253 = vld [vmem:[%s225 + $0x38] sm:%s218]
          %254 = vst [vmem:[%s226 + $0x34] sm:%s218] %v253
          %v255 = vld [vmem:[%s225 + $0x2c] sm:%s218]
          %256 = vst [vmem:[%s226 + $0x38] sm:%s218] %v255
          %v257 = vld [vmem:[%s225 + $0x3c] sm:%s218]
          %258 = vst [vmem:[%s226 + $0x3c] sm:%s218] %v257
          %v259 = vld [vmem:[%s225 + $0x40] sm:%s218]
          %260 = vst [vmem:[%s226 + $0x40] sm:%s218] %v259
          %v261 = vld [vmem:[%s225 + $0x50] sm:%s218]
          %262 = vst [vmem:[%s226 + $0x44] sm:%s218] %v261
          %v263 = vld [vmem:[%s225 + $0x44] sm:%s218]
          %264 = vst [vmem:[%s226 + $0x48] sm:%s218] %v263
          %v265 = vld [vmem:[%s225 + $0x54] sm:%s218]
          %266 = vst [vmem:[%s226 + $0x4c] sm:%s218] %v265
          %v267 = vld [vmem:[%s225 + $0x48] sm:%s218]
          %268 = vst [vmem:[%s226 + $0x50] sm:%s218] %v267
          %v269 = vld [vmem:[%s225 + $0x58] sm:%s218]
          %270 = vst [vmem:[%s226 + $0x54] sm:%s218] %v269
          %v271 = vld [vmem:[%s225 + $0x4c] sm:%s218]
          %272 = vst [vmem:[%s226 + $0x58] sm:%s218] %v271
          %v273 = vld [vmem:[%s225 + $0x5c] sm:%s218]
          %274 = vst [vmem:[%s226 + $0x5c] sm:%s218] %v273
          %v275 = vld [vmem:[%s225 + $0x60] sm:%s218]
          %276 = vst [vmem:[%s226 + $0x60] sm:%s218] %v275
          %v277 = vld [vmem:[%s225 + $0x70] sm:%s218]
          %278 = vst [vmem:[%s226 + $0x64] sm:%s218] %v277
          %v279 = vld [vmem:[%s225 + $0x64] sm:%s218]
          %280 = vst [vmem:[%s226 + $0x68] sm:%s218] %v279
          %v281 = vld [vmem:[%s225 + $0x74] sm:%s218]
          %282 = vst [vmem:[%s226 + $0x6c] sm:%s218] %v281
          %v283 = vld [vmem:[%s225 + $0x68] sm:%s218]
          %284 = vst [vmem:[%s226 + $0x70] sm:%s218] %v283
          %v285 = vld [vmem:[%s225 + $0x78] sm:%s218]
          %286 = vst [vmem:[%s226 + $0x74] sm:%s218] %v285
          %v287 = vld [vmem:[%s225 + $0x6c] sm:%s218]
          %288 = vst [vmem:[%s226 + $0x78] sm:%s218] %v287
          %v289 = vld [vmem:[%s225 + $0x7c] sm:%s218]
          %290 = vst [vmem:[%s226 + $0x7c] sm:%s218] %v289
          %v291 = vld [vmem:[%s225 + $0x80] sm:%s218]
          %292 = vst [vmem:[%s226 + $0x80] sm:%s218] %v291
          %v293 = vld [vmem:[%s225 + $0x90] sm:%s218]
          %294 = vst [vmem:[%s226 + $0x84] sm:%s218] %v293
          %v295 = vld [vmem:[%s225 + $0x84] sm:%s218]
          %296 = vst [vmem:[%s226 + $0x88] sm:%s218] %v295
          %v297 = vld [vmem:[%s225 + $0x94] sm:%s218]
          %298 = vst [vmem:[%s226 + $0x8c] sm:%s218] %v297
          %v299 = vld [vmem:[%s225 + $0x88] sm:%s218]
          %300 = vst [vmem:[%s226 + $0x90] sm:%s218] %v299
          %v301 = vld [vmem:[%s225 + $0x98] sm:%s218]
          %302 = vst [vmem:[%s226 + $0x94] sm:%s218] %v301
          %v303 = vld [vmem:[%s225 + $0x8c] sm:%s218]
          %304 = vst [vmem:[%s226 + $0x98] sm:%s218] %v303
          %v305 = vld [vmem:[%s225 + $0x9c] sm:%s218]
          %306 = vst [vmem:[%s226 + $0x9c] sm:%s218] %v305
          %v307 = vld [vmem:[%s225 + $0xa0] sm:%s218]
          %308 = vst [vmem:[%s226 + $0xa0] sm:%s218] %v307
          %v309 = vld [vmem:[%s225 + $0xb0] sm:%s218]
          %310 = vst [vmem:[%s226 + $0xa4] sm:%s218] %v309
          %v311 = vld [vmem:[%s225 + $0xa4] sm:%s218]
          %312 = vst [vmem:[%s226 + $0xa8] sm:%s218] %v311
          %v313 = vld [vmem:[%s225 + $0xb4] sm:%s218]
          %314 = vst [vmem:[%s226 + $0xac] sm:%s218] %v313
          %v315 = vld [vmem:[%s225 + $0xa8] sm:%s218]
          %316 = vst [vmem:[%s226 + $0xb0] sm:%s218] %v315
          %v317 = vld [vmem:[%s225 + $0xb8] sm:%s218]
          %318 = vst [vmem:[%s226 + $0xb4] sm:%s218] %v317
          %v319 = vld [vmem:[%s225 + $0xac] sm:%s218]
          %320 = vst [vmem:[%s226 + $0xb8] sm:%s218] %v319
          %v321 = vld [vmem:[%s225 + $0xbc] sm:%s218]
          %322 = vst [vmem:[%s226 + $0xbc] sm:%s218] %v321
          %v323 = vld [vmem:[%s225 + $0xc0] sm:%s218]
          %324 = vst [vmem:[%s226 + $0xc0] sm:%s218] %v323
          %v325 = vld [vmem:[%s225 + $0xd0] sm:%s218]
          %326 = vst [vmem:[%s226 + $0xc4] sm:%s218] %v325
          %v327 = vld [vmem:[%s225 + $0xc4] sm:%s218]
          %328 = vst [vmem:[%s226 + $0xc8] sm:%s218] %v327
          %v329 = vld [vmem:[%s225 + $0xd4] sm:%s218]
          %330 = vst [vmem:[%s226 + $0xcc] sm:%s218] %v329
          %v331 = vld [vmem:[%s225 + $0xc8] sm:%s218]
          %332 = vst [vmem:[%s226 + $0xd0] sm:%s218] %v331
          %v333 = vld [vmem:[%s225 + $0xd8] sm:%s218]
          %334 = vst [vmem:[%s226 + $0xd4] sm:%s218] %v333
          %v335 = vld [vmem:[%s225 + $0xcc] sm:%s218]
          %336 = vst [vmem:[%s226 + $0xd8] sm:%s218] %v335
          %v337 = vld [vmem:[%s225 + $0xdc] sm:%s218]
          %338 = vst [vmem:[%s226 + $0xdc] sm:%s218] %v337
          %v339 = vld [vmem:[%s225 + $0xe0] sm:%s218]
          %340 = vst [vmem:[%s226 + $0xe0] sm:%s218] %v339
          %v341 = vld [vmem:[%s225 + $0xf0] sm:%s218]
          %342 = vst [vmem:[%s226 + $0xe4] sm:%s218] %v341
          %v343 = vld [vmem:[%s225 + $0xe4] sm:%s218]
          %344 = vst [vmem:[%s226 + $0xe8] sm:%s218] %v343
          %v345 = vld [vmem:[%s225 + $0xf4] sm:%s218]
          %346 = vst [vmem:[%s226 + $0xec] sm:%s218] %v345
          %v347 = vld [vmem:[%s225 + $0xe8] sm:%s218]
          %348 = vst [vmem:[%s226 + $0xf0] sm:%s218] %v347
          %v349 = vld [vmem:[%s225 + $0xf8] sm:%s218]
          %350 = vst [vmem:[%s226 + $0xf4] sm:%s218] %v349
          %v351 = vld [vmem:[%s225 + $0xec] sm:%s218]
          %352 = vst [vmem:[%s226 + $0xf8] sm:%s218] %v351
          %v353 = vld [vmem:[%s225 + $0xfc] sm:%s218]
          %354 = vst [vmem:[%s226 + $0xfc] sm:%s218] %v353
        $region52: #{lstm_bnn_forward.1} parent=39 // loop_footer
          %s224 = sadd.s32 1, %s220
        $region53: #{lstm_bnn_forward.1} parent=39 // loop_footer_branch
          %219 = sbr.rel target = $region49
        $region54: #{lstm_bnn_forward.1} parent=39 // loop_exit
          _
      $region40: #{lstm_bnn_forward.1} parent=24 // pred_fallthru
        _
    $region25: #{lstm_bnn_forward.1} parent=1 // pred_fallthru
      _
    // Predicated region
    $region26: #{lstm_bnn_forward.1} parent=1 // pred_check
      %p60 = pneg %p56
    $region27: #{lstm_bnn_forward.1} parent=1 // pred_check_branch
      %62 = sbr.rel (%p60) target = $region29
    $region28: #{lstm_bnn_forward.1} parent=1 // pred_region
      %s63 = sshllo.u32 0, 4
      loop: start=0, step=1, limit=1
      $region30: #{lstm_bnn_forward.1} parent=28 // loop_pre_header
        _
      $region31: #{lstm_bnn_forward.1} parent=28 // loop_header
        %s65 = sphi 0, %s69
        %p66 = scmp.ge.s32.totalorder %s65, 1
        %s70 = sphi %s2, %s2
        %s71 = sphi [#allocation3], [#allocation3]
      $region32: #{lstm_bnn_forward.1} parent=28 // loop_header_branch
        %68 = sbr.rel (%p66) target = $region36
      $region33: #{lstm_bnn_forward.1} parent=28 // loop_body
        %v72 = vld [vmem:[%s70] sm:%s63]
        %73 = vst [vmem:[%s71] sm:%s63] %v72
        %v74 = vld [vmem:[%s70 + $0x10] sm:%s63]
        %75 = vst [vmem:[%s71 + $0x4] sm:%s63] %v74
        %v76 = vld [vmem:[%s70 + $0x4] sm:%s63]
        %77 = vst [vmem:[%s71 + $0x8] sm:%s63] %v76
        %v78 = vld [vmem:[%s70 + $0x14] sm:%s63]
        %79 = vst [vmem:[%s71 + $0xc] sm:%s63] %v78
        %v80 = vld [vmem:[%s70 + $0x8] sm:%s63]
        %81 = vst [vmem:[%s71 + $0x10] sm:%s63] %v80
        %v82 = vld [vmem:[%s70 + $0x18] sm:%s63]
        %83 = vst [vmem:[%s71 + $0x14] sm:%s63] %v82
        %v84 = vld [vmem:[%s70 + $0xc] sm:%s63]
        %85 = vst [vmem:[%s71 + $0x18] sm:%s63] %v84
        %v86 = vld [vmem:[%s70 + $0x1c] sm:%s63]
        %87 = vst [vmem:[%s71 + $0x1c] sm:%s63] %v86
        %v88 = vld [vmem:[%s70 + $0x20] sm:%s63]
        %89 = vst [vmem:[%s71 + $0x20] sm:%s63] %v88
        %v90 = vld [vmem:[%s70 + $0x30] sm:%s63]
        %91 = vst [vmem:[%s71 + $0x24] sm:%s63] %v90
        %v92 = vld [vmem:[%s70 + $0x24] sm:%s63]
        %93 = vst [vmem:[%s71 + $0x28] sm:%s63] %v92
        %v94 = vld [vmem:[%s70 + $0x34] sm:%s63]
        %95 = vst [vmem:[%s71 + $0x2c] sm:%s63] %v94
        %v96 = vld [vmem:[%s70 + $0x28] sm:%s63]
        %97 = vst [vmem:[%s71 + $0x30] sm:%s63] %v96
        %v98 = vld [vmem:[%s70 + $0x38] sm:%s63]
        %99 = vst [vmem:[%s71 + $0x34] sm:%s63] %v98
        %v100 = vld [vmem:[%s70 + $0x2c] sm:%s63]
        %101 = vst [vmem:[%s71 + $0x38] sm:%s63] %v100
        %v102 = vld [vmem:[%s70 + $0x3c] sm:%s63]
        %103 = vst [vmem:[%s71 + $0x3c] sm:%s63] %v102
        %v104 = vld [vmem:[%s70 + $0x40] sm:%s63]
        %105 = vst [vmem:[%s71 + $0x40] sm:%s63] %v104
        %v106 = vld [vmem:[%s70 + $0x50] sm:%s63]
        %107 = vst [vmem:[%s71 + $0x44] sm:%s63] %v106
        %v108 = vld [vmem:[%s70 + $0x44] sm:%s63]
        %109 = vst [vmem:[%s71 + $0x48] sm:%s63] %v108
        %v110 = vld [vmem:[%s70 + $0x54] sm:%s63]
        %111 = vst [vmem:[%s71 + $0x4c] sm:%s63] %v110
        %v112 = vld [vmem:[%s70 + $0x48] sm:%s63]
        %113 = vst [vmem:[%s71 + $0x50] sm:%s63] %v112
        %v114 = vld [vmem:[%s70 + $0x58] sm:%s63]
        %115 = vst [vmem:[%s71 + $0x54] sm:%s63] %v114
        %v116 = vld [vmem:[%s70 + $0x4c] sm:%s63]
        %117 = vst [vmem:[%s71 + $0x58] sm:%s63] %v116
        %v118 = vld [vmem:[%s70 + $0x5c] sm:%s63]
        %119 = vst [vmem:[%s71 + $0x5c] sm:%s63] %v118
        %v120 = vld [vmem:[%s70 + $0x60] sm:%s63]
        %121 = vst [vmem:[%s71 + $0x60] sm:%s63] %v120
        %v122 = vld [vmem:[%s70 + $0x70] sm:%s63]
        %123 = vst [vmem:[%s71 + $0x64] sm:%s63] %v122
        %v124 = vld [vmem:[%s70 + $0x64] sm:%s63]
        %125 = vst [vmem:[%s71 + $0x68] sm:%s63] %v124
        %v126 = vld [vmem:[%s70 + $0x74] sm:%s63]
        %127 = vst [vmem:[%s71 + $0x6c] sm:%s63] %v126
        %v128 = vld [vmem:[%s70 + $0x68] sm:%s63]
        %129 = vst [vmem:[%s71 + $0x70] sm:%s63] %v128
        %v130 = vld [vmem:[%s70 + $0x78] sm:%s63]
        %131 = vst [vmem:[%s71 + $0x74] sm:%s63] %v130
        %v132 = vld [vmem:[%s70 + $0x6c] sm:%s63]
        %133 = vst [vmem:[%s71 + $0x78] sm:%s63] %v132
        %v134 = vld [vmem:[%s70 + $0x7c] sm:%s63]
        %135 = vst [vmem:[%s71 + $0x7c] sm:%s63] %v134
        %v136 = vld [vmem:[%s70 + $0x80] sm:%s63]
        %137 = vst [vmem:[%s71 + $0x80] sm:%s63] %v136
        %v138 = vld [vmem:[%s70 + $0x90] sm:%s63]
        %139 = vst [vmem:[%s71 + $0x84] sm:%s63] %v138
        %v140 = vld [vmem:[%s70 + $0x84] sm:%s63]
        %141 = vst [vmem:[%s71 + $0x88] sm:%s63] %v140
        %v142 = vld [vmem:[%s70 + $0x94] sm:%s63]
        %143 = vst [vmem:[%s71 + $0x8c] sm:%s63] %v142
        %v144 = vld [vmem:[%s70 + $0x88] sm:%s63]
        %145 = vst [vmem:[%s71 + $0x90] sm:%s63] %v144
        %v146 = vld [vmem:[%s70 + $0x98] sm:%s63]
        %147 = vst [vmem:[%s71 + $0x94] sm:%s63] %v146
        %v148 = vld [vmem:[%s70 + $0x8c] sm:%s63]
        %149 = vst [vmem:[%s71 + $0x98] sm:%s63] %v148
        %v150 = vld [vmem:[%s70 + $0x9c] sm:%s63]
        %151 = vst [vmem:[%s71 + $0x9c] sm:%s63] %v150
        %v152 = vld [vmem:[%s70 + $0xa0] sm:%s63]
        %153 = vst [vmem:[%s71 + $0xa0] sm:%s63] %v152
        %v154 = vld [vmem:[%s70 + $0xb0] sm:%s63]
        %155 = vst [vmem:[%s71 + $0xa4] sm:%s63] %v154
        %v156 = vld [vmem:[%s70 + $0xa4] sm:%s63]
        %157 = vst [vmem:[%s71 + $0xa8] sm:%s63] %v156
        %v158 = vld [vmem:[%s70 + $0xb4] sm:%s63]
        %159 = vst [vmem:[%s71 + $0xac] sm:%s63] %v158
        %v160 = vld [vmem:[%s70 + $0xa8] sm:%s63]
        %161 = vst [vmem:[%s71 + $0xb0] sm:%s63] %v160
        %v162 = vld [vmem:[%s70 + $0xb8] sm:%s63]
        %163 = vst [vmem:[%s71 + $0xb4] sm:%s63] %v162
        %v164 = vld [vmem:[%s70 + $0xac] sm:%s63]
        %165 = vst [vmem:[%s71 + $0xb8] sm:%s63] %v164
        %v166 = vld [vmem:[%s70 + $0xbc] sm:%s63]
        %167 = vst [vmem:[%s71 + $0xbc] sm:%s63] %v166
        %v168 = vld [vmem:[%s70 + $0xc0] sm:%s63]
        %169 = vst [vmem:[%s71 + $0xc0] sm:%s63] %v168
        %v170 = vld [vmem:[%s70 + $0xd0] sm:%s63]
        %171 = vst [vmem:[%s71 + $0xc4] sm:%s63] %v170
        %v172 = vld [vmem:[%s70 + $0xc4] sm:%s63]
        %173 = vst [vmem:[%s71 + $0xc8] sm:%s63] %v172
        %v174 = vld [vmem:[%s70 + $0xd4] sm:%s63]
        %175 = vst [vmem:[%s71 + $0xcc] sm:%s63] %v174
        %v176 = vld [vmem:[%s70 + $0xc8] sm:%s63]
        %177 = vst [vmem:[%s71 + $0xd0] sm:%s63] %v176
        %v178 = vld [vmem:[%s70 + $0xd8] sm:%s63]
        %179 = vst [vmem:[%s71 + $0xd4] sm:%s63] %v178
        %v180 = vld [vmem:[%s70 + $0xcc] sm:%s63]
        %181 = vst [vmem:[%s71 + $0xd8] sm:%s63] %v180
        %v182 = vld [vmem:[%s70 + $0xdc] sm:%s63]
        %183 = vst [vmem:[%s71 + $0xdc] sm:%s63] %v182
        %v184 = vld [vmem:[%s70 + $0xe0] sm:%s63]
        %185 = vst [vmem:[%s71 + $0xe0] sm:%s63] %v184
        %v186 = vld [vmem:[%s70 + $0xf0] sm:%s63]
        %187 = vst [vmem:[%s71 + $0xe4] sm:%s63] %v186
        %v188 = vld [vmem:[%s70 + $0xe4] sm:%s63]
        %189 = vst [vmem:[%s71 + $0xe8] sm:%s63] %v188
        %v190 = vld [vmem:[%s70 + $0xf4] sm:%s63]
        %191 = vst [vmem:[%s71 + $0xec] sm:%s63] %v190
        %v192 = vld [vmem:[%s70 + $0xe8] sm:%s63]
        %193 = vst [vmem:[%s71 + $0xf0] sm:%s63] %v192
        %v194 = vld [vmem:[%s70 + $0xf8] sm:%s63]
        %195 = vst [vmem:[%s71 + $0xf4] sm:%s63] %v194
        %v196 = vld [vmem:[%s70 + $0xec] sm:%s63]
        %197 = vst [vmem:[%s71 + $0xf8] sm:%s63] %v196
        %v198 = vld [vmem:[%s70 + $0xfc] sm:%s63]
        %199 = vst [vmem:[%s71 + $0xfc] sm:%s63] %v198
      $region34: #{lstm_bnn_forward.1} parent=28 // loop_footer
        %s69 = sadd.s32 1, %s65
      $region35: #{lstm_bnn_forward.1} parent=28 // loop_footer_branch
        %64 = sbr.rel target = $region31
      $region36: #{lstm_bnn_forward.1} parent=28 // loop_exit
        _
    $region29: #{lstm_bnn_forward.1} parent=1 // pred_fallthru
      _
    // Predicated region
    $region55: #{lstm_bnn_forward.1} parent=1 // pred_check
      _
    $region56: #{lstm_bnn_forward.1} parent=1 // pred_check_branch
      %357 = sbr.rel (0) target = $region58
    $region57: #{lstm_bnn_forward.1} parent=1 // pred_region
      %358 = vsyncadd %s54, 4096
    $region58: #{lstm_bnn_forward.1} parent=1 // pred_fallthru
      _
    %s359 = smul.u32 4, 2
    %s360 = smul.u32 %s359, 4
    %s361 = sshll.u32 %s360, 4
    %362 = dma.done [#allocation6], %s361
    %s363 = smul.u32 4, 16
    %s364 = smul.u32 %s363, 4
    %s365 = sshll.u32 %s364, 4
    %366 = dma.done %s54, %s365
    %s367 = scalar_lea.vmem [#allocation2], 256
    %s368 = scalar_lea.sflag [#allocation6], 2
    %s370 = sshll.u32 1, 14
    %s371 = sxor.u32 4294967295, %s370
    %s373 = sadd.s32 2, %s29
    %s375 = sshll.u32 7, 26
    %s376 = sxor.u32 4294967295, %s375
    %s377 = sand.u32 0, %s376
    %s378 = sshll.u32 %s373, 26
    %s379 = sor.u32 %s377, %s378
    %s380 = sshll.u32 %s367, 4
    %s381 = int_to_ptr.vmem [resolvable:$true] %s380
    %384 = sst [smem:[#allocation11]] 512
    %s385 = scalar_lea.smem [#allocation11], 1
    %386 = sst [smem:[%s385]] 512
    %s387 = scalar_lea.smem [#allocation11], 2
    %388 = sst [smem:[%s387]] 4
    %s389 = scalar_lea.smem [#allocation11], 3
    %390 = sst [smem:[%s389]] 64
    %s391 = scalar_lea.smem [#allocation11], 4
    %392 = sst [smem:[%s391]] 128
    %s393 = scalar_lea.smem [#allocation11], 5
    %394 = sst [smem:[%s393]] 2
    %s395 = scalar_lea.smem [#allocation11], 6
    %396 = sst [smem:[%s395]] 256
    %s397 = scalar_lea.smem [#allocation11], 7
    %398 = sst [smem:[%s397]] 64
    %s399 = scalar_lea.smem [#allocation11], 8
    %400 = sst [smem:[%s399]] 4
    %402 = dma.general %s4, 4096, %s381, %s368, [#allocation10], [#allocation11], %s379, 0
    %s403 = scalar_lea.vmem [#allocation3], 256
    %s404 = scalar_lea.sflag [#allocation6], 3
    %s406 = sshll.u32 1, 14
    %s407 = sxor.u32 4294967295, %s406
    %s409 = sadd.s32 2, %s29
    %s411 = sshll.u32 7, 26
    %s412 = sxor.u32 4294967295, %s411
    %s413 = sand.u32 0, %s412
    %s414 = sshll.u32 %s409, 26
    %s415 = sor.u32 %s413, %s414
    %s416 = sshll.u32 %s403, 4
    %s417 = int_to_ptr.vmem [resolvable:$true] %s416
    %420 = sst [smem:[#allocation13]] 512
    %s421 = scalar_lea.smem [#allocation13], 1
    %422 = sst [smem:[%s421]] 512
    %s423 = scalar_lea.smem [#allocation13], 2
    %424 = sst [smem:[%s423]] 4
    %s425 = scalar_lea.smem [#allocation13], 3
    %426 = sst [smem:[%s425]] 64
    %s427 = scalar_lea.smem [#allocation13], 4
    %428 = sst [smem:[%s427]] 128
    %s429 = scalar_lea.smem [#allocation13], 5
    %430 = sst [smem:[%s429]] 2
    %s431 = scalar_lea.smem [#allocation13], 6
    %432 = sst [smem:[%s431]] 256
    %s433 = scalar_lea.smem [#allocation13], 7
    %434 = sst [smem:[%s433]] 64
    %s435 = scalar_lea.smem [#allocation13], 8
    %436 = sst [smem:[%s435]] 4
    %438 = dma.general %s5, 4096, %s417, %s404, [#allocation12], [#allocation13], %s415, 0
    %v439 = vld [vmem:[%s0] sm:$0xf]
    %v440 = vld [vmem:[%s0 + $0x4] sm:$0xf]
    %v441 = vld [vmem:[%s0 + $0x8] sm:$0xf]
    %v442 = vld [vmem:[%s0 + $0xc] sm:$0xf]
    %v443 = vld [vmem:[%s0 + $0x10] sm:$0xf]
    %v444 = vld [vmem:[%s0 + $0x14] sm:$0xf]
    %v445 = vld [vmem:[%s0 + $0x18] sm:$0xf]
    %v446 = vld [vmem:[%s0 + $0x1c] sm:$0xf]
    %v447 = vld [vmem:[%s0 + $0x20] sm:$0xf]
    %v448 = vld [vmem:[%s0 + $0x24] sm:$0xf]
    %v449 = vld [vmem:[%s0 + $0x28] sm:$0xf]
    %v450 = vld [vmem:[%s0 + $0x2c] sm:$0xf]
    %v451 = vld [vmem:[%s0 + $0x30] sm:$0xf]
    %v452 = vld [vmem:[%s0 + $0x34] sm:$0xf]
    %v453 = vld [vmem:[%s0 + $0x38] sm:$0xf]
    %v454 = vld [vmem:[%s0 + $0x3c] sm:$0xf]
    %v455 = vld [vmem:[#allocation2] sm:$0xff]
    %v456 = vld [vmem:[#allocation2 + $0x8] sm:$0xff]
    %v457 = vld [vmem:[#allocation2 + $0x10] sm:$0xff]
    %v458 = vld [vmem:[#allocation2 + $0x18] sm:$0xff]
    %v459 = vld [vmem:[%s3] sm:$0xf]
    %v461 = vlaneseq
    %v462 = vshrl.u32 %v461, 7
    %v463 = vsub.s32 0, %v462
    %v464 = vrot.slane %v459, %v463
    %v465 = vlaneseq
    %v466 = vshrl.u32 %v465, 7
    %v467 = vsub.s32 1, %v466
    %v468 = vrot.slane %v459, %v467
    %v469 = vlaneseq
    %v470 = vshrl.u32 %v469, 7
    %v471 = vsub.s32 2, %v470
    %v472 = vrot.slane %v459, %v471
    %v473 = vlaneseq
    %v474 = vshrl.u32 %v473, 7
    %v475 = vsub.s32 3, %v474
    %v476 = vrot.slane %v459, %v475
    %v497 = vunpack.c.l.b16 %v439
    %v498 = vunpack.c.l.b16 %v440
    %v499 = vunpack.c.l.b16 %v441
    %v500 = vunpack.c.l.b16 %v442
    %v501 = vunpack.c.l.b16 %v443
    %v502 = vunpack.c.l.b16 %v444
    %v503 = vunpack.c.l.b16 %v445
    %v504 = vunpack.c.l.b16 %v446
    %v505 = vunpack.c.l.b16 %v447
    %v506 = vunpack.c.l.b16 %v448
    %v507 = vunpack.c.l.b16 %v449
    %v508 = vunpack.c.l.b16 %v450
    %v509 = vunpack.c.l.b16 %v451
    %v510 = vunpack.c.l.b16 %v452
    %v511 = vunpack.c.l.b16 %v453
    %v512 = vunpack.c.l.b16 %v454
    %v513 = vpack.c.b16 %v498, %v497
    %v514 = vpack.c.b16 %v500, %v499
    %v515 = vpack.c.b16 %v502, %v501
    %v516 = vpack.c.b16 %v504, %v503
    %v517 = vpack.c.b16 %v506, %v505
    %v518 = vpack.c.b16 %v508, %v507
    %v519 = vpack.c.b16 %v510, %v509
    %v520 = vpack.c.b16 %v512, %v511
    %vm521 = vcmask 130048
    %v523 = vsel %vm521, %v513, 0
    %v526 = vsel %vm521, %v514, 0
    %v529 = vsel %vm521, %v515, 0
    %v532 = vsel %vm521, %v516, 0
    %v535 = vsel %vm521, %v517, 0
    %v538 = vsel %vm521, %v518, 0
    %v541 = vsel %vm521, %v519, 0
    %v544 = vsel %vm521, %v520, 0
    %546 = vmatprep.subr.bf16.mxu0 %v456
    %547 = vmatpush1.bf16.msra.mxu0 %v455
    %548 = vmatprep.subr.bf16.mxu0 0
    %549 = vmatpush1.bf16.msra.mxu0 0
    %550 = vmatprep.subr.bf16.mxu0 0
    %551 = vmatpush1.bf16.msra.mxu0 0
    %552 = vmatprep.subr.bf16.mxu0 0
    %553 = vmatpush1.bf16.msra.mxu0 0
    %554 = vmatprep.subr.bf16.mxu0 0
    %555 = vmatpush1.bf16.msra.mxu0 0
    %556 = vmatprep.subr.bf16.mxu0 0
    %557 = vmatpush1.bf16.msra.mxu0 0
    %558 = vmatprep.subr.bf16.mxu0 0
    %559 = vmatpush1.bf16.msra.mxu0 0
    %560 = vmatprep.subr.bf16.mxu0 0
    %561 = vmatpush1.bf16.msra.mxu0 0
    %562 = vmatprep.subr.bf16.mxu0 0
    %563 = vmatpush1.bf16.msra.mxu0 0
    %564 = vmatprep.subr.bf16.mxu0 0
    %565 = vmatpush1.bf16.msra.mxu0 0
    %566 = vmatprep.subr.bf16.mxu0 0
    %567 = vmatpush1.bf16.msra.mxu0 0
    %568 = vmatprep.subr.bf16.mxu0 0
    %569 = vmatpush1.bf16.msra.mxu0 0
    %570 = vmatprep.subr.bf16.mxu0 0
    %571 = vmatpush1.bf16.msra.mxu0 0
    %572 = vmatprep.subr.bf16.mxu0 0
    %573 = vmatpush1.bf16.msra.mxu0 0
    %574 = vmatprep.subr.bf16.mxu0 0
    %575 = vmatpush1.bf16.msra.mxu0 0
    %576 = vmatprep.subr.bf16.mxu0 0
    %577 = vmatpush1.bf16.msra.mxu0 0
    %578 = vmatprep.mubr.bf16.mxu0 0
    %579 = vmatmul.mubr.bf16.gmra.mrb[0].mxu0 %v523
    %v580 = vpop.f32.mrb[0].mxu0
    %v581 = vadd.f32 %v464, %v580
    %v582 = vpop.f32.mrb[0].mxu0
    %v583 = vadd.f32 %v468, %v582
    %v584 = vpop.f32.mrb[0].mxu0
    %v585 = vadd.f32 %v464, %v584
    %v586 = vpop.f32.mrb[0].mxu0
    %v587 = vadd.f32 %v468, %v586
    %588 = vmatprep.mubr.bf16.mxu0 0
    %589 = vmatmul.mubr.bf16.gmra.mrb[0].mxu0 %v526
    %v590 = vpop.f32.mrb[0].mxu0
    %v591 = vadd.f32 %v464, %v590
    %v592 = vpop.f32.mrb[0].mxu0
    %v593 = vadd.f32 %v468, %v592
    %v594 = vpop.f32.mrb[0].mxu0
    %v595 = vadd.f32 %v464, %v594
    %v596 = vpop.f32.mrb[0].mxu0
    %v597 = vadd.f32 %v468, %v596
    %598 = vmatprep.mubr.bf16.mxu0 0
    %599 = vmatmul.mubr.bf16.gmra.mrb[0].mxu0 %v529
    %v600 = vpop.f32.mrb[0].mxu0
    %v601 = vadd.f32 %v464, %v600
    %v602 = vpop.f32.mrb[0].mxu0
    %v603 = vadd.f32 %v468, %v602
    %v604 = vpop.f32.mrb[0].mxu0
    %v605 = vadd.f32 %v464, %v604
    %v606 = vpop.f32.mrb[0].mxu0
    %v607 = vadd.f32 %v468, %v606
    %608 = vmatprep.mubr.bf16.mxu0 0
    %609 = vmatmul.mubr.bf16.gmra.mrb[0].mxu0 %v532
    %v610 = vpop.f32.mrb[0].mxu0
    %v611 = vadd.f32 %v464, %v610
    %v612 = vpop.f32.mrb[0].mxu0
    %v613 = vadd.f32 %v468, %v612
    %v614 = vpop.f32.mrb[0].mxu0
    %v615 = vadd.f32 %v464, %v614
    %v616 = vpop.f32.mrb[0].mxu0
    %v617 = vadd.f32 %v468, %v616
    %618 = vmatprep.mubr.bf16.mxu0 0
    %619 = vmatmul.mubr.bf16.gmra.mrb[0].mxu0 %v535
    %v620 = vpop.f32.mrb[0].mxu0
    %v621 = vadd.f32 %v464, %v620
    %v622 = vpop.f32.mrb[0].mxu0
    %v623 = vadd.f32 %v468, %v622
    %v624 = vpop.f32.mrb[0].mxu0
    %v625 = vadd.f32 %v464, %v624
    %v626 = vpop.f32.mrb[0].mxu0
    %v627 = vadd.f32 %v468, %v626
    %628 = vmatprep.mubr.bf16.mxu0 0
    %629 = vmatmul.mubr.bf16.gmra.mrb[0].mxu0 %v538
    %v630 = vpop.f32.mrb[0].mxu0
    %v631 = vadd.f32 %v464, %v630
    %v632 = vpop.f32.mrb[0].mxu0
    %v633 = vadd.f32 %v468, %v632
    %v634 = vpop.f32.mrb[0].mxu0
    %v635 = vadd.f32 %v464, %v634
    %v636 = vpop.f32.mrb[0].mxu0
    %v637 = vadd.f32 %v468, %v636
    %638 = vmatprep.mubr.bf16.mxu0 0
    %639 = vmatmul.mubr.bf16.gmra.mrb[0].mxu0 %v541
    %v640 = vpop.f32.mrb[0].mxu0
    %v641 = vadd.f32 %v464, %v640
    %v642 = vpop.f32.mrb[0].mxu0
    %v643 = vadd.f32 %v468, %v642
    %v644 = vpop.f32.mrb[0].mxu0
    %v645 = vadd.f32 %v464, %v644
    %v646 = vpop.f32.mrb[0].mxu0
    %v647 = vadd.f32 %v468, %v646
    %648 = vmatprep.mubr.bf16.mxu0 0
    %649 = vmatmul.mubr.bf16.gmra.mrb[0].mxu0 %v544
    %v650 = vpop.f32.mrb[0].mxu0
    %v651 = vadd.f32 %v464, %v650
    %v652 = vpop.f32.mrb[0].mxu0
    %v653 = vadd.f32 %v468, %v652
    %v654 = vpop.f32.mrb[0].mxu0
    %v655 = vadd.f32 %v464, %v654
    %v656 = vpop.f32.mrb[0].mxu0
    %v657 = vadd.f32 %v468, %v656
    %658 = vdwg.mxu0
    %659 = vmatprep.subr.bf16.mxu0 %v458
    %660 = vmatpush1.bf16.msra.mxu0 %v457
    %661 = vmatprep.subr.bf16.mxu0 0
    %662 = vmatpush1.bf16.msra.mxu0 0
    %663 = vmatprep.subr.bf16.mxu0 0
    %664 = vmatpush1.bf16.msra.mxu0 0
    %665 = vmatprep.subr.bf16.mxu0 0
    %666 = vmatpush1.bf16.msra.mxu0 0
    %667 = vmatprep.subr.bf16.mxu0 0
    %668 = vmatpush1.bf16.msra.mxu0 0
    %669 = vmatprep.subr.bf16.mxu0 0
    %670 = vmatpush1.bf16.msra.mxu0 0
    %671 = vmatprep.subr.bf16.mxu0 0
    %672 = vmatpush1.bf16.msra.mxu0 0
    %673 = vmatprep.subr.bf16.mxu0 0
    %674 = vmatpush1.bf16.msra.mxu0 0
    %675 = vmatprep.subr.bf16.mxu0 0
    %676 = vmatpush1.bf16.msra.mxu0 0
    %677 = vmatprep.subr.bf16.mxu0 0
    %678 = vmatpush1.bf16.msra.mxu0 0
    %679 = vmatprep.subr.bf16.mxu0 0
    %680 = vmatpush1.bf16.msra.mxu0 0
    %681 = vmatprep.subr.bf16.mxu0 0
    %682 = vmatpush1.bf16.msra.mxu0 0
    %683 = vmatprep.subr.bf16.mxu0 0
    %684 = vmatpush1.bf16.msra.mxu0 0
    %685 = vmatprep.subr.bf16.mxu0 0
    %686 = vmatpush1.bf16.msra.mxu0 0
    %687 = vmatprep.subr.bf16.mxu0 0
    %688 = vmatpush1.bf16.msra.mxu0 0
    %689 = vmatprep.subr.bf16.mxu0 0
    %690 = vmatpush1.bf16.msra.mxu0 0
    %691 = vmatprep.mubr.bf16.mxu0 0
    %692 = vmatmul.mubr.bf16.gmra.mrb[0].mxu0 %v523
    %v693 = vpop.f32.mrb[0].mxu0
    %v694 = vadd.f32 %v472, %v693
    %v695 = vpop.f32.mrb[0].mxu0
    %v696 = vadd.f32 %v476, %v695
    %v697 = vpop.f32.mrb[0].mxu0
    %v698 = vadd.f32 %v472, %v697
    %v699 = vpop.f32.mrb[0].mxu0
    %v700 = vadd.f32 %v476, %v699
    %701 = vmatprep.mubr.bf16.mxu0 0
    %702 = vmatmul.mubr.bf16.gmra.mrb[0].mxu0 %v526
    %v703 = vpop.f32.mrb[0].mxu0
    %v704 = vadd.f32 %v472, %v703
    %v705 = vpop.f32.mrb[0].mxu0
    %v706 = vadd.f32 %v476, %v705
    %v707 = vpop.f32.mrb[0].mxu0
    %v708 = vadd.f32 %v472, %v707
    %v709 = vpop.f32.mrb[0].mxu0
    %v710 = vadd.f32 %v476, %v709
    %711 = vmatprep.mubr.bf16.mxu0 0
    %712 = vmatmul.mubr.bf16.gmra.mrb[0].mxu0 %v529
    %v713 = vpop.f32.mrb[0].mxu0
    %v714 = vadd.f32 %v472, %v713
    %v715 = vpop.f32.mrb[0].mxu0
    %v716 = vadd.f32 %v476, %v715
    %v717 = vpop.f32.mrb[0].mxu0
    %v718 = vadd.f32 %v472, %v717
    %v719 = vpop.f32.mrb[0].mxu0
    %v720 = vadd.f32 %v476, %v719
    %721 = vmatprep.mubr.bf16.mxu0 0
    %722 = vmatmul.mubr.bf16.gmra.mrb[0].mxu0 %v532
    %v723 = vpop.f32.mrb[0].mxu0
    %v724 = vadd.f32 %v472, %v723
    %v725 = vpop.f32.mrb[0].mxu0
    %v726 = vadd.f32 %v476, %v725
    %v727 = vpop.f32.mrb[0].mxu0
    %v728 = vadd.f32 %v472, %v727
    %v729 = vpop.f32.mrb[0].mxu0
    %v730 = vadd.f32 %v476, %v729
    %731 = vmatprep.mubr.bf16.mxu0 0
    %732 = vmatmul.mubr.bf16.gmra.mrb[0].mxu0 %v535
    %v733 = vpop.f32.mrb[0].mxu0
    %v734 = vadd.f32 %v472, %v733
    %v735 = vpop.f32.mrb[0].mxu0
    %v736 = vadd.f32 %v476, %v735
    %v737 = vpop.f32.mrb[0].mxu0
    %v738 = vadd.f32 %v472, %v737
    %v739 = vpop.f32.mrb[0].mxu0
    %v740 = vadd.f32 %v476, %v739
    %741 = vmatprep.mubr.bf16.mxu0 0
    %742 = vmatmul.mubr.bf16.gmra.mrb[0].mxu0 %v538
    %v743 = vpop.f32.mrb[0].mxu0
    %v744 = vadd.f32 %v472, %v743
    %v745 = vpop.f32.mrb[0].mxu0
    %v746 = vadd.f32 %v476, %v745
    %v747 = vpop.f32.mrb[0].mxu0
    %v748 = vadd.f32 %v472, %v747
    %v749 = vpop.f32.mrb[0].mxu0
    %v750 = vadd.f32 %v476, %v749
    %751 = vmatprep.mubr.bf16.mxu0 0
    %752 = vmatmul.mubr.bf16.gmra.mrb[0].mxu0 %v541
    %v753 = vpop.f32.mrb[0].mxu0
    %v754 = vadd.f32 %v472, %v753
    %v755 = vpop.f32.mrb[0].mxu0
    %v756 = vadd.f32 %v476, %v755
    %v757 = vpop.f32.mrb[0].mxu0
    %v758 = vadd.f32 %v472, %v757
    %v759 = vpop.f32.mrb[0].mxu0
    %v760 = vadd.f32 %v476, %v759
    %761 = vmatprep.mubr.bf16.mxu0 0
    %762 = vmatmul.mubr.bf16.gmra.mrb[0].mxu0 %v544
    %v763 = vpop.f32.mrb[0].mxu0
    %v764 = vadd.f32 %v472, %v763
    %v765 = vpop.f32.mrb[0].mxu0
    %v766 = vadd.f32 %v476, %v765
    %v767 = vpop.f32.mrb[0].mxu0
    %v768 = vadd.f32 %v472, %v767
    %v769 = vpop.f32.mrb[0].mxu0
    %v770 = vadd.f32 %v476, %v769
    %771 = vdwg.mxu0
    %772 = vst [vmem:[#allocation4] sm:$0xff] %v581
    %773 = vst [vmem:[#allocation4 + $0x8] sm:$0xff] %v583
    %774 = vst [vmem:[#allocation4 + $0x10] sm:$0xff] %v694
    %775 = vst [vmem:[#allocation4 + $0x18] sm:$0xff] %v696
    %776 = vst [vmem:[#allocation4 + $0x20] sm:$0xff] %v585
    %777 = vst [vmem:[#allocation4 + $0x28] sm:$0xff] %v587
    %778 = vst [vmem:[#allocation4 + $0x30] sm:$0xff] %v698
    %779 = vst [vmem:[#allocation4 + $0x38] sm:$0xff] %v700
    %780 = vst [vmem:[#allocation4 + $0x40] sm:$0xff] %v591
    %781 = vst [vmem:[#allocation4 + $0x48] sm:$0xff] %v593
    %782 = vst [vmem:[#allocation4 + $0x50] sm:$0xff] %v704
    %783 = vst [vmem:[#allocation4 + $0x58] sm:$0xff] %v706
    %784 = vst [vmem:[#allocation4 + $0x60] sm:$0xff] %v595
    %785 = vst [vmem:[#allocation4 + $0x68] sm:$0xff] %v597
    %786 = vst [vmem:[#allocation4 + $0x70] sm:$0xff] %v708
    %787 = vst [vmem:[#allocation4 + $0x78] sm:$0xff] %v710
    %788 = vst [vmem:[#allocation4 + $0x80] sm:$0xff] %v601
    %789 = vst [vmem:[#allocation4 + $0x88] sm:$0xff] %v603
    %790 = vst [vmem:[#allocation4 + $0x90] sm:$0xff] %v714
    %791 = vst [vmem:[#allocation4 + $0x98] sm:$0xff] %v716
    %792 = vst [vmem:[#allocation4 + $0xa0] sm:$0xff] %v605
    %793 = vst [vmem:[#allocation4 + $0xa8] sm:$0xff] %v607
    %794 = vst [vmem:[#allocation4 + $0xb0] sm:$0xff] %v718
    %795 = vst [vmem:[#allocation4 + $0xb8] sm:$0xff] %v720
    %796 = vst [vmem:[#allocation4 + $0xc0] sm:$0xff] %v611
    %797 = vst [vmem:[#allocation4 + $0xc8] sm:$0xff] %v613
    %798 = vst [vmem:[#allocation4 + $0xd0] sm:$0xff] %v724
    %799 = vst [vmem:[#allocation4 + $0xd8] sm:$0xff] %v726
    %800 = vst [vmem:[#allocation4 + $0xe0] sm:$0xff] %v615
    %801 = vst [vmem:[#allocation4 + $0xe8] sm:$0xff] %v617
    %802 = vst [vmem:[#allocation4 + $0xf0] sm:$0xff] %v728
    %803 = vst [vmem:[#allocation4 + $0xf8] sm:$0xff] %v730
    %804 = vst [vmem:[#allocation4 + $0x100] sm:$0xff] %v621
    %805 = vst [vmem:[#allocation4 + $0x108] sm:$0xff] %v623
    %806 = vst [vmem:[#allocation4 + $0x110] sm:$0xff] %v734
    %807 = vst [vmem:[#allocation4 + $0x118] sm:$0xff] %v736
    %808 = vst [vmem:[#allocation4 + $0x120] sm:$0xff] %v625
    %809 = vst [vmem:[#allocation4 + $0x128] sm:$0xff] %v627
    %810 = vst [vmem:[#allocation4 + $0x130] sm:$0xff] %v738
    %811 = vst [vmem:[#allocation4 + $0x138] sm:$0xff] %v740
    %812 = vst [vmem:[#allocation4 + $0x140] sm:$0xff] %v631
    %813 = vst [vmem:[#allocation4 + $0x148] sm:$0xff] %v633
    %814 = vst [vmem:[#allocation4 + $0x150] sm:$0xff] %v744
    %815 = vst [vmem:[#allocation4 + $0x158] sm:$0xff] %v746
    %816 = vst [vmem:[#allocation4 + $0x160] sm:$0xff] %v635
    %817 = vst [vmem:[#allocation4 + $0x168] sm:$0xff] %v637
    %818 = vst [vmem:[#allocation4 + $0x170] sm:$0xff] %v748
    %819 = vst [vmem:[#allocation4 + $0x178] sm:$0xff] %v750
    %820 = vst [vmem:[#allocation4 + $0x180] sm:$0xff] %v641
    %821 = vst [vmem:[#allocation4 + $0x188] sm:$0xff] %v643
    %822 = vst [vmem:[#allocation4 + $0x190] sm:$0xff] %v754
    %823 = vst [vmem:[#allocation4 + $0x198] sm:$0xff] %v756
    %824 = vst [vmem:[#allocation4 + $0x1a0] sm:$0xff] %v645
    %825 = vst [vmem:[#allocation4 + $0x1a8] sm:$0xff] %v647
    %826 = vst [vmem:[#allocation4 + $0x1b0] sm:$0xff] %v758
    %827 = vst [vmem:[#allocation4 + $0x1b8] sm:$0xff] %v760
    %828 = vst [vmem:[#allocation4 + $0x1c0] sm:$0xff] %v651
    %829 = vst [vmem:[#allocation4 + $0x1c8] sm:$0xff] %v653
    %830 = vst [vmem:[#allocation4 + $0x1d0] sm:$0xff] %v764
    %831 = vst [vmem:[#allocation4 + $0x1d8] sm:$0xff] %v766
    %832 = vst [vmem:[#allocation4 + $0x1e0] sm:$0xff] %v655
    %833 = vst [vmem:[#allocation4 + $0x1e8] sm:$0xff] %v657
    %834 = vst [vmem:[#allocation4 + $0x1f0] sm:$0xff] %v768
    %835 = vst [vmem:[#allocation4 + $0x1f8] sm:$0xff] %v770
    %s836 = smul.u32 0, 4
    %s837 = smul.addr %s836, 8
    %s838 = scalar_lea.vmem [#allocation4], %s837
    %v839 = vld [vmem:[%s838] sm:$0xff]
    %v840 = vld [vmem:[%s838 + $0x8] sm:$0xff]
    %v841 = vld [vmem:[%s838 + $0x10] sm:$0xff]
    %v842 = vld [vmem:[%s838 + $0x18] sm:$0xff]
    %v843 = vld [vmem:[%s838 + $0x20] sm:$0xff]
    %v844 = vld [vmem:[%s838 + $0x28] sm:$0xff]
    %v845 = vld [vmem:[%s838 + $0x30] sm:$0xff]
    %v846 = vld [vmem:[%s838 + $0x38] sm:$0xff]
    %v847 = vld [vmem:[#allocation3] sm:$0xff]
    %v848 = vld [vmem:[#allocation3 + $0x8] sm:$0xff]
    %v849 = vld [vmem:[#allocation3 + $0x10] sm:$0xff]
    %v850 = vld [vmem:[#allocation3 + $0x18] sm:$0xff]
    %v851 = vld [vmem:[#allocation3 + $0x20] sm:$0xff]
    %v852 = vld [vmem:[#allocation3 + $0x28] sm:$0xff]
    %v853 = vld [vmem:[#allocation3 + $0x30] sm:$0xff]
    %v854 = vld [vmem:[#allocation3 + $0x38] sm:$0xff]
    %v855 = vld [vmem:[#allocation3 + $0x40] sm:$0xff]
    %v856 = vld [vmem:[#allocation3 + $0x48] sm:$0xff]
    %v857 = vld [vmem:[#allocation3 + $0x50] sm:$0xff]
    %v858 = vld [vmem:[#allocation3 + $0x58] sm:$0xff]
    %v859 = vld [vmem:[#allocation3 + $0x60] sm:$0xff]
    %v860 = vld [vmem:[#allocation3 + $0x68] sm:$0xff]
    %v861 = vld [vmem:[#allocation3 + $0x70] sm:$0xff]
    %v862 = vld [vmem:[#allocation3 + $0x78] sm:$0xff]
    %v863 = vld [vmem:[#allocation3 + $0x80] sm:$0xff]
    %v864 = vld [vmem:[#allocation3 + $0x88] sm:$0xff]
    %v865 = vld [vmem:[#allocation3 + $0x90] sm:$0xff]
    %v866 = vld [vmem:[#allocation3 + $0x98] sm:$0xff]
    %v867 = vld [vmem:[#allocation3 + $0xa0] sm:$0xff]
    %v868 = vld [vmem:[#allocation3 + $0xa8] sm:$0xff]
    %v869 = vld [vmem:[#allocation3 + $0xb0] sm:$0xff]
    %v870 = vld [vmem:[#allocation3 + $0xb8] sm:$0xff]
    %v871 = vld [vmem:[#allocation3 + $0xc0] sm:$0xff]
    %v872 = vld [vmem:[#allocation3 + $0xc8] sm:$0xff]
    %v873 = vld [vmem:[#allocation3 + $0xd0] sm:$0xff]
    %v874 = vld [vmem:[#allocation3 + $0xd8] sm:$0xff]
    %v875 = vld [vmem:[#allocation3 + $0xe0] sm:$0xff]
    %v876 = vld [vmem:[#allocation3 + $0xe8] sm:$0xff]
    %v877 = vld [vmem:[#allocation3 + $0xf0] sm:$0xff]
    %v878 = vld [vmem:[#allocation3 + $0xf8] sm:$0xff]
    %879 = vmatprep.subr.bf16.mxu0 %v848
    %880 = vmatpush1.bf16.msra.mxu0 %v847
    %881 = vmatprep.subr.bf16.mxu0 %v852
    %882 = vmatpush1.bf16.msra.mxu0 %v851
    %883 = vmatprep.subr.bf16.mxu0 %v856
    %884 = vmatpush1.bf16.msra.mxu0 %v855
    %885 = vmatprep.subr.bf16.mxu0 %v860
    %886 = vmatpush1.bf16.msra.mxu0 %v859
    %887 = vmatprep.subr.bf16.mxu0 %v864
    %888 = vmatpush1.bf16.msra.mxu0 %v863
    %889 = vmatprep.subr.bf16.mxu0 %v868
    %890 = vmatpush1.bf16.msra.mxu0 %v867
    %891 = vmatprep.subr.bf16.mxu0 %v872
    %892 = vmatpush1.bf16.msra.mxu0 %v871
    %893 = vmatprep.subr.bf16.mxu0 %v876
    %894 = vmatpush1.bf16.msra.mxu0 %v875
    %895 = vmatprep.subr.bf16.mxu0 0
    %896 = vmatpush1.bf16.msra.mxu0 0
    %897 = vmatprep.subr.bf16.mxu0 0
    %898 = vmatpush1.bf16.msra.mxu0 0
    %899 = vmatprep.subr.bf16.mxu0 0
    %900 = vmatpush1.bf16.msra.mxu0 0
    %901 = vmatprep.subr.bf16.mxu0 0
    %902 = vmatpush1.bf16.msra.mxu0 0
    %903 = vmatprep.subr.bf16.mxu0 0
    %904 = vmatpush1.bf16.msra.mxu0 0
    %905 = vmatprep.subr.bf16.mxu0 0
    %906 = vmatpush1.bf16.msra.mxu0 0
    %907 = vmatprep.subr.bf16.mxu0 0
    %908 = vmatpush1.bf16.msra.mxu0 0
    %909 = vmatprep.subr.bf16.mxu0 0
    %910 = vmatpush1.bf16.msra.mxu0 0
    %911 = vmatprep.mubr.bf16.mxu0 0
    %912 = vmatmul.mubr.bf16.gmra.mrb[0].mxu0 0
    %v913 = vpop.f32.mrb[0].mxu0
    %v914 = vadd.f32 0.0, %v913
    %v915 = vpop.f32.mrb[0].mxu0
    %v916 = vadd.f32 0.0, %v915
    %v917 = vpop.f32.mrb[0].mxu0
    %v918 = vadd.f32 0.0, %v917
    %v919 = vpop.f32.mrb[0].mxu0
    %v920 = vadd.f32 0.0, %v919
    %921 = vdwg.mxu0
    %922 = vmatprep.subr.bf16.mxu0 %v850
    %923 = vmatpush1.bf16.msra.mxu0 %v849
    %924 = vmatprep.subr.bf16.mxu0 %v854
    %925 = vmatpush1.bf16.msra.mxu0 %v853
    %926 = vmatprep.subr.bf16.mxu0 %v858
    %927 = vmatpush1.bf16.msra.mxu0 %v857
    %928 = vmatprep.subr.bf16.mxu0 %v862
    %929 = vmatpush1.bf16.msra.mxu0 %v861
    %930 = vmatprep.subr.bf16.mxu0 %v866
    %931 = vmatpush1.bf16.msra.mxu0 %v865
    %932 = vmatprep.subr.bf16.mxu0 %v870
    %933 = vmatpush1.bf16.msra.mxu0 %v869
    %934 = vmatprep.subr.bf16.mxu0 %v874
    %935 = vmatpush1.bf16.msra.mxu0 %v873
    %936 = vmatprep.subr.bf16.mxu0 %v878
    %937 = vmatpush1.bf16.msra.mxu0 %v877
    %938 = vmatprep.subr.bf16.mxu0 0
    %939 = vmatpush1.bf16.msra.mxu0 0
    %940 = vmatprep.subr.bf16.mxu0 0
    %941 = vmatpush1.bf16.msra.mxu0 0
    %942 = vmatprep.subr.bf16.mxu0 0
    %943 = vmatpush1.bf16.msra.mxu0 0
    %944 = vmatprep.subr.bf16.mxu0 0
    %945 = vmatpush1.bf16.msra.mxu0 0
    %946 = vmatprep.subr.bf16.mxu0 0
    %947 = vmatpush1.bf16.msra.mxu0 0
    %948 = vmatprep.subr.bf16.mxu0 0
    %949 = vmatpush1.bf16.msra.mxu0 0
    %950 = vmatprep.subr.bf16.mxu0 0
    %951 = vmatpush1.bf16.msra.mxu0 0
    %952 = vmatprep.subr.bf16.mxu0 0
    %953 = vmatpush1.bf16.msra.mxu0 0
    %954 = vmatprep.mubr.bf16.mxu0 0
    %955 = vmatmul.mubr.bf16.gmra.mrb[0].mxu0 0
    %v956 = vpop.f32.mrb[0].mxu0
    %v957 = vadd.f32 0.0, %v956
    %v958 = vpop.f32.mrb[0].mxu0
    %v959 = vadd.f32 0.0, %v958
    %v960 = vpop.f32.mrb[0].mxu0
    %v961 = vadd.f32 0.0, %v960
    %v962 = vpop.f32.mrb[0].mxu0
    %v963 = vadd.f32 0.0, %v962
    %964 = vdwg.mxu0
    %v965 = vadd.f32 %v839, %v914
    %v966 = vadd.f32 %v840, %v916
    %v967 = vadd.f32 %v841, %v957
    %v968 = vadd.f32 %v842, %v959
    %v969 = vadd.f32 %v843, %v918
    %v970 = vadd.f32 %v844, %v920
    %v971 = vadd.f32 %v845, %v961
    %v972 = vadd.f32 %v846, %v963
    %v973 = vxor.u32 %v965, 2147483648
    %v974 = vxor.u32 %v969, 2147483648
    %v975 = vmul.f32 %v973, 1.442695
    %v976 = vpow.pop %v975
    %v977 = vmul.f32 %v974, 1.442695
    %v978 = vpow.pop %v977
    %v979 = vadd.f32 %v976, 1.0
    %v980 = vadd.f32 %v978, 1.0
    %v981 = vrcp.pop %v979
    %v982 = vmul.f32 1.0, %v981
    %v983 = vrcp.pop %v980
    %v984 = vmul.f32 1.0, %v983
    %v985 = vxor.u32 %v966, 2147483648
    %v986 = vxor.u32 %v970, 2147483648
    %v987 = vmul.f32 %v985, 1.442695
    %v988 = vpow.pop %v987
    %v989 = vmul.f32 %v986, 1.442695
    %v990 = vpow.pop %v989
    %v991 = vadd.f32 %v988, 1.0
    %v992 = vadd.f32 %v990, 1.0
    %v993 = vrcp.pop %v991
    %v994 = vmul.f32 1.0, %v993
    %v995 = vrcp.pop %v992
    %v996 = vmul.f32 1.0, %v995
    %v997 = vtanh.pop %v967
    %v998 = vtanh.pop %v971
    %v999 = vxor.u32 %v968, 2147483648
    %v1000 = vxor.u32 %v972, 2147483648
    %v1001 = vmul.f32 %v999, 1.442695
    %v1002 = vpow.pop %v1001
    %v1003 = vmul.f32 %v1000, 1.442695
    %v1004 = vpow.pop %v1003
    %v1005 = vadd.f32 %v1002, 1.0
    %v1006 = vadd.f32 %v1004, 1.0
    %v1007 = vrcp.pop %v1005
    %v1008 = vmul.f32 1.0, %v1007
    %v1009 = vrcp.pop %v1006
    %v1010 = vmul.f32 1.0, %v1009
    %v1011 = vmul.f32 %v994, 0.0
    %v1012 = vmul.f32 %v996, 0.0
    %v1013 = vmul.f32 %v982, %v997
    %v1014 = vmul.f32 %v984, %v998
    %v1015 = vadd.f32 %v1011, %v1013
    %v1016 = vadd.f32 %v1012, %v1014
    %v1017 = vtanh.pop %v1015
    %v1018 = vtanh.pop %v1016
    %v1019 = vmul.f32 %v1008, %v1017
    %v1020 = vmul.f32 %v1010, %v1018
    %v1021 = vpack.c.bf16 %v1020, %v1019
    %s1022 = sadd.s32 0, 0
    %s1023 = sshra.s32 %s1022, 4
    %s1024 = sand.u32 %s1022, 15
    %s1025 = smul.addr %s1023, 8
    %s1026 = scalar_lea.vmem [#allocation5], %s1025
    %1027 = vst [vmem:[%s1026] sm:$0xff] %v1021
    %s1028 = smul.u32 2, 4
    %s1029 = smul.addr %s1028, 8
    %s1030 = scalar_lea.vmem [#allocation4], %s1029
    %v1031 = vld [vmem:[%s1030] sm:$0xff]
    %v1032 = vld [vmem:[%s1030 + $0x8] sm:$0xff]
    %v1033 = vld [vmem:[%s1030 + $0x10] sm:$0xff]
    %v1034 = vld [vmem:[%s1030 + $0x18] sm:$0xff]
    %v1035 = vld [vmem:[%s1030 + $0x20] sm:$0xff]
    %v1036 = vld [vmem:[%s1030 + $0x28] sm:$0xff]
    %v1037 = vld [vmem:[%s1030 + $0x30] sm:$0xff]
    %v1038 = vld [vmem:[%s1030 + $0x38] sm:$0xff]
    %v1039 = vld [vmem:[#allocation3] sm:$0xff]
    %v1040 = vld [vmem:[#allocation3 + $0x8] sm:$0xff]
    %v1041 = vld [vmem:[#allocation3 + $0x10] sm:$0xff]
    %v1042 = vld [vmem:[#allocation3 + $0x18] sm:$0xff]
    %v1043 = vld [vmem:[#allocation3 + $0x20] sm:$0xff]
    %v1044 = vld [vmem:[#allocation3 + $0x28] sm:$0xff]
    %v1045 = vld [vmem:[#allocation3 + $0x30] sm:$0xff]
    %v1046 = vld [vmem:[#allocation3 + $0x38] sm:$0xff]
    %v1047 = vld [vmem:[#allocation3 + $0x40] sm:$0xff]
    %v1048 = vld [vmem:[#allocation3 + $0x48] sm:$0xff]
    %v1049 = vld [vmem:[#allocation3 + $0x50] sm:$0xff]
    %v1050 = vld [vmem:[#allocation3 + $0x58] sm:$0xff]
    %v1051 = vld [vmem:[#allocation3 + $0x60] sm:$0xff]
    %v1052 = vld [vmem:[#allocation3 + $0x68] sm:$0xff]
    %v1053 = vld [vmem:[#allocation3 + $0x70] sm:$0xff]
    %v1054 = vld [vmem:[#allocation3 + $0x78] sm:$0xff]
    %v1055 = vld [vmem:[#allocation3 + $0x80] sm:$0xff]
    %v1056 = vld [vmem:[#allocation3 + $0x88] sm:$0xff]
    %v1057 = vld [vmem:[#allocation3 + $0x90] sm:$0xff]
    %v1058 = vld [vmem:[#allocation3 + $0x98] sm:$0xff]
    %v1059 = vld [vmem:[#allocation3 + $0xa0] sm:$0xff]
    %v1060 = vld [vmem:[#allocation3 + $0xa8] sm:$0xff]
    %v1061 = vld [vmem:[#allocation3 + $0xb0] sm:$0xff]
    %v1062 = vld [vmem:[#allocation3 + $0xb8] sm:$0xff]
    %v1063 = vld [vmem:[#allocation3 + $0xc0] sm:$0xff]
    %v1064 = vld [vmem:[#allocation3 + $0xc8] sm:$0xff]
    %v1065 = vld [vmem:[#allocation3 + $0xd0] sm:$0xff]
    %v1066 = vld [vmem:[#allocation3 + $0xd8] sm:$0xff]
    %v1067 = vld [vmem:[#allocation3 + $0xe0] sm:$0xff]
    %v1068 = vld [vmem:[#allocation3 + $0xe8] sm:$0xff]
    %v1069 = vld [vmem:[#allocation3 + $0xf0] sm:$0xff]
    %v1070 = vld [vmem:[#allocation3 + $0xf8] sm:$0xff]
    %1071 = vmatprep.subr.bf16.mxu0 %v1040
    %1072 = vmatpush1.bf16.msra.mxu0 %v1039
    %1073 = vmatprep.subr.bf16.mxu0 %v1044
    %1074 = vmatpush1.bf16.msra.mxu0 %v1043
    %1075 = vmatprep.subr.bf16.mxu0 %v1048
    %1076 = vmatpush1.bf16.msra.mxu0 %v1047
    %1077 = vmatprep.subr.bf16.mxu0 %v1052
    %1078 = vmatpush1.bf16.msra.mxu0 %v1051
    %1079 = vmatprep.subr.bf16.mxu0 %v1056
    %1080 = vmatpush1.bf16.msra.mxu0 %v1055
    %1081 = vmatprep.subr.bf16.mxu0 %v1060
    %1082 = vmatpush1.bf16.msra.mxu0 %v1059
    %1083 = vmatprep.subr.bf16.mxu0 %v1064
    %1084 = vmatpush1.bf16.msra.mxu0 %v1063
    %1085 = vmatprep.subr.bf16.mxu0 %v1068
    %1086 = vmatpush1.bf16.msra.mxu0 %v1067
    %1087 = vmatprep.subr.bf16.mxu0 0
    %1088 = vmatpush1.bf16.msra.mxu0 0
    %1089 = vmatprep.subr.bf16.mxu0 0
    %1090 = vmatpush1.bf16.msra.mxu0 0
    %1091 = vmatprep.subr.bf16.mxu0 0
    %1092 = vmatpush1.bf16.msra.mxu0 0
    %1093 = vmatprep.subr.bf16.mxu0 0
    %1094 = vmatpush1.bf16.msra.mxu0 0
    %1095 = vmatprep.subr.bf16.mxu0 0
    %1096 = vmatpush1.bf16.msra.mxu0 0
    %1097 = vmatprep.subr.bf16.mxu0 0
    %1098 = vmatpush1.bf16.msra.mxu0 0
    %1099 = vmatprep.subr.bf16.mxu0 0
    %1100 = vmatpush1.bf16.msra.mxu0 0
    %1101 = vmatprep.subr.bf16.mxu0 0
    %1102 = vmatpush1.bf16.msra.mxu0 0
    %1103 = vmatprep.mubr.bf16.mxu0 0
    %1104 = vmatmul.mubr.bf16.gmra.mrb[0].mxu0 %v1021
    %v1105 = vpop.f32.mrb[0].mxu0
    %v1106 = vadd.f32 0.0, %v1105
    %v1107 = vpop.f32.mrb[0].mxu0
    %v1108 = vadd.f32 0.0, %v1107
    %v1109 = vpop.f32.mrb[0].mxu0
    %v1110 = vadd.f32 0.0, %v1109
    %v1111 = vpop.f32.mrb[0].mxu0
    %v1112 = vadd.f32 0.0, %v1111
    %1113 = vdwg.mxu0
    %1114 = vmatprep.subr.bf16.mxu0 %v1042
    %1115 = vmatpush1.bf16.msra.mxu0 %v1041
    %1116 = vmatprep.subr.bf16.mxu0 %v1046
    %1117 = vmatpush1.bf16.msra.mxu0 %v1045
    %1118 = vmatprep.subr.bf16.mxu0 %v1050
    %1119 = vmatpush1.bf16.msra.mxu0 %v1049
    %1120 = vmatprep.subr.bf16.mxu0 %v1054
    %1121 = vmatpush1.bf16.msra.mxu0 %v1053
    %1122 = vmatprep.subr.bf16.mxu0 %v1058
    %1123 = vmatpush1.bf16.msra.mxu0 %v1057
    %1124 = vmatprep.subr.bf16.mxu0 %v1062
    %1125 = vmatpush1.bf16.msra.mxu0 %v1061
    %1126 = vmatprep.subr.bf16.mxu0 %v1066
    %1127 = vmatpush1.bf16.msra.mxu0 %v1065
    %1128 = vmatprep.subr.bf16.mxu0 %v1070
    %1129 = vmatpush1.bf16.msra.mxu0 %v1069
    %1130 = vmatprep.subr.bf16.mxu0 0
    %1131 = vmatpush1.bf16.msra.mxu0 0
    %1132 = vmatprep.subr.bf16.mxu0 0
    %1133 = vmatpush1.bf16.msra.mxu0 0
    %1134 = vmatprep.subr.bf16.mxu0 0
    %1135 = vmatpush1.bf16.msra.mxu0 0
    %1136 = vmatprep.subr.bf16.mxu0 0
    %1137 = vmatpush1.bf16.msra.mxu0 0
    %1138 = vmatprep.subr.bf16.mxu0 0
    %1139 = vmatpush1.bf16.msra.mxu0 0
    %1140 = vmatprep.subr.bf16.mxu0 0
    %1141 = vmatpush1.bf16.msra.mxu0 0
    %1142 = vmatprep.subr.bf16.mxu0 0
    %1143 = vmatpush1.bf16.msra.mxu0 0
    %1144 = vmatprep.subr.bf16.mxu0 0
    %1145 = vmatpush1.bf16.msra.mxu0 0
    %1146 = vmatprep.mubr.bf16.mxu0 0
    %1147 = vmatmul.mubr.bf16.gmra.mrb[0].mxu0 %v1021
    %v1148 = vpop.f32.mrb[0].mxu0
    %v1149 = vadd.f32 0.0, %v1148
    %v1150 = vpop.f32.mrb[0].mxu0
    %v1151 = vadd.f32 0.0, %v1150
    %v1152 = vpop.f32.mrb[0].mxu0
    %v1153 = vadd.f32 0.0, %v1152
    %v1154 = vpop.f32.mrb[0].mxu0
    %v1155 = vadd.f32 0.0, %v1154
    %1156 = vdwg.mxu0
    %v1157 = vadd.f32 %v1031, %v1106
    %v1158 = vadd.f32 %v1032, %v1108
    %v1159 = vadd.f32 %v1033, %v1149
    %v1160 = vadd.f32 %v1034, %v1151
    %v1161 = vadd.f32 %v1035, %v1110
    %v1162 = vadd.f32 %v1036, %v1112
    %v1163 = vadd.f32 %v1037, %v1153
    %v1164 = vadd.f32 %v1038, %v1155
    %v1165 = vxor.u32 %v1157, 2147483648
    %v1166 = vxor.u32 %v1161, 2147483648
    %v1167 = vmul.f32 %v1165, 1.442695
    %v1168 = vpow.pop %v1167
    %v1169 = vmul.f32 %v1166, 1.442695
    %v1170 = vpow.pop %v1169
    %v1171 = vadd.f32 %v1168, 1.0
    %v1172 = vadd.f32 %v1170, 1.0
    %v1173 = vrcp.pop %v1171
    %v1174 = vmul.f32 1.0, %v1173
    %v1175 = vrcp.pop %v1172
    %v1176 = vmul.f32 1.0, %v1175
    %v1177 = vxor.u32 %v1158, 2147483648
    %v1178 = vxor.u32 %v1162, 2147483648
    %v1179 = vmul.f32 %v1177, 1.442695
    %v1180 = vpow.pop %v1179
    %v1181 = vmul.f32 %v1178, 1.442695
    %v1182 = vpow.pop %v1181
    %v1183 = vadd.f32 %v1180, 1.0
    %v1184 = vadd.f32 %v1182, 1.0
    %v1185 = vrcp.pop %v1183
    %v1186 = vmul.f32 1.0, %v1185
    %v1187 = vrcp.pop %v1184
    %v1188 = vmul.f32 1.0, %v1187
    %v1189 = vtanh.pop %v1159
    %v1190 = vtanh.pop %v1163
    %v1191 = vxor.u32 %v1160, 2147483648
    %v1192 = vxor.u32 %v1164, 2147483648
    %v1193 = vmul.f32 %v1191, 1.442695
    %v1194 = vpow.pop %v1193
    %v1195 = vmul.f32 %v1192, 1.442695
    %v1196 = vpow.pop %v1195
    %v1197 = vadd.f32 %v1194, 1.0
    %v1198 = vadd.f32 %v1196, 1.0
    %v1199 = vrcp.pop %v1197
    %v1200 = vmul.f32 1.0, %v1199
    %v1201 = vrcp.pop %v1198
    %v1202 = vmul.f32 1.0, %v1201
    %v1203 = vmul.f32 %v1186, %v1015
    %v1204 = vmul.f32 %v1188, %v1016
    %v1205 = vmul.f32 %v1174, %v1189
    %v1206 = vmul.f32 %v1176, %v1190
    %v1207 = vadd.f32 %v1203, %v1205
    %v1208 = vadd.f32 %v1204, %v1206
    %v1209 = vtanh.pop %v1207
    %v1210 = vtanh.pop %v1208
    %v1211 = vmul.f32 %v1200, %v1209
    %v1212 = vmul.f32 %v1202, %v1210
    %v1213 = vpack.c.bf16 %v1212, %v1211
    %s1214 = sadd.s32 0, 16
    %s1215 = sshra.s32 %s1214, 4
    %s1216 = sand.u32 %s1214, 15
    %s1217 = smul.addr %s1215, 8
    %s1218 = scalar_lea.vmem [#allocation5], %s1217
    %1219 = vst [vmem:[%s1218] sm:$0xff] %v1213
    %s1220 = smul.u32 4, 4
    %s1221 = smul.addr %s1220, 8
    %s1222 = scalar_lea.vmem [#allocation4], %s1221
    %v1223 = vld [vmem:[%s1222] sm:$0xff]
    %v1224 = vld [vmem:[%s1222 + $0x8] sm:$0xff]
    %v1225 = vld [vmem:[%s1222 + $0x10] sm:$0xff]
    %v1226 = vld [vmem:[%s1222 + $0x18] sm:$0xff]
    %v1227 = vld [vmem:[%s1222 + $0x20] sm:$0xff]
    %v1228 = vld [vmem:[%s1222 + $0x28] sm:$0xff]
    %v1229 = vld [vmem:[%s1222 + $0x30] sm:$0xff]
    %v1230 = vld [vmem:[%s1222 + $0x38] sm:$0xff]
    %v1231 = vld [vmem:[#allocation3] sm:$0xff]
    %v1232 = vld [vmem:[#allocation3 + $0x8] sm:$0xff]
    %v1233 = vld [vmem:[#allocation3 + $0x10] sm:$0xff]
    %v1234 = vld [vmem:[#allocation3 + $0x18] sm:$0xff]
    %v1235 = vld [vmem:[#allocation3 + $0x20] sm:$0xff]
    %v1236 = vld [vmem:[#allocation3 + $0x28] sm:$0xff]
    %v1237 = vld [vmem:[#allocation3 + $0x30] sm:$0xff]
    %v1238 = vld [vmem:[#allocation3 + $0x38] sm:$0xff]
    %v1239 = vld [vmem:[#allocation3 + $0x40] sm:$0xff]
    %v1240 = vld [vmem:[#allocation3 + $0x48] sm:$0xff]
    %v1241 = vld [vmem:[#allocation3 + $0x50] sm:$0xff]
    %v1242 = vld [vmem:[#allocation3 + $0x58] sm:$0xff]
    %v1243 = vld [vmem:[#allocation3 + $0x60] sm:$0xff]
    %v1244 = vld [vmem:[#allocation3 + $0x68] sm:$0xff]
    %v1245 = vld [vmem:[#allocation3 + $0x70] sm:$0xff]
    %v1246 = vld [vmem:[#allocation3 + $0x78] sm:$0xff]
    %v1247 = vld [vmem:[#allocation3 + $0x80] sm:$0xff]
    %v1248 = vld [vmem:[#allocation3 + $0x88] sm:$0xff]
    %v1249 = vld [vmem:[#allocation3 + $0x90] sm:$0xff]
    %v1250 = vld [vmem:[#allocation3 + $0x98] sm:$0xff]
    %v1251 = vld [vmem:[#allocation3 + $0xa0] sm:$0xff]
    %v1252 = vld [vmem:[#allocation3 + $0xa8] sm:$0xff]
    %v1253 = vld [vmem:[#allocation3 + $0xb0] sm:$0xff]
    %v1254 = vld [vmem:[#allocation3 + $0xb8] sm:$0xff]
    %v1255 = vld [vmem:[#allocation3 + $0xc0] sm:$0xff]
    %v1256 = vld [vmem:[#allocation3 + $0xc8] sm:$0xff]
    %v1257 = vld [vmem:[#allocation3 + $0xd0] sm:$0xff]
    %v1258 = vld [vmem:[#allocation3 + $0xd8] sm:$0xff]
    %v1259 = vld [vmem:[#allocation3 + $0xe0] sm:$0xff]
    %v1260 = vld [vmem:[#allocation3 + $0xe8] sm:$0xff]
    %v1261 = vld [vmem:[#allocation3 + $0xf0] sm:$0xff]
    %v1262 = vld [vmem:[#allocation3 + $0xf8] sm:$0xff]
    %1263 = vmatprep.subr.bf16.mxu0 %v1232
    %1264 = vmatpush1.bf16.msra.mxu0 %v1231
    %1265 = vmatprep.subr.bf16.mxu0 %v1236
    %1266 = vmatpush1.bf16.msra.mxu0 %v1235
    %1267 = vmatprep.subr.bf16.mxu0 %v1240
    %1268 = vmatpush1.bf16.msra.mxu0 %v1239
    %1269 = vmatprep.subr.bf16.mxu0 %v1244
    %1270 = vmatpush1.bf16.msra.mxu0 %v1243
    %1271 = vmatprep.subr.bf16.mxu0 %v1248
    %1272 = vmatpush1.bf16.msra.mxu0 %v1247
    %1273 = vmatprep.subr.bf16.mxu0 %v1252
    %1274 = vmatpush1.bf16.msra.mxu0 %v1251
    %1275 = vmatprep.subr.bf16.mxu0 %v1256
    %1276 = vmatpush1.bf16.msra.mxu0 %v1255
    %1277 = vmatprep.subr.bf16.mxu0 %v1260
    %1278 = vmatpush1.bf16.msra.mxu0 %v1259
    %1279 = vmatprep.subr.bf16.mxu0 0
    %1280 = vmatpush1.bf16.msra.mxu0 0
    %1281 = vmatprep.subr.bf16.mxu0 0
    %1282 = vmatpush1.bf16.msra.mxu0 0
    %1283 = vmatprep.subr.bf16.mxu0 0
    %1284 = vmatpush1.bf16.msra.mxu0 0
    %1285 = vmatprep.subr.bf16.mxu0 0
    %1286 = vmatpush1.bf16.msra.mxu0 0
    %1287 = vmatprep.subr.bf16.mxu0 0
    %1288 = vmatpush1.bf16.msra.mxu0 0
    %1289 = vmatprep.subr.bf16.mxu0 0
    %1290 = vmatpush1.bf16.msra.mxu0 0
    %1291 = vmatprep.subr.bf16.mxu0 0
    %1292 = vmatpush1.bf16.msra.mxu0 0
    %1293 = vmatprep.subr.bf16.mxu0 0
    %1294 = vmatpush1.bf16.msra.mxu0 0
    %1295 = vmatprep.mubr.bf16.mxu0 0
    %1296 = vmatmul.mubr.bf16.gmra.mrb[0].mxu0 %v1213
    %v1297 = vpop.f32.mrb[0].mxu0
    %v1298 = vadd.f32 0.0, %v1297
    %v1299 = vpop.f32.mrb[0].mxu0
    %v1300 = vadd.f32 0.0, %v1299
    %v1301 = vpop.f32.mrb[0].mxu0
    %v1302 = vadd.f32 0.0, %v1301
    %v1303 = vpop.f32.mrb[0].mxu0
    %v1304 = vadd.f32 0.0, %v1303
    %1305 = vdwg.mxu0
    %1306 = vmatprep.subr.bf16.mxu0 %v1234
    %1307 = vmatpush1.bf16.msra.mxu0 %v1233
    %1308 = vmatprep.subr.bf16.mxu0 %v1238
    %1309 = vmatpush1.bf16.msra.mxu0 %v1237
    %1310 = vmatprep.subr.bf16.mxu0 %v1242
    %1311 = vmatpush1.bf16.msra.mxu0 %v1241
    %1312 = vmatprep.subr.bf16.mxu0 %v1246
    %1313 = vmatpush1.bf16.msra.mxu0 %v1245
    %1314 = vmatprep.subr.bf16.mxu0 %v1250
    %1315 = vmatpush1.bf16.msra.mxu0 %v1249
    %1316 = vmatprep.subr.bf16.mxu0 %v1254
    %1317 = vmatpush1.bf16.msra.mxu0 %v1253
    %1318 = vmatprep.subr.bf16.mxu0 %v1258
    %1319 = vmatpush1.bf16.msra.mxu0 %v1257
    %1320 = vmatprep.subr.bf16.mxu0 %v1262
    %1321 = vmatpush1.bf16.msra.mxu0 %v1261
    %1322 = vmatprep.subr.bf16.mxu0 0
    %1323 = vmatpush1.bf16.msra.mxu0 0
    %1324 = vmatprep.subr.bf16.mxu0 0
    %1325 = vmatpush1.bf16.msra.mxu0 0
    %1326 = vmatprep.subr.bf16.mxu0 0
    %1327 = vmatpush1.bf16.msra.mxu0 0
    %1328 = vmatprep.subr.bf16.mxu0 0
    %1329 = vmatpush1.bf16.msra.mxu0 0
    %1330 = vmatprep.subr.bf16.mxu0 0
    %1331 = vmatpush1.bf16.msra.mxu0 0
    %1332 = vmatprep.subr.bf16.mxu0 0
    %1333 = vmatpush1.bf16.msra.mxu0 0
    %1334 = vmatprep.subr.bf16.mxu0 0
    %1335 = vmatpush1.bf16.msra.mxu0 0
    %1336 = vmatprep.subr.bf16.mxu0 0
    %1337 = vmatpush1.bf16.msra.mxu0 0
    %1338 = vmatprep.mubr.bf16.mxu0 0
    %1339 = vmatmul.mubr.bf16.gmra.mrb[0].mxu0 %v1213
    %v1340 = vpop.f32.mrb[0].mxu0
    %v1341 = vadd.f32 0.0, %v1340
    %v1342 = vpop.f32.mrb[0].mxu0
    %v1343 = vadd.f32 0.0, %v1342
    %v1344 = vpop.f32.mrb[0].mxu0
    %v1345 = vadd.f32 0.0, %v1344
    %v1346 = vpop.f32.mrb[0].mxu0
    %v1347 = vadd.f32 0.0, %v1346
    %1348 = vdwg.mxu0
    %v1349 = vadd.f32 %v1223, %v1298
    %v1350 = vadd.f32 %v1224, %v1300
    %v1351 = vadd.f32 %v1225, %v1341
    %v1352 = vadd.f32 %v1226, %v1343
    %v1353 = vadd.f32 %v1227, %v1302
    %v1354 = vadd.f32 %v1228, %v1304
    %v1355 = vadd.f32 %v1229, %v1345
    %v1356 = vadd.f32 %v1230, %v1347
    %v1357 = vxor.u32 %v1349, 2147483648
    %v1358 = vxor.u32 %v1353, 2147483648
    %v1359 = vmul.f32 %v1357, 1.442695
    %v1360 = vpow.pop %v1359
    %v1361 = vmul.f32 %v1358, 1.442695
    %v1362 = vpow.pop %v1361
    %v1363 = vadd.f32 %v1360, 1.0
    %v1364 = vadd.f32 %v1362, 1.0
    %v1365 = vrcp.pop %v1363
    %v1366 = vmul.f32 1.0, %v1365
    %v1367 = vrcp.pop %v1364
    %v1368 = vmul.f32 1.0, %v1367
    %v1369 = vxor.u32 %v1350, 2147483648
    %v1370 = vxor.u32 %v1354, 2147483648
    %v1371 = vmul.f32 %v1369, 1.442695
    %v1372 = vpow.pop %v1371
    %v1373 = vmul.f32 %v1370, 1.442695
    %v1374 = vpow.pop %v1373
    %v1375 = vadd.f32 %v1372, 1.0
    %v1376 = vadd.f32 %v1374, 1.0
    %v1377 = vrcp.pop %v1375
    %v1378 = vmul.f32 1.0, %v1377
    %v1379 = vrcp.pop %v1376
    %v1380 = vmul.f32 1.0, %v1379
    %v1381 = vtanh.pop %v1351
    %v1382 = vtanh.pop %v1355
    %v1383 = vxor.u32 %v1352, 2147483648
    %v1384 = vxor.u32 %v1356, 2147483648
    %v1385 = vmul.f32 %v1383, 1.442695
    %v1386 = vpow.pop %v1385
    %v1387 = vmul.f32 %v1384, 1.442695
    %v1388 = vpow.pop %v1387
    %v1389 = vadd.f32 %v1386, 1.0
    %v1390 = vadd.f32 %v1388, 1.0
    %v1391 = vrcp.pop %v1389
    %v1392 = vmul.f32 1.0, %v1391
    %v1393 = vrcp.pop %v1390
    %v1394 = vmul.f32 1.0, %v1393
    %v1395 = vmul.f32 %v1378, %v1207
    %v1396 = vmul.f32 %v1380, %v1208
    %v1397 = vmul.f32 %v1366, %v1381
    %v1398 = vmul.f32 %v1368, %v1382
    %v1399 = vadd.f32 %v1395, %v1397
    %v1400 = vadd.f32 %v1396, %v1398
    %v1401 = vtanh.pop %v1399
    %v1402 = vtanh.pop %v1400
    %v1403 = vmul.f32 %v1392, %v1401
    %v1404 = vmul.f32 %v1394, %v1402
    %v1405 = vpack.c.bf16 %v1404, %v1403
    %s1406 = sadd.s32 0, 32
    %s1407 = sshra.s32 %s1406, 4
    %s1408 = sand.u32 %s1406, 15
    %s1409 = smul.addr %s1407, 8
    %s1410 = scalar_lea.vmem [#allocation5], %s1409
    %1411 = vst [vmem:[%s1410] sm:$0xff] %v1405
    %s1412 = smul.u32 6, 4
    %s1413 = smul.addr %s1412, 8
    %s1414 = scalar_lea.vmem [#allocation4], %s1413
    %v1415 = vld [vmem:[%s1414] sm:$0xff]
    %v1416 = vld [vmem:[%s1414 + $0x8] sm:$0xff]
    %v1417 = vld [vmem:[%s1414 + $0x10] sm:$0xff]
    %v1418 = vld [vmem:[%s1414 + $0x18] sm:$0xff]
    %v1419 = vld [vmem:[%s1414 + $0x20] sm:$0xff]
    %v1420 = vld [vmem:[%s1414 + $0x28] sm:$0xff]
    %v1421 = vld [vmem:[%s1414 + $0x30] sm:$0xff]
    %v1422 = vld [vmem:[%s1414 + $0x38] sm:$0xff]
    %v1423 = vld [vmem:[#allocation3] sm:$0xff]
    %v1424 = vld [vmem:[#allocation3 + $0x8] sm:$0xff]
    %v1425 = vld [vmem:[#allocation3 + $0x10] sm:$0xff]
    %v1426 = vld [vmem:[#allocation3 + $0x18] sm:$0xff]
    %v1427 = vld [vmem:[#allocation3 + $0x20] sm:$0xff]
    %v1428 = vld [vmem:[#allocation3 + $0x28] sm:$0xff]
    %v1429 = vld [vmem:[#allocation3 + $0x30] sm:$0xff]
    %v1430 = vld [vmem:[#allocation3 + $0x38] sm:$0xff]
    %v1431 = vld [vmem:[#allocation3 + $0x40] sm:$0xff]
    %v1432 = vld [vmem:[#allocation3 + $0x48] sm:$0xff]
    %v1433 = vld [vmem:[#allocation3 + $0x50] sm:$0xff]
    %v1434 = vld [vmem:[#allocation3 + $0x58] sm:$0xff]
    %v1435 = vld [vmem:[#allocation3 + $0x60] sm:$0xff]
    %v1436 = vld [vmem:[#allocation3 + $0x68] sm:$0xff]
    %v1437 = vld [vmem:[#allocation3 + $0x70] sm:$0xff]
    %v1438 = vld [vmem:[#allocation3 + $0x78] sm:$0xff]
    %v1439 = vld [vmem:[#allocation3 + $0x80] sm:$0xff]
    %v1440 = vld [vmem:[#allocation3 + $0x88] sm:$0xff]
    %v1441 = vld [vmem:[#allocation3 + $0x90] sm:$0xff]
    %v1442 = vld [vmem:[#allocation3 + $0x98] sm:$0xff]
    %v1443 = vld [vmem:[#allocation3 + $0xa0] sm:$0xff]
    %v1444 = vld [vmem:[#allocation3 + $0xa8] sm:$0xff]
    %v1445 = vld [vmem:[#allocation3 + $0xb0] sm:$0xff]
    %v1446 = vld [vmem:[#allocation3 + $0xb8] sm:$0xff]
    %v1447 = vld [vmem:[#allocation3 + $0xc0] sm:$0xff]
    %v1448 = vld [vmem:[#allocation3 + $0xc8] sm:$0xff]
    %v1449 = vld [vmem:[#allocation3 + $0xd0] sm:$0xff]
    %v1450 = vld [vmem:[#allocation3 + $0xd8] sm:$0xff]
    %v1451 = vld [vmem:[#allocation3 + $0xe0] sm:$0xff]
    %v1452 = vld [vmem:[#allocation3 + $0xe8] sm:$0xff]
    %v1453 = vld [vmem:[#allocation3 + $0xf0] sm:$0xff]
    %v1454 = vld [vmem:[#allocation3 + $0xf8] sm:$0xff]
    %1455 = vmatprep.subr.bf16.mxu0 %v1424
    %1456 = vmatpush1.bf16.msra.mxu0 %v1423
    %1457 = vmatprep.subr.bf16.mxu0 %v1428
    %1458 = vmatpush1.bf16.msra.mxu0 %v1427
    %1459 = vmatprep.subr.bf16.mxu0 %v1432
    %1460 = vmatpush1.bf16.msra.mxu0 %v1431
    %1461 = vmatprep.subr.bf16.mxu0 %v1436
    %1462 = vmatpush1.bf16.msra.mxu0 %v1435
    %1463 = vmatprep.subr.bf16.mxu0 %v1440
    %1464 = vmatpush1.bf16.msra.mxu0 %v1439
    %1465 = vmatprep.subr.bf16.mxu0 %v1444
    %1466 = vmatpush1.bf16.msra.mxu0 %v1443
    %1467 = vmatprep.subr.bf16.mxu0 %v1448
    %1468 = vmatpush1.bf16.msra.mxu0 %v1447
    %1469 = vmatprep.subr.bf16.mxu0 %v1452
    %1470 = vmatpush1.bf16.msra.mxu0 %v1451
    %1471 = vmatprep.subr.bf16.mxu0 0
    %1472 = vmatpush1.bf16.msra.mxu0 0
    %1473 = vmatprep.subr.bf16.mxu0 0
    %1474 = vmatpush1.bf16.msra.mxu0 0
    %1475 = vmatprep.subr.bf16.mxu0 0
    %1476 = vmatpush1.bf16.msra.mxu0 0
    %1477 = vmatprep.subr.bf16.mxu0 0
    %1478 = vmatpush1.bf16.msra.mxu0 0
    %1479 = vmatprep.subr.bf16.mxu0 0
    %1480 = vmatpush1.bf16.msra.mxu0 0
    %1481 = vmatprep.subr.bf16.mxu0 0
    %1482 = vmatpush1.bf16.msra.mxu0 0
    %1483 = vmatprep.subr.bf16.mxu0 0
    %1484 = vmatpush1.bf16.msra.mxu0 0
    %1485 = vmatprep.subr.bf16.mxu0 0
    %1486 = vmatpush1.bf16.msra.mxu0 0
    %1487 = vmatprep.mubr.bf16.mxu0 0
    %1488 = vmatmul.mubr.bf16.gmra.mrb[0].mxu0 %v1405
    %v1489 = vpop.f32.mrb[0].mxu0
    %v1490 = vadd.f32 0.0, %v1489
    %v1491 = vpop.f32.mrb[0].mxu0
    %v1492 = vadd.f32 0.0, %v1491
    %v1493 = vpop.f32.mrb[0].mxu0
    %v1494 = vadd.f32 0.0, %v1493
    %v1495 = vpop.f32.mrb[0].mxu0
    %v1496 = vadd.f32 0.0, %v1495
    %1497 = vdwg.mxu0
    %1498 = vmatprep.subr.bf16.mxu0 %v1426
    %1499 = vmatpush1.bf16.msra.mxu0 %v1425
    %1500 = vmatprep.subr.bf16.mxu0 %v1430
    %1501 = vmatpush1.bf16.msra.mxu0 %v1429
    %1502 = vmatprep.subr.bf16.mxu0 %v1434
    %1503 = vmatpush1.bf16.msra.mxu0 %v1433
    %1504 = vmatprep.subr.bf16.mxu0 %v1438
    %1505 = vmatpush1.bf16.msra.mxu0 %v1437
    %1506 = vmatprep.subr.bf16.mxu0 %v1442
    %1507 = vmatpush1.bf16.msra.mxu0 %v1441
    %1508 = vmatprep.subr.bf16.mxu0 %v1446
    %1509 = vmatpush1.bf16.msra.mxu0 %v1445
    %1510 = vmatprep.subr.bf16.mxu0 %v1450
    %1511 = vmatpush1.bf16.msra.mxu0 %v1449
    %1512 = vmatprep.subr.bf16.mxu0 %v1454
    %1513 = vmatpush1.bf16.msra.mxu0 %v1453
    %1514 = vmatprep.subr.bf16.mxu0 0
    %1515 = vmatpush1.bf16.msra.mxu0 0
    %1516 = vmatprep.subr.bf16.mxu0 0
    %1517 = vmatpush1.bf16.msra.mxu0 0
    %1518 = vmatprep.subr.bf16.mxu0 0
    %1519 = vmatpush1.bf16.msra.mxu0 0
    %1520 = vmatprep.subr.bf16.mxu0 0
    %1521 = vmatpush1.bf16.msra.mxu0 0
    %1522 = vmatprep.subr.bf16.mxu0 0
    %1523 = vmatpush1.bf16.msra.mxu0 0
    %1524 = vmatprep.subr.bf16.mxu0 0
    %1525 = vmatpush1.bf16.msra.mxu0 0
    %1526 = vmatprep.subr.bf16.mxu0 0
    %1527 = vmatpush1.bf16.msra.mxu0 0
    %1528 = vmatprep.subr.bf16.mxu0 0
    %1529 = vmatpush1.bf16.msra.mxu0 0
    %1530 = vmatprep.mubr.bf16.mxu0 0
    %1531 = vmatmul.mubr.bf16.gmra.mrb[0].mxu0 %v1405
    %v1532 = vpop.f32.mrb[0].mxu0
    %v1533 = vadd.f32 0.0, %v1532
    %v1534 = vpop.f32.mrb[0].mxu0
    %v1535 = vadd.f32 0.0, %v1534
    %v1536 = vpop.f32.mrb[0].mxu0
    %v1537 = vadd.f32 0.0, %v1536
    %v1538 = vpop.f32.mrb[0].mxu0
    %v1539 = vadd.f32 0.0, %v1538
    %1540 = vdwg.mxu0
    %v1541 = vadd.f32 %v1415, %v1490
    %v1542 = vadd.f32 %v1416, %v1492
    %v1543 = vadd.f32 %v1417, %v1533
    %v1544 = vadd.f32 %v1418, %v1535
    %v1545 = vadd.f32 %v1419, %v1494
    %v1546 = vadd.f32 %v1420, %v1496
    %v1547 = vadd.f32 %v1421, %v1537
    %v1548 = vadd.f32 %v1422, %v1539
    %v1549 = vxor.u32 %v1541, 2147483648
    %v1550 = vxor.u32 %v1545, 2147483648
    %v1551 = vmul.f32 %v1549, 1.442695
    %v1552 = vpow.pop %v1551
    %v1553 = vmul.f32 %v1550, 1.442695
    %v1554 = vpow.pop %v1553
    %v1555 = vadd.f32 %v1552, 1.0
    %v1556 = vadd.f32 %v1554, 1.0
    %v1557 = vrcp.pop %v1555
    %v1558 = vmul.f32 1.0, %v1557
    %v1559 = vrcp.pop %v1556
    %v1560 = vmul.f32 1.0, %v1559
    %v1561 = vxor.u32 %v1542, 2147483648
    %v1562 = vxor.u32 %v1546, 2147483648
    %v1563 = vmul.f32 %v1561, 1.442695
    %v1564 = vpow.pop %v1563
    %v1565 = vmul.f32 %v1562, 1.442695
    %v1566 = vpow.pop %v1565
    %v1567 = vadd.f32 %v1564, 1.0
    %v1568 = vadd.f32 %v1566, 1.0
    %v1569 = vrcp.pop %v1567
    %v1570 = vmul.f32 1.0, %v1569
    %v1571 = vrcp.pop %v1568
    %v1572 = vmul.f32 1.0, %v1571
    %v1573 = vtanh.pop %v1543
    %v1574 = vtanh.pop %v1547
    %v1575 = vxor.u32 %v1544, 2147483648
    %v1576 = vxor.u32 %v1548, 2147483648
    %v1577 = vmul.f32 %v1575, 1.442695
    %v1578 = vpow.pop %v1577
    %v1579 = vmul.f32 %v1576, 1.442695
    %v1580 = vpow.pop %v1579
    %v1581 = vadd.f32 %v1578, 1.0
    %v1582 = vadd.f32 %v1580, 1.0
    %v1583 = vrcp.pop %v1581
    %v1584 = vmul.f32 1.0, %v1583
    %v1585 = vrcp.pop %v1582
    %v1586 = vmul.f32 1.0, %v1585
    %v1587 = vmul.f32 %v1570, %v1399
    %v1588 = vmul.f32 %v1572, %v1400
    %v1589 = vmul.f32 %v1558, %v1573
    %v1590 = vmul.f32 %v1560, %v1574
    %v1591 = vadd.f32 %v1587, %v1589
    %v1592 = vadd.f32 %v1588, %v1590
    %v1593 = vtanh.pop %v1591
    %v1594 = vtanh.pop %v1592
    %v1595 = vmul.f32 %v1584, %v1593
    %v1596 = vmul.f32 %v1586, %v1594
    %v1597 = vpack.c.bf16 %v1596, %v1595
    %s1598 = sadd.s32 0, 48
    %s1599 = sshra.s32 %s1598, 4
    %s1600 = sand.u32 %s1598, 15
    %s1601 = smul.addr %s1599, 8
    %s1602 = scalar_lea.vmem [#allocation5], %s1601
    %1603 = vst [vmem:[%s1602] sm:$0xff] %v1597
    %s1604 = smul.u32 8, 4
    %s1605 = smul.addr %s1604, 8
    %s1606 = scalar_lea.vmem [#allocation4], %s1605
    %v1607 = vld [vmem:[%s1606] sm:$0xff]
    %v1608 = vld [vmem:[%s1606 + $0x8] sm:$0xff]
    %v1609 = vld [vmem:[%s1606 + $0x10] sm:$0xff]
    %v1610 = vld [vmem:[%s1606 + $0x18] sm:$0xff]
    %v1611 = vld [vmem:[%s1606 + $0x20] sm:$0xff]
    %v1612 = vld [vmem:[%s1606 + $0x28] sm:$0xff]
    %v1613 = vld [vmem:[%s1606 + $0x30] sm:$0xff]
    %v1614 = vld [vmem:[%s1606 + $0x38] sm:$0xff]
    %v1615 = vld [vmem:[#allocation3] sm:$0xff]
    %v1616 = vld [vmem:[#allocation3 + $0x8] sm:$0xff]
    %v1617 = vld [vmem:[#allocation3 + $0x10] sm:$0xff]
    %v1618 = vld [vmem:[#allocation3 + $0x18] sm:$0xff]
    %v1619 = vld [vmem:[#allocation3 + $0x20] sm:$0xff]
    %v1620 = vld [vmem:[#allocation3 + $0x28] sm:$0xff]
    %v1621 = vld [vmem:[#allocation3 + $0x30] sm:$0xff]
    %v1622 = vld [vmem:[#allocation3 + $0x38] sm:$0xff]
    %v1623 = vld [vmem:[#allocation3 + $0x40] sm:$0xff]
    %v1624 = vld [vmem:[#allocation3 + $0x48] sm:$0xff]
    %v1625 = vld [vmem:[#allocation3 + $0x50] sm:$0xff]
    %v1626 = vld [vmem:[#allocation3 + $0x58] sm:$0xff]
    %v1627 = vld [vmem:[#allocation3 + $0x60] sm:$0xff]
    %v1628 = vld [vmem:[#allocation3 + $0x68] sm:$0xff]
    %v1629 = vld [vmem:[#allocation3 + $0x70] sm:$0xff]
    %v1630 = vld [vmem:[#allocation3 + $0x78] sm:$0xff]
    %v1631 = vld [vmem:[#allocation3 + $0x80] sm:$0xff]
    %v1632 = vld [vmem:[#allocation3 + $0x88] sm:$0xff]
    %v1633 = vld [vmem:[#allocation3 + $0x90] sm:$0xff]
    %v1634 = vld [vmem:[#allocation3 + $0x98] sm:$0xff]
    %v1635 = vld [vmem:[#allocation3 + $0xa0] sm:$0xff]
    %v1636 = vld [vmem:[#allocation3 + $0xa8] sm:$0xff]
    %v1637 = vld [vmem:[#allocation3 + $0xb0] sm:$0xff]
    %v1638 = vld [vmem:[#allocation3 + $0xb8] sm:$0xff]
    %v1639 = vld [vmem:[#allocation3 + $0xc0] sm:$0xff]
    %v1640 = vld [vmem:[#allocation3 + $0xc8] sm:$0xff]
    %v1641 = vld [vmem:[#allocation3 + $0xd0] sm:$0xff]
    %v1642 = vld [vmem:[#allocation3 + $0xd8] sm:$0xff]
    %v1643 = vld [vmem:[#allocation3 + $0xe0] sm:$0xff]
    %v1644 = vld [vmem:[#allocation3 + $0xe8] sm:$0xff]
    %v1645 = vld [vmem:[#allocation3 + $0xf0] sm:$0xff]
    %v1646 = vld [vmem:[#allocation3 + $0xf8] sm:$0xff]
    %1647 = vmatprep.subr.bf16.mxu0 %v1616
    %1648 = vmatpush1.bf16.msra.mxu0 %v1615
    %1649 = vmatprep.subr.bf16.mxu0 %v1620
    %1650 = vmatpush1.bf16.msra.mxu0 %v1619
    %1651 = vmatprep.subr.bf16.mxu0 %v1624
    %1652 = vmatpush1.bf16.msra.mxu0 %v1623
    %1653 = vmatprep.subr.bf16.mxu0 %v1628
    %1654 = vmatpush1.bf16.msra.mxu0 %v1627
    %1655 = vmatprep.subr.bf16.mxu0 %v1632
    %1656 = vmatpush1.bf16.msra.mxu0 %v1631
    %1657 = vmatprep.subr.bf16.mxu0 %v1636
    %1658 = vmatpush1.bf16.msra.mxu0 %v1635
    %1659 = vmatprep.subr.bf16.mxu0 %v1640
    %1660 = vmatpush1.bf16.msra.mxu0 %v1639
    %1661 = vmatprep.subr.bf16.mxu0 %v1644
    %1662 = vmatpush1.bf16.msra.mxu0 %v1643
    %1663 = vmatprep.subr.bf16.mxu0 0
    %1664 = vmatpush1.bf16.msra.mxu0 0
    %1665 = vmatprep.subr.bf16.mxu0 0
    %1666 = vmatpush1.bf16.msra.mxu0 0
    %1667 = vmatprep.subr.bf16.mxu0 0
    %1668 = vmatpush1.bf16.msra.mxu0 0
    %1669 = vmatprep.subr.bf16.mxu0 0
    %1670 = vmatpush1.bf16.msra.mxu0 0
    %1671 = vmatprep.subr.bf16.mxu0 0
    %1672 = vmatpush1.bf16.msra.mxu0 0
    %1673 = vmatprep.subr.bf16.mxu0 0
    %1674 = vmatpush1.bf16.msra.mxu0 0
    %1675 = vmatprep.subr.bf16.mxu0 0
    %1676 = vmatpush1.bf16.msra.mxu0 0
    %1677 = vmatprep.subr.bf16.mxu0 0
    %1678 = vmatpush1.bf16.msra.mxu0 0
    %1679 = vmatprep.mubr.bf16.mxu0 0
    %1680 = vmatmul.mubr.bf16.gmra.mrb[0].mxu0 %v1597
    %v1681 = vpop.f32.mrb[0].mxu0
    %v1682 = vadd.f32 0.0, %v1681
    %v1683 = vpop.f32.mrb[0].mxu0
    %v1684 = vadd.f32 0.0, %v1683
    %v1685 = vpop.f32.mrb[0].mxu0
    %v1686 = vadd.f32 0.0, %v1685
    %v1687 = vpop.f32.mrb[0].mxu0
    %v1688 = vadd.f32 0.0, %v1687
    %1689 = vdwg.mxu0
    %1690 = vmatprep.subr.bf16.mxu0 %v1618
    %1691 = vmatpush1.bf16.msra.mxu0 %v1617
    %1692 = vmatprep.subr.bf16.mxu0 %v1622
    %1693 = vmatpush1.bf16.msra.mxu0 %v1621
    %1694 = vmatprep.subr.bf16.mxu0 %v1626
    %1695 = vmatpush1.bf16.msra.mxu0 %v1625
    %1696 = vmatprep.subr.bf16.mxu0 %v1630
    %1697 = vmatpush1.bf16.msra.mxu0 %v1629
    %1698 = vmatprep.subr.bf16.mxu0 %v1634
    %1699 = vmatpush1.bf16.msra.mxu0 %v1633
    %1700 = vmatprep.subr.bf16.mxu0 %v1638
    %1701 = vmatpush1.bf16.msra.mxu0 %v1637
    %1702 = vmatprep.subr.bf16.mxu0 %v1642
    %1703 = vmatpush1.bf16.msra.mxu0 %v1641
    %1704 = vmatprep.subr.bf16.mxu0 %v1646
    %1705 = vmatpush1.bf16.msra.mxu0 %v1645
    %1706 = vmatprep.subr.bf16.mxu0 0
    %1707 = vmatpush1.bf16.msra.mxu0 0
    %1708 = vmatprep.subr.bf16.mxu0 0
    %1709 = vmatpush1.bf16.msra.mxu0 0
    %1710 = vmatprep.subr.bf16.mxu0 0
    %1711 = vmatpush1.bf16.msra.mxu0 0
    %1712 = vmatprep.subr.bf16.mxu0 0
    %1713 = vmatpush1.bf16.msra.mxu0 0
    %1714 = vmatprep.subr.bf16.mxu0 0
    %1715 = vmatpush1.bf16.msra.mxu0 0
    %1716 = vmatprep.subr.bf16.mxu0 0
    %1717 = vmatpush1.bf16.msra.mxu0 0
    %1718 = vmatprep.subr.bf16.mxu0 0
    %1719 = vmatpush1.bf16.msra.mxu0 0
    %1720 = vmatprep.subr.bf16.mxu0 0
    %1721 = vmatpush1.bf16.msra.mxu0 0
    %1722 = vmatprep.mubr.bf16.mxu0 0
    %1723 = vmatmul.mubr.bf16.gmra.mrb[0].mxu0 %v1597
    %v1724 = vpop.f32.mrb[0].mxu0
    %v1725 = vadd.f32 0.0, %v1724
    %v1726 = vpop.f32.mrb[0].mxu0
    %v1727 = vadd.f32 0.0, %v1726
    %v1728 = vpop.f32.mrb[0].mxu0
    %v1729 = vadd.f32 0.0, %v1728
    %v1730 = vpop.f32.mrb[0].mxu0
    %v1731 = vadd.f32 0.0, %v1730
    %1732 = vdwg.mxu0
    %v1733 = vadd.f32 %v1607, %v1682
    %v1734 = vadd.f32 %v1608, %v1684
    %v1735 = vadd.f32 %v1609, %v1725
    %v1736 = vadd.f32 %v1610, %v1727
    %v1737 = vadd.f32 %v1611, %v1686
    %v1738 = vadd.f32 %v1612, %v1688
    %v1739 = vadd.f32 %v1613, %v1729
    %v1740 = vadd.f32 %v1614, %v1731
    %v1741 = vxor.u32 %v1733, 2147483648
    %v1742 = vxor.u32 %v1737, 2147483648
    %v1743 = vmul.f32 %v1741, 1.442695
    %v1744 = vpow.pop %v1743
    %v1745 = vmul.f32 %v1742, 1.442695
    %v1746 = vpow.pop %v1745
    %v1747 = vadd.f32 %v1744, 1.0
    %v1748 = vadd.f32 %v1746, 1.0
    %v1749 = vrcp.pop %v1747
    %v1750 = vmul.f32 1.0, %v1749
    %v1751 = vrcp.pop %v1748
    %v1752 = vmul.f32 1.0, %v1751
    %v1753 = vxor.u32 %v1734, 2147483648
    %v1754 = vxor.u32 %v1738, 2147483648
    %v1755 = vmul.f32 %v1753, 1.442695
    %v1756 = vpow.pop %v1755
    %v1757 = vmul.f32 %v1754, 1.442695
    %v1758 = vpow.pop %v1757
    %v1759 = vadd.f32 %v1756, 1.0
    %v1760 = vadd.f32 %v1758, 1.0
    %v1761 = vrcp.pop %v1759
    %v1762 = vmul.f32 1.0, %v1761
    %v1763 = vrcp.pop %v1760
    %v1764 = vmul.f32 1.0, %v1763
    %v1765 = vtanh.pop %v1735
    %v1766 = vtanh.pop %v1739
    %v1767 = vxor.u32 %v1736, 2147483648
    %v1768 = vxor.u32 %v1740, 2147483648
    %v1769 = vmul.f32 %v1767, 1.442695
    %v1770 = vpow.pop %v1769
    %v1771 = vmul.f32 %v1768, 1.442695
    %v1772 = vpow.pop %v1771
    %v1773 = vadd.f32 %v1770, 1.0
    %v1774 = vadd.f32 %v1772, 1.0
    %v1775 = vrcp.pop %v1773
    %v1776 = vmul.f32 1.0, %v1775
    %v1777 = vrcp.pop %v1774
    %v1778 = vmul.f32 1.0, %v1777
    %v1779 = vmul.f32 %v1762, %v1591
    %v1780 = vmul.f32 %v1764, %v1592
    %v1781 = vmul.f32 %v1750, %v1765
    %v1782 = vmul.f32 %v1752, %v1766
    %v1783 = vadd.f32 %v1779, %v1781
    %v1784 = vadd.f32 %v1780, %v1782
    %v1785 = vtanh.pop %v1783
    %v1786 = vtanh.pop %v1784
    %v1787 = vmul.f32 %v1776, %v1785
    %v1788 = vmul.f32 %v1778, %v1786
    %v1789 = vpack.c.bf16 %v1788, %v1787
    %s1790 = sadd.s32 0, 64
    %s1791 = sshra.s32 %s1790, 4
    %s1792 = sand.u32 %s1790, 15
    %s1793 = smul.addr %s1791, 8
    %s1794 = scalar_lea.vmem [#allocation5], %s1793
    %1795 = vst [vmem:[%s1794] sm:$0xff] %v1789
    %s1796 = smul.u32 10, 4
    %s1797 = smul.addr %s1796, 8
    %s1798 = scalar_lea.vmem [#allocation4], %s1797
    %v1799 = vld [vmem:[%s1798] sm:$0xff]
    %v1800 = vld [vmem:[%s1798 + $0x8] sm:$0xff]
    %v1801 = vld [vmem:[%s1798 + $0x10] sm:$0xff]
    %v1802 = vld [vmem:[%s1798 + $0x18] sm:$0xff]
    %v1803 = vld [vmem:[%s1798 + $0x20] sm:$0xff]
    %v1804 = vld [vmem:[%s1798 + $0x28] sm:$0xff]
    %v1805 = vld [vmem:[%s1798 + $0x30] sm:$0xff]
    %v1806 = vld [vmem:[%s1798 + $0x38] sm:$0xff]
    %v1807 = vld [vmem:[#allocation3] sm:$0xff]
    %v1808 = vld [vmem:[#allocation3 + $0x8] sm:$0xff]
    %v1809 = vld [vmem:[#allocation3 + $0x10] sm:$0xff]
    %v1810 = vld [vmem:[#allocation3 + $0x18] sm:$0xff]
    %v1811 = vld [vmem:[#allocation3 + $0x20] sm:$0xff]
    %v1812 = vld [vmem:[#allocation3 + $0x28] sm:$0xff]
    %v1813 = vld [vmem:[#allocation3 + $0x30] sm:$0xff]
    %v1814 = vld [vmem:[#allocation3 + $0x38] sm:$0xff]
    %v1815 = vld [vmem:[#allocation3 + $0x40] sm:$0xff]
    %v1816 = vld [vmem:[#allocation3 + $0x48] sm:$0xff]
    %v1817 = vld [vmem:[#allocation3 + $0x50] sm:$0xff]
    %v1818 = vld [vmem:[#allocation3 + $0x58] sm:$0xff]
    %v1819 = vld [vmem:[#allocation3 + $0x60] sm:$0xff]
    %v1820 = vld [vmem:[#allocation3 + $0x68] sm:$0xff]
    %v1821 = vld [vmem:[#allocation3 + $0x70] sm:$0xff]
    %v1822 = vld [vmem:[#allocation3 + $0x78] sm:$0xff]
    %v1823 = vld [vmem:[#allocation3 + $0x80] sm:$0xff]
    %v1824 = vld [vmem:[#allocation3 + $0x88] sm:$0xff]
    %v1825 = vld [vmem:[#allocation3 + $0x90] sm:$0xff]
    %v1826 = vld [vmem:[#allocation3 + $0x98] sm:$0xff]
    %v1827 = vld [vmem:[#allocation3 + $0xa0] sm:$0xff]
    %v1828 = vld [vmem:[#allocation3 + $0xa8] sm:$0xff]
    %v1829 = vld [vmem:[#allocation3 + $0xb0] sm:$0xff]
    %v1830 = vld [vmem:[#allocation3 + $0xb8] sm:$0xff]
    %v1831 = vld [vmem:[#allocation3 + $0xc0] sm:$0xff]
    %v1832 = vld [vmem:[#allocation3 + $0xc8] sm:$0xff]
    %v1833 = vld [vmem:[#allocation3 + $0xd0] sm:$0xff]
    %v1834 = vld [vmem:[#allocation3 + $0xd8] sm:$0xff]
    %v1835 = vld [vmem:[#allocation3 + $0xe0] sm:$0xff]
    %v1836 = vld [vmem:[#allocation3 + $0xe8] sm:$0xff]
    %v1837 = vld [vmem:[#allocation3 + $0xf0] sm:$0xff]
    %v1838 = vld [vmem:[#allocation3 + $0xf8] sm:$0xff]
    %1839 = vmatprep.subr.bf16.mxu0 %v1808
    %1840 = vmatpush1.bf16.msra.mxu0 %v1807
    %1841 = vmatprep.subr.bf16.mxu0 %v1812
    %1842 = vmatpush1.bf16.msra.mxu0 %v1811
    %1843 = vmatprep.subr.bf16.mxu0 %v1816
    %1844 = vmatpush1.bf16.msra.mxu0 %v1815
    %1845 = vmatprep.subr.bf16.mxu0 %v1820
    %1846 = vmatpush1.bf16.msra.mxu0 %v1819
    %1847 = vmatprep.subr.bf16.mxu0 %v1824
    %1848 = vmatpush1.bf16.msra.mxu0 %v1823
    %1849 = vmatprep.subr.bf16.mxu0 %v1828
    %1850 = vmatpush1.bf16.msra.mxu0 %v1827
    %1851 = vmatprep.subr.bf16.mxu0 %v1832
    %1852 = vmatpush1.bf16.msra.mxu0 %v1831
    %1853 = vmatprep.subr.bf16.mxu0 %v1836
    %1854 = vmatpush1.bf16.msra.mxu0 %v1835
    %1855 = vmatprep.subr.bf16.mxu0 0
    %1856 = vmatpush1.bf16.msra.mxu0 0
    %1857 = vmatprep.subr.bf16.mxu0 0
    %1858 = vmatpush1.bf16.msra.mxu0 0
    %1859 = vmatprep.subr.bf16.mxu0 0
    %1860 = vmatpush1.bf16.msra.mxu0 0
    %1861 = vmatprep.subr.bf16.mxu0 0
    %1862 = vmatpush1.bf16.msra.mxu0 0
    %1863 = vmatprep.subr.bf16.mxu0 0
    %1864 = vmatpush1.bf16.msra.mxu0 0
    %1865 = vmatprep.subr.bf16.mxu0 0
    %1866 = vmatpush1.bf16.msra.mxu0 0
    %1867 = vmatprep.subr.bf16.mxu0 0
    %1868 = vmatpush1.bf16.msra.mxu0 0
    %1869 = vmatprep.subr.bf16.mxu0 0
    %1870 = vmatpush1.bf16.msra.mxu0 0
    %1871 = vmatprep.mubr.bf16.mxu0 0
    %1872 = vmatmul.mubr.bf16.gmra.mrb[0].mxu0 %v1789
    %v1873 = vpop.f32.mrb[0].mxu0
    %v1874 = vadd.f32 0.0, %v1873
    %v1875 = vpop.f32.mrb[0].mxu0
    %v1876 = vadd.f32 0.0, %v1875
    %v1877 = vpop.f32.mrb[0].mxu0
    %v1878 = vadd.f32 0.0, %v1877
    %v1879 = vpop.f32.mrb[0].mxu0
    %v1880 = vadd.f32 0.0, %v1879
    %1881 = vdwg.mxu0
    %1882 = vmatprep.subr.bf16.mxu0 %v1810
    %1883 = vmatpush1.bf16.msra.mxu0 %v1809
    %1884 = vmatprep.subr.bf16.mxu0 %v1814
    %1885 = vmatpush1.bf16.msra.mxu0 %v1813
    %1886 = vmatprep.subr.bf16.mxu0 %v1818
    %1887 = vmatpush1.bf16.msra.mxu0 %v1817
    %1888 = vmatprep.subr.bf16.mxu0 %v1822
    %1889 = vmatpush1.bf16.msra.mxu0 %v1821
    %1890 = vmatprep.subr.bf16.mxu0 %v1826
    %1891 = vmatpush1.bf16.msra.mxu0 %v1825
    %1892 = vmatprep.subr.bf16.mxu0 %v1830
    %1893 = vmatpush1.bf16.msra.mxu0 %v1829
    %1894 = vmatprep.subr.bf16.mxu0 %v1834
    %1895 = vmatpush1.bf16.msra.mxu0 %v1833
    %1896 = vmatprep.subr.bf16.mxu0 %v1838
    %1897 = vmatpush1.bf16.msra.mxu0 %v1837
    %1898 = vmatprep.subr.bf16.mxu0 0
    %1899 = vmatpush1.bf16.msra.mxu0 0
    %1900 = vmatprep.subr.bf16.mxu0 0
    %1901 = vmatpush1.bf16.msra.mxu0 0
    %1902 = vmatprep.subr.bf16.mxu0 0
    %1903 = vmatpush1.bf16.msra.mxu0 0
    %1904 = vmatprep.subr.bf16.mxu0 0
    %1905 = vmatpush1.bf16.msra.mxu0 0
    %1906 = vmatprep.subr.bf16.mxu0 0
    %1907 = vmatpush1.bf16.msra.mxu0 0
    %1908 = vmatprep.subr.bf16.mxu0 0
    %1909 = vmatpush1.bf16.msra.mxu0 0
    %1910 = vmatprep.subr.bf16.mxu0 0
    %1911 = vmatpush1.bf16.msra.mxu0 0
    %1912 = vmatprep.subr.bf16.mxu0 0
    %1913 = vmatpush1.bf16.msra.mxu0 0
    %1914 = vmatprep.mubr.bf16.mxu0 0
    %1915 = vmatmul.mubr.bf16.gmra.mrb[0].mxu0 %v1789
    %v1916 = vpop.f32.mrb[0].mxu0
    %v1917 = vadd.f32 0.0, %v1916
    %v1918 = vpop.f32.mrb[0].mxu0
    %v1919 = vadd.f32 0.0, %v1918
    %v1920 = vpop.f32.mrb[0].mxu0
    %v1921 = vadd.f32 0.0, %v1920
    %v1922 = vpop.f32.mrb[0].mxu0
    %v1923 = vadd.f32 0.0, %v1922
    %1924 = vdwg.mxu0
    %v1925 = vadd.f32 %v1799, %v1874
    %v1926 = vadd.f32 %v1800, %v1876
    %v1927 = vadd.f32 %v1801, %v1917
    %v1928 = vadd.f32 %v1802, %v1919
    %v1929 = vadd.f32 %v1803, %v1878
    %v1930 = vadd.f32 %v1804, %v1880
    %v1931 = vadd.f32 %v1805, %v1921
    %v1932 = vadd.f32 %v1806, %v1923
    %v1933 = vxor.u32 %v1925, 2147483648
    %v1934 = vxor.u32 %v1929, 2147483648
    %v1935 = vmul.f32 %v1933, 1.442695
    %v1936 = vpow.pop %v1935
    %v1937 = vmul.f32 %v1934, 1.442695
    %v1938 = vpow.pop %v1937
    %v1939 = vadd.f32 %v1936, 1.0
    %v1940 = vadd.f32 %v1938, 1.0
    %v1941 = vrcp.pop %v1939
    %v1942 = vmul.f32 1.0, %v1941
    %v1943 = vrcp.pop %v1940
    %v1944 = vmul.f32 1.0, %v1943
    %v1945 = vxor.u32 %v1926, 2147483648
    %v1946 = vxor.u32 %v1930, 2147483648
    %v1947 = vmul.f32 %v1945, 1.442695
    %v1948 = vpow.pop %v1947
    %v1949 = vmul.f32 %v1946, 1.442695
    %v1950 = vpow.pop %v1949
    %v1951 = vadd.f32 %v1948, 1.0
    %v1952 = vadd.f32 %v1950, 1.0
    %v1953 = vrcp.pop %v1951
    %v1954 = vmul.f32 1.0, %v1953
    %v1955 = vrcp.pop %v1952
    %v1956 = vmul.f32 1.0, %v1955
    %v1957 = vtanh.pop %v1927
    %v1958 = vtanh.pop %v1931
    %v1959 = vxor.u32 %v1928, 2147483648
    %v1960 = vxor.u32 %v1932, 2147483648
    %v1961 = vmul.f32 %v1959, 1.442695
    %v1962 = vpow.pop %v1961
    %v1963 = vmul.f32 %v1960, 1.442695
    %v1964 = vpow.pop %v1963
    %v1965 = vadd.f32 %v1962, 1.0
    %v1966 = vadd.f32 %v1964, 1.0
    %v1967 = vrcp.pop %v1965
    %v1968 = vmul.f32 1.0, %v1967
    %v1969 = vrcp.pop %v1966
    %v1970 = vmul.f32 1.0, %v1969
    %v1971 = vmul.f32 %v1954, %v1783
    %v1972 = vmul.f32 %v1956, %v1784
    %v1973 = vmul.f32 %v1942, %v1957
    %v1974 = vmul.f32 %v1944, %v1958
    %v1975 = vadd.f32 %v1971, %v1973
    %v1976 = vadd.f32 %v1972, %v1974
    %v1977 = vtanh.pop %v1975
    %v1978 = vtanh.pop %v1976
    %v1979 = vmul.f32 %v1968, %v1977
    %v1980 = vmul.f32 %v1970, %v1978
    %v1981 = vpack.c.bf16 %v1980, %v1979
    %s1982 = sadd.s32 0, 80
    %s1983 = sshra.s32 %s1982, 4
    %s1984 = sand.u32 %s1982, 15
    %s1985 = smul.addr %s1983, 8
    %s1986 = scalar_lea.vmem [#allocation5], %s1985
    %1987 = vst [vmem:[%s1986] sm:$0xff] %v1981
    %s1988 = smul.u32 12, 4
    %s1989 = smul.addr %s1988, 8
    %s1990 = scalar_lea.vmem [#allocation4], %s1989
    %v1991 = vld [vmem:[%s1990] sm:$0xff]
    %v1992 = vld [vmem:[%s1990 + $0x8] sm:$0xff]
    %v1993 = vld [vmem:[%s1990 + $0x10] sm:$0xff]
    %v1994 = vld [vmem:[%s1990 + $0x18] sm:$0xff]
    %v1995 = vld [vmem:[%s1990 + $0x20] sm:$0xff]
    %v1996 = vld [vmem:[%s1990 + $0x28] sm:$0xff]
    %v1997 = vld [vmem:[%s1990 + $0x30] sm:$0xff]
    %v1998 = vld [vmem:[%s1990 + $0x38] sm:$0xff]
    %v1999 = vld [vmem:[#allocation3] sm:$0xff]
    %v2000 = vld [vmem:[#allocation3 + $0x8] sm:$0xff]
    %v2001 = vld [vmem:[#allocation3 + $0x10] sm:$0xff]
    %v2002 = vld [vmem:[#allocation3 + $0x18] sm:$0xff]
    %v2003 = vld [vmem:[#allocation3 + $0x20] sm:$0xff]
    %v2004 = vld [vmem:[#allocation3 + $0x28] sm:$0xff]
    %v2005 = vld [vmem:[#allocation3 + $0x30] sm:$0xff]
    %v2006 = vld [vmem:[#allocation3 + $0x38] sm:$0xff]
    %v2007 = vld [vmem:[#allocation3 + $0x40] sm:$0xff]
    %v2008 = vld [vmem:[#allocation3 + $0x48] sm:$0xff]
    %v2009 = vld [vmem:[#allocation3 + $0x50] sm:$0xff]
    %v2010 = vld [vmem:[#allocation3 + $0x58] sm:$0xff]
    %v2011 = vld [vmem:[#allocation3 + $0x60] sm:$0xff]
    %v2012 = vld [vmem:[#allocation3 + $0x68] sm:$0xff]
    %v2013 = vld [vmem:[#allocation3 + $0x70] sm:$0xff]
    %v2014 = vld [vmem:[#allocation3 + $0x78] sm:$0xff]
    %v2015 = vld [vmem:[#allocation3 + $0x80] sm:$0xff]
    %v2016 = vld [vmem:[#allocation3 + $0x88] sm:$0xff]
    %v2017 = vld [vmem:[#allocation3 + $0x90] sm:$0xff]
    %v2018 = vld [vmem:[#allocation3 + $0x98] sm:$0xff]
    %v2019 = vld [vmem:[#allocation3 + $0xa0] sm:$0xff]
    %v2020 = vld [vmem:[#allocation3 + $0xa8] sm:$0xff]
    %v2021 = vld [vmem:[#allocation3 + $0xb0] sm:$0xff]
    %v2022 = vld [vmem:[#allocation3 + $0xb8] sm:$0xff]
    %v2023 = vld [vmem:[#allocation3 + $0xc0] sm:$0xff]
    %v2024 = vld [vmem:[#allocation3 + $0xc8] sm:$0xff]
    %v2025 = vld [vmem:[#allocation3 + $0xd0] sm:$0xff]
    %v2026 = vld [vmem:[#allocation3 + $0xd8] sm:$0xff]
    %v2027 = vld [vmem:[#allocation3 + $0xe0] sm:$0xff]
    %v2028 = vld [vmem:[#allocation3 + $0xe8] sm:$0xff]
    %v2029 = vld [vmem:[#allocation3 + $0xf0] sm:$0xff]
    %v2030 = vld [vmem:[#allocation3 + $0xf8] sm:$0xff]
    %2031 = vmatprep.subr.bf16.mxu0 %v2000
    %2032 = vmatpush1.bf16.msra.mxu0 %v1999
    %2033 = vmatprep.subr.bf16.mxu0 %v2004
    %2034 = vmatpush1.bf16.msra.mxu0 %v2003
    %2035 = vmatprep.subr.bf16.mxu0 %v2008
    %2036 = vmatpush1.bf16.msra.mxu0 %v2007
    %2037 = vmatprep.subr.bf16.mxu0 %v2012
    %2038 = vmatpush1.bf16.msra.mxu0 %v2011
    %2039 = vmatprep.subr.bf16.mxu0 %v2016
    %2040 = vmatpush1.bf16.msra.mxu0 %v2015
    %2041 = vmatprep.subr.bf16.mxu0 %v2020
    %2042 = vmatpush1.bf16.msra.mxu0 %v2019
    %2043 = vmatprep.subr.bf16.mxu0 %v2024
    %2044 = vmatpush1.bf16.msra.mxu0 %v2023
    %2045 = vmatprep.subr.bf16.mxu0 %v2028
    %2046 = vmatpush1.bf16.msra.mxu0 %v2027
    %2047 = vmatprep.subr.bf16.mxu0 0
    %2048 = vmatpush1.bf16.msra.mxu0 0
    %2049 = vmatprep.subr.bf16.mxu0 0
    %2050 = vmatpush1.bf16.msra.mxu0 0
    %2051 = vmatprep.subr.bf16.mxu0 0
    %2052 = vmatpush1.bf16.msra.mxu0 0
    %2053 = vmatprep.subr.bf16.mxu0 0
    %2054 = vmatpush1.bf16.msra.mxu0 0
    %2055 = vmatprep.subr.bf16.mxu0 0
    %2056 = vmatpush1.bf16.msra.mxu0 0
    %2057 = vmatprep.subr.bf16.mxu0 0
    %2058 = vmatpush1.bf16.msra.mxu0 0
    %2059 = vmatprep.subr.bf16.mxu0 0
    %2060 = vmatpush1.bf16.msra.mxu0 0
    %2061 = vmatprep.subr.bf16.mxu0 0
    %2062 = vmatpush1.bf16.msra.mxu0 0
    %2063 = vmatprep.mubr.bf16.mxu0 0
    %2064 = vmatmul.mubr.bf16.gmra.mrb[0].mxu0 %v1981
    %v2065 = vpop.f32.mrb[0].mxu0
    %v2066 = vadd.f32 0.0, %v2065
    %v2067 = vpop.f32.mrb[0].mxu0
    %v2068 = vadd.f32 0.0, %v2067
    %v2069 = vpop.f32.mrb[0].mxu0
    %v2070 = vadd.f32 0.0, %v2069
    %v2071 = vpop.f32.mrb[0].mxu0
    %v2072 = vadd.f32 0.0, %v2071
    %2073 = vdwg.mxu0
    %2074 = vmatprep.subr.bf16.mxu0 %v2002
    %2075 = vmatpush1.bf16.msra.mxu0 %v2001
    %2076 = vmatprep.subr.bf16.mxu0 %v2006
    %2077 = vmatpush1.bf16.msra.mxu0 %v2005
    %2078 = vmatprep.subr.bf16.mxu0 %v2010
    %2079 = vmatpush1.bf16.msra.mxu0 %v2009
    %2080 = vmatprep.subr.bf16.mxu0 %v2014
    %2081 = vmatpush1.bf16.msra.mxu0 %v2013
    %2082 = vmatprep.subr.bf16.mxu0 %v2018
    %2083 = vmatpush1.bf16.msra.mxu0 %v2017
    %2084 = vmatprep.subr.bf16.mxu0 %v2022
    %2085 = vmatpush1.bf16.msra.mxu0 %v2021
    %2086 = vmatprep.subr.bf16.mxu0 %v2026
    %2087 = vmatpush1.bf16.msra.mxu0 %v2025
    %2088 = vmatprep.subr.bf16.mxu0 %v2030
    %2089 = vmatpush1.bf16.msra.mxu0 %v2029
    %2090 = vmatprep.subr.bf16.mxu0 0
    %2091 = vmatpush1.bf16.msra.mxu0 0
    %2092 = vmatprep.subr.bf16.mxu0 0
    %2093 = vmatpush1.bf16.msra.mxu0 0
    %2094 = vmatprep.subr.bf16.mxu0 0
    %2095 = vmatpush1.bf16.msra.mxu0 0
    %2096 = vmatprep.subr.bf16.mxu0 0
    %2097 = vmatpush1.bf16.msra.mxu0 0
    %2098 = vmatprep.subr.bf16.mxu0 0
    %2099 = vmatpush1.bf16.msra.mxu0 0
    %2100 = vmatprep.subr.bf16.mxu0 0
    %2101 = vmatpush1.bf16.msra.mxu0 0
    %2102 = vmatprep.subr.bf16.mxu0 0
    %2103 = vmatpush1.bf16.msra.mxu0 0
    %2104 = vmatprep.subr.bf16.mxu0 0
    %2105 = vmatpush1.bf16.msra.mxu0 0
    %2106 = vmatprep.mubr.bf16.mxu0 0
    %2107 = vmatmul.mubr.bf16.gmra.mrb[0].mxu0 %v1981
    %v2108 = vpop.f32.mrb[0].mxu0
    %v2109 = vadd.f32 0.0, %v2108
    %v2110 = vpop.f32.mrb[0].mxu0
    %v2111 = vadd.f32 0.0, %v2110
    %v2112 = vpop.f32.mrb[0].mxu0
    %v2113 = vadd.f32 0.0, %v2112
    %v2114 = vpop.f32.mrb[0].mxu0
    %v2115 = vadd.f32 0.0, %v2114
    %2116 = vdwg.mxu0
    %v2117 = vadd.f32 %v1991, %v2066
    %v2118 = vadd.f32 %v1992, %v2068
    %v2119 = vadd.f32 %v1993, %v2109
    %v2120 = vadd.f32 %v1994, %v2111
    %v2121 = vadd.f32 %v1995, %v2070
    %v2122 = vadd.f32 %v1996, %v2072
    %v2123 = vadd.f32 %v1997, %v2113
    %v2124 = vadd.f32 %v1998, %v2115
    %v2125 = vxor.u32 %v2117, 2147483648
    %v2126 = vxor.u32 %v2121, 2147483648
    %v2127 = vmul.f32 %v2125, 1.442695
    %v2128 = vpow.pop %v2127
    %v2129 = vmul.f32 %v2126, 1.442695
    %v2130 = vpow.pop %v2129
    %v2131 = vadd.f32 %v2128, 1.0
    %v2132 = vadd.f32 %v2130, 1.0
    %v2133 = vrcp.pop %v2131
    %v2134 = vmul.f32 1.0, %v2133
    %v2135 = vrcp.pop %v2132
    %v2136 = vmul.f32 1.0, %v2135
    %v2137 = vxor.u32 %v2118, 2147483648
    %v2138 = vxor.u32 %v2122, 2147483648
    %v2139 = vmul.f32 %v2137, 1.442695
    %v2140 = vpow.pop %v2139
    %v2141 = vmul.f32 %v2138, 1.442695
    %v2142 = vpow.pop %v2141
    %v2143 = vadd.f32 %v2140, 1.0
    %v2144 = vadd.f32 %v2142, 1.0
    %v2145 = vrcp.pop %v2143
    %v2146 = vmul.f32 1.0, %v2145
    %v2147 = vrcp.pop %v2144
    %v2148 = vmul.f32 1.0, %v2147
    %v2149 = vtanh.pop %v2119
    %v2150 = vtanh.pop %v2123
    %v2151 = vxor.u32 %v2120, 2147483648
    %v2152 = vxor.u32 %v2124, 2147483648
    %v2153 = vmul.f32 %v2151, 1.442695
    %v2154 = vpow.pop %v2153
    %v2155 = vmul.f32 %v2152, 1.442695
    %v2156 = vpow.pop %v2155
    %v2157 = vadd.f32 %v2154, 1.0
    %v2158 = vadd.f32 %v2156, 1.0
    %v2159 = vrcp.pop %v2157
    %v2160 = vmul.f32 1.0, %v2159
    %v2161 = vrcp.pop %v2158
    %v2162 = vmul.f32 1.0, %v2161
    %v2163 = vmul.f32 %v2146, %v1975
    %v2164 = vmul.f32 %v2148, %v1976
    %v2165 = vmul.f32 %v2134, %v2149
    %v2166 = vmul.f32 %v2136, %v2150
    %v2167 = vadd.f32 %v2163, %v2165
    %v2168 = vadd.f32 %v2164, %v2166
    %v2169 = vtanh.pop %v2167
    %v2170 = vtanh.pop %v2168
    %v2171 = vmul.f32 %v2160, %v2169
    %v2172 = vmul.f32 %v2162, %v2170
    %v2173 = vpack.c.bf16 %v2172, %v2171
    %s2174 = sadd.s32 0, 96
    %s2175 = sshra.s32 %s2174, 4
    %s2176 = sand.u32 %s2174, 15
    %s2177 = smul.addr %s2175, 8
    %s2178 = scalar_lea.vmem [#allocation5], %s2177
    %2179 = vst [vmem:[%s2178] sm:$0xff] %v2173
    %s2180 = smul.u32 14, 4
    %s2181 = smul.addr %s2180, 8
    %s2182 = scalar_lea.vmem [#allocation4], %s2181
    %v2183 = vld [vmem:[%s2182] sm:$0xff]
    %v2184 = vld [vmem:[%s2182 + $0x8] sm:$0xff]
    %v2185 = vld [vmem:[%s2182 + $0x10] sm:$0xff]
    %v2186 = vld [vmem:[%s2182 + $0x18] sm:$0xff]
    %v2187 = vld [vmem:[%s2182 + $0x20] sm:$0xff]
    %v2188 = vld [vmem:[%s2182 + $0x28] sm:$0xff]
    %v2189 = vld [vmem:[%s2182 + $0x30] sm:$0xff]
    %v2190 = vld [vmem:[%s2182 + $0x38] sm:$0xff]
    %v2191 = vld [vmem:[#allocation3] sm:$0xff]
    %v2192 = vld [vmem:[#allocation3 + $0x8] sm:$0xff]
    %v2193 = vld [vmem:[#allocation3 + $0x10] sm:$0xff]
    %v2194 = vld [vmem:[#allocation3 + $0x18] sm:$0xff]
    %v2195 = vld [vmem:[#allocation3 + $0x20] sm:$0xff]
    %v2196 = vld [vmem:[#allocation3 + $0x28] sm:$0xff]
    %v2197 = vld [vmem:[#allocation3 + $0x30] sm:$0xff]
    %v2198 = vld [vmem:[#allocation3 + $0x38] sm:$0xff]
    %v2199 = vld [vmem:[#allocation3 + $0x40] sm:$0xff]
    %v2200 = vld [vmem:[#allocation3 + $0x48] sm:$0xff]
    %v2201 = vld [vmem:[#allocation3 + $0x50] sm:$0xff]
    %v2202 = vld [vmem:[#allocation3 + $0x58] sm:$0xff]
    %v2203 = vld [vmem:[#allocation3 + $0x60] sm:$0xff]
    %v2204 = vld [vmem:[#allocation3 + $0x68] sm:$0xff]
    %v2205 = vld [vmem:[#allocation3 + $0x70] sm:$0xff]
    %v2206 = vld [vmem:[#allocation3 + $0x78] sm:$0xff]
    %v2207 = vld [vmem:[#allocation3 + $0x80] sm:$0xff]
    %v2208 = vld [vmem:[#allocation3 + $0x88] sm:$0xff]
    %v2209 = vld [vmem:[#allocation3 + $0x90] sm:$0xff]
    %v2210 = vld [vmem:[#allocation3 + $0x98] sm:$0xff]
    %v2211 = vld [vmem:[#allocation3 + $0xa0] sm:$0xff]
    %v2212 = vld [vmem:[#allocation3 + $0xa8] sm:$0xff]
    %v2213 = vld [vmem:[#allocation3 + $0xb0] sm:$0xff]
    %v2214 = vld [vmem:[#allocation3 + $0xb8] sm:$0xff]
    %v2215 = vld [vmem:[#allocation3 + $0xc0] sm:$0xff]
    %v2216 = vld [vmem:[#allocation3 + $0xc8] sm:$0xff]
    %v2217 = vld [vmem:[#allocation3 + $0xd0] sm:$0xff]
    %v2218 = vld [vmem:[#allocation3 + $0xd8] sm:$0xff]
    %v2219 = vld [vmem:[#allocation3 + $0xe0] sm:$0xff]
    %v2220 = vld [vmem:[#allocation3 + $0xe8] sm:$0xff]
    %v2221 = vld [vmem:[#allocation3 + $0xf0] sm:$0xff]
    %v2222 = vld [vmem:[#allocation3 + $0xf8] sm:$0xff]
    %2223 = vmatprep.subr.bf16.mxu0 %v2192
    %2224 = vmatpush1.bf16.msra.mxu0 %v2191
    %2225 = vmatprep.subr.bf16.mxu0 %v2196
    %2226 = vmatpush1.bf16.msra.mxu0 %v2195
    %2227 = vmatprep.subr.bf16.mxu0 %v2200
    %2228 = vmatpush1.bf16.msra.mxu0 %v2199
    %2229 = vmatprep.subr.bf16.mxu0 %v2204
    %2230 = vmatpush1.bf16.msra.mxu0 %v2203
    %2231 = vmatprep.subr.bf16.mxu0 %v2208
    %2232 = vmatpush1.bf16.msra.mxu0 %v2207
    %2233 = vmatprep.subr.bf16.mxu0 %v2212
    %2234 = vmatpush1.bf16.msra.mxu0 %v2211
    %2235 = vmatprep.subr.bf16.mxu0 %v2216
    %2236 = vmatpush1.bf16.msra.mxu0 %v2215
    %2237 = vmatprep.subr.bf16.mxu0 %v2220
    %2238 = vmatpush1.bf16.msra.mxu0 %v2219
    %2239 = vmatprep.subr.bf16.mxu0 0
    %2240 = vmatpush1.bf16.msra.mxu0 0
    %2241 = vmatprep.subr.bf16.mxu0 0
    %2242 = vmatpush1.bf16.msra.mxu0 0
    %2243 = vmatprep.subr.bf16.mxu0 0
    %2244 = vmatpush1.bf16.msra.mxu0 0
    %2245 = vmatprep.subr.bf16.mxu0 0
    %2246 = vmatpush1.bf16.msra.mxu0 0
    %2247 = vmatprep.subr.bf16.mxu0 0
    %2248 = vmatpush1.bf16.msra.mxu0 0
    %2249 = vmatprep.subr.bf16.mxu0 0
    %2250 = vmatpush1.bf16.msra.mxu0 0
    %2251 = vmatprep.subr.bf16.mxu0 0
    %2252 = vmatpush1.bf16.msra.mxu0 0
    %2253 = vmatprep.subr.bf16.mxu0 0
    %2254 = vmatpush1.bf16.msra.mxu0 0
    %2255 = vmatprep.mubr.bf16.mxu0 0
    %2256 = vmatmul.mubr.bf16.gmra.mrb[0].mxu0 %v2173
    %v2257 = vpop.f32.mrb[0].mxu0
    %v2258 = vadd.f32 0.0, %v2257
    %v2259 = vpop.f32.mrb[0].mxu0
    %v2260 = vadd.f32 0.0, %v2259
    %v2261 = vpop.f32.mrb[0].mxu0
    %v2262 = vadd.f32 0.0, %v2261
    %v2263 = vpop.f32.mrb[0].mxu0
    %v2264 = vadd.f32 0.0, %v2263
    %2265 = vdwg.mxu0
    %2266 = vmatprep.subr.bf16.mxu0 %v2194
    %2267 = vmatpush1.bf16.msra.mxu0 %v2193
    %2268 = vmatprep.subr.bf16.mxu0 %v2198
    %2269 = vmatpush1.bf16.msra.mxu0 %v2197
    %2270 = vmatprep.subr.bf16.mxu0 %v2202
    %2271 = vmatpush1.bf16.msra.mxu0 %v2201
    %2272 = vmatprep.subr.bf16.mxu0 %v2206
    %2273 = vmatpush1.bf16.msra.mxu0 %v2205
    %2274 = vmatprep.subr.bf16.mxu0 %v2210
    %2275 = vmatpush1.bf16.msra.mxu0 %v2209
    %2276 = vmatprep.subr.bf16.mxu0 %v2214
    %2277 = vmatpush1.bf16.msra.mxu0 %v2213
    %2278 = vmatprep.subr.bf16.mxu0 %v2218
    %2279 = vmatpush1.bf16.msra.mxu0 %v2217
    %2280 = vmatprep.subr.bf16.mxu0 %v2222
    %2281 = vmatpush1.bf16.msra.mxu0 %v2221
    %2282 = vmatprep.subr.bf16.mxu0 0
    %2283 = vmatpush1.bf16.msra.mxu0 0
    %2284 = vmatprep.subr.bf16.mxu0 0
    %2285 = vmatpush1.bf16.msra.mxu0 0
    %2286 = vmatprep.subr.bf16.mxu0 0
    %2287 = vmatpush1.bf16.msra.mxu0 0
    %2288 = vmatprep.subr.bf16.mxu0 0
    %2289 = vmatpush1.bf16.msra.mxu0 0
    %2290 = vmatprep.subr.bf16.mxu0 0
    %2291 = vmatpush1.bf16.msra.mxu0 0
    %2292 = vmatprep.subr.bf16.mxu0 0
    %2293 = vmatpush1.bf16.msra.mxu0 0
    %2294 = vmatprep.subr.bf16.mxu0 0
    %2295 = vmatpush1.bf16.msra.mxu0 0
    %2296 = vmatprep.subr.bf16.mxu0 0
    %2297 = vmatpush1.bf16.msra.mxu0 0
    %2298 = vmatprep.mubr.bf16.mxu0 0
    %2299 = vmatmul.mubr.bf16.gmra.mrb[0].mxu0 %v2173
    %v2300 = vpop.f32.mrb[0].mxu0
    %v2301 = vadd.f32 0.0, %v2300
    %v2302 = vpop.f32.mrb[0].mxu0
    %v2303 = vadd.f32 0.0, %v2302
    %v2304 = vpop.f32.mrb[0].mxu0
    %v2305 = vadd.f32 0.0, %v2304
    %v2306 = vpop.f32.mrb[0].mxu0
    %v2307 = vadd.f32 0.0, %v2306
    %2308 = vdwg.mxu0
    %v2309 = vadd.f32 %v2183, %v2258
    %v2310 = vadd.f32 %v2184, %v2260
    %v2311 = vadd.f32 %v2185, %v2301
    %v2312 = vadd.f32 %v2186, %v2303
    %v2313 = vadd.f32 %v2187, %v2262
    %v2314 = vadd.f32 %v2188, %v2264
    %v2315 = vadd.f32 %v2189, %v2305
    %v2316 = vadd.f32 %v2190, %v2307
    %v2317 = vxor.u32 %v2309, 2147483648
    %v2318 = vxor.u32 %v2313, 2147483648
    %v2319 = vmul.f32 %v2317, 1.442695
    %v2320 = vpow.pop %v2319
    %v2321 = vmul.f32 %v2318, 1.442695
    %v2322 = vpow.pop %v2321
    %v2323 = vadd.f32 %v2320, 1.0
    %v2324 = vadd.f32 %v2322, 1.0
    %v2325 = vrcp.pop %v2323
    %v2326 = vmul.f32 1.0, %v2325
    %v2327 = vrcp.pop %v2324
    %v2328 = vmul.f32 1.0, %v2327
    %v2329 = vxor.u32 %v2310, 2147483648
    %v2330 = vxor.u32 %v2314, 2147483648
    %v2331 = vmul.f32 %v2329, 1.442695
    %v2332 = vpow.pop %v2331
    %v2333 = vmul.f32 %v2330, 1.442695
    %v2334 = vpow.pop %v2333
    %v2335 = vadd.f32 %v2332, 1.0
    %v2336 = vadd.f32 %v2334, 1.0
    %v2337 = vrcp.pop %v2335
    %v2338 = vmul.f32 1.0, %v2337
    %v2339 = vrcp.pop %v2336
    %v2340 = vmul.f32 1.0, %v2339
    %v2341 = vtanh.pop %v2311
    %v2342 = vtanh.pop %v2315
    %v2343 = vxor.u32 %v2312, 2147483648
    %v2344 = vxor.u32 %v2316, 2147483648
    %v2345 = vmul.f32 %v2343, 1.442695
    %v2346 = vpow.pop %v2345
    %v2347 = vmul.f32 %v2344, 1.442695
    %v2348 = vpow.pop %v2347
    %v2349 = vadd.f32 %v2346, 1.0
    %v2350 = vadd.f32 %v2348, 1.0
    %v2351 = vrcp.pop %v2349
    %v2352 = vmul.f32 1.0, %v2351
    %v2353 = vrcp.pop %v2350
    %v2354 = vmul.f32 1.0, %v2353
    %v2355 = vmul.f32 %v2338, %v2167
    %v2356 = vmul.f32 %v2340, %v2168
    %v2357 = vmul.f32 %v2326, %v2341
    %v2358 = vmul.f32 %v2328, %v2342
    %v2359 = vadd.f32 %v2355, %v2357
    %v2360 = vadd.f32 %v2356, %v2358
    %v2361 = vtanh.pop %v2359
    %v2362 = vtanh.pop %v2360
    %v2363 = vmul.f32 %v2352, %v2361
    %v2364 = vmul.f32 %v2354, %v2362
    %v2365 = vpack.c.bf16 %v2364, %v2363
    %s2366 = sadd.s32 0, 112
    %s2367 = sshra.s32 %s2366, 4
    %s2368 = sand.u32 %s2366, 15
    %s2369 = smul.addr %s2367, 8
    %s2370 = scalar_lea.vmem [#allocation5], %s2369
    %2371 = vst [vmem:[%s2370] sm:$0xff] %v2365
    %s2372 = sshll.u32 %s364, 4
    %2373 = dma.done %s368, %s2372
    %s2374 = sshll.u32 %s364, 4
    %2375 = dma.done %s404, %s2374
    %v2376 = vld [vmem:[#allocation5] sm:$0xff]
    %v2377 = vld [vmem:[#allocation5 + $0x8] sm:$0xff]
    %v2378 = vld [vmem:[#allocation5 + $0x10] sm:$0xff]
    %v2379 = vld [vmem:[#allocation5 + $0x18] sm:$0xff]
    %v2380 = vld [vmem:[#allocation5 + $0x20] sm:$0xff]
    %v2381 = vld [vmem:[#allocation5 + $0x28] sm:$0xff]
    %v2382 = vld [vmem:[#allocation5 + $0x30] sm:$0xff]
    %v2383 = vld [vmem:[#allocation5 + $0x38] sm:$0xff]
    %v2384 = vld [vmem:[%s367] sm:$0xff]
    %v2385 = vld [vmem:[%s367 + $0x8] sm:$0xff]
    %v2386 = vld [vmem:[%s367 + $0x10] sm:$0xff]
    %v2387 = vld [vmem:[%s367 + $0x18] sm:$0xff]
    %v2388 = vld [vmem:[%s367 + $0x20] sm:$0xff]
    %v2389 = vld [vmem:[%s367 + $0x28] sm:$0xff]
    %v2390 = vld [vmem:[%s367 + $0x30] sm:$0xff]
    %v2391 = vld [vmem:[%s367 + $0x38] sm:$0xff]
    %v2392 = vld [vmem:[%s367 + $0x40] sm:$0xff]
    %v2393 = vld [vmem:[%s367 + $0x48] sm:$0xff]
    %v2394 = vld [vmem:[%s367 + $0x50] sm:$0xff]
    %v2395 = vld [vmem:[%s367 + $0x58] sm:$0xff]
    %v2396 = vld [vmem:[%s367 + $0x60] sm:$0xff]
    %v2397 = vld [vmem:[%s367 + $0x68] sm:$0xff]
    %v2398 = vld [vmem:[%s367 + $0x70] sm:$0xff]
    %v2399 = vld [vmem:[%s367 + $0x78] sm:$0xff]
    %v2400 = vld [vmem:[%s367 + $0x80] sm:$0xff]
    %v2401 = vld [vmem:[%s367 + $0x88] sm:$0xff]
    %v2402 = vld [vmem:[%s367 + $0x90] sm:$0xff]
    %v2403 = vld [vmem:[%s367 + $0x98] sm:$0xff]
    %v2404 = vld [vmem:[%s367 + $0xa0] sm:$0xff]
    %v2405 = vld [vmem:[%s367 + $0xa8] sm:$0xff]
    %v2406 = vld [vmem:[%s367 + $0xb0] sm:$0xff]
    %v2407 = vld [vmem:[%s367 + $0xb8] sm:$0xff]
    %v2408 = vld [vmem:[%s367 + $0xc0] sm:$0xff]
    %v2409 = vld [vmem:[%s367 + $0xc8] sm:$0xff]
    %v2410 = vld [vmem:[%s367 + $0xd0] sm:$0xff]
    %v2411 = vld [vmem:[%s367 + $0xd8] sm:$0xff]
    %v2412 = vld [vmem:[%s367 + $0xe0] sm:$0xff]
    %v2413 = vld [vmem:[%s367 + $0xe8] sm:$0xff]
    %v2414 = vld [vmem:[%s367 + $0xf0] sm:$0xff]
    %v2415 = vld [vmem:[%s367 + $0xf8] sm:$0xff]
    %v2416 = vld [vmem:[%s6] sm:$0xf]
    %v2418 = vlaneseq
    %v2419 = vshrl.u32 %v2418, 7
    %v2420 = vsub.s32 0, %v2419
    %v2421 = vrot.slane %v2416, %v2420
    %v2422 = vlaneseq
    %v2423 = vshrl.u32 %v2422, 7
    %v2424 = vsub.s32 1, %v2423
    %v2425 = vrot.slane %v2416, %v2424
    %v2426 = vlaneseq
    %v2427 = vshrl.u32 %v2426, 7
    %v2428 = vsub.s32 2, %v2427
    %v2429 = vrot.slane %v2416, %v2428
    %v2430 = vlaneseq
    %v2431 = vshrl.u32 %v2430, 7
    %v2432 = vsub.s32 3, %v2431
    %v2433 = vrot.slane %v2416, %v2432
    %2438 = vmatprep.subr.bf16.mxu0 %v2385
    %2439 = vmatpush1.bf16.msra.mxu0 %v2384
    %2440 = vmatprep.subr.bf16.mxu0 %v2389
    %2441 = vmatpush1.bf16.msra.mxu0 %v2388
    %2442 = vmatprep.subr.bf16.mxu0 %v2393
    %2443 = vmatpush1.bf16.msra.mxu0 %v2392
    %2444 = vmatprep.subr.bf16.mxu0 %v2397
    %2445 = vmatpush1.bf16.msra.mxu0 %v2396
    %2446 = vmatprep.subr.bf16.mxu0 %v2401
    %2447 = vmatpush1.bf16.msra.mxu0 %v2400
    %2448 = vmatprep.subr.bf16.mxu0 %v2405
    %2449 = vmatpush1.bf16.msra.mxu0 %v2404
    %2450 = vmatprep.subr.bf16.mxu0 %v2409
    %2451 = vmatpush1.bf16.msra.mxu0 %v2408
    %2452 = vmatprep.subr.bf16.mxu0 %v2413
    %2453 = vmatpush1.bf16.msra.mxu0 %v2412
    %2454 = vmatprep.subr.bf16.mxu0 0
    %2455 = vmatpush1.bf16.msra.mxu0 0
    %2456 = vmatprep.subr.bf16.mxu0 0
    %2457 = vmatpush1.bf16.msra.mxu0 0
    %2458 = vmatprep.subr.bf16.mxu0 0
    %2459 = vmatpush1.bf16.msra.mxu0 0
    %2460 = vmatprep.subr.bf16.mxu0 0
    %2461 = vmatpush1.bf16.msra.mxu0 0
    %2462 = vmatprep.subr.bf16.mxu0 0
    %2463 = vmatpush1.bf16.msra.mxu0 0
    %2464 = vmatprep.subr.bf16.mxu0 0
    %2465 = vmatpush1.bf16.msra.mxu0 0
    %2466 = vmatprep.subr.bf16.mxu0 0
    %2467 = vmatpush1.bf16.msra.mxu0 0
    %2468 = vmatprep.subr.bf16.mxu0 0
    %2469 = vmatpush1.bf16.msra.mxu0 0
    %2470 = vmatprep.mubr.bf16.mxu0 0
    %2471 = vmatmul.mubr.bf16.gmra.mrb[0].mxu0 %v2376
    %v2472 = vpop.f32.mrb[0].mxu0
    %v2473 = vadd.f32 %v2421, %v2472
    %v2474 = vpop.f32.mrb[0].mxu0
    %v2475 = vadd.f32 %v2425, %v2474
    %v2476 = vpop.f32.mrb[0].mxu0
    %v2477 = vadd.f32 %v2421, %v2476
    %v2478 = vpop.f32.mrb[0].mxu0
    %v2479 = vadd.f32 %v2425, %v2478
    %2480 = vmatprep.mubr.bf16.mxu0 0
    %2481 = vmatmul.mubr.bf16.gmra.mrb[0].mxu0 %v2377
    %v2482 = vpop.f32.mrb[0].mxu0
    %v2483 = vadd.f32 %v2421, %v2482
    %v2484 = vpop.f32.mrb[0].mxu0
    %v2485 = vadd.f32 %v2425, %v2484
    %v2486 = vpop.f32.mrb[0].mxu0
    %v2487 = vadd.f32 %v2421, %v2486
    %v2488 = vpop.f32.mrb[0].mxu0
    %v2489 = vadd.f32 %v2425, %v2488
    %2490 = vmatprep.mubr.bf16.mxu0 0
    %2491 = vmatmul.mubr.bf16.gmra.mrb[0].mxu0 %v2378
    %v2492 = vpop.f32.mrb[0].mxu0
    %v2493 = vadd.f32 %v2421, %v2492
    %v2494 = vpop.f32.mrb[0].mxu0
    %v2495 = vadd.f32 %v2425, %v2494
    %v2496 = vpop.f32.mrb[0].mxu0
    %v2497 = vadd.f32 %v2421, %v2496
    %v2498 = vpop.f32.mrb[0].mxu0
    %v2499 = vadd.f32 %v2425, %v2498
    %2500 = vmatprep.mubr.bf16.mxu0 0
    %2501 = vmatmul.mubr.bf16.gmra.mrb[0].mxu0 %v2379
    %v2502 = vpop.f32.mrb[0].mxu0
    %v2503 = vadd.f32 %v2421, %v2502
    %v2504 = vpop.f32.mrb[0].mxu0
    %v2505 = vadd.f32 %v2425, %v2504
    %v2506 = vpop.f32.mrb[0].mxu0
    %v2507 = vadd.f32 %v2421, %v2506
    %v2508 = vpop.f32.mrb[0].mxu0
    %v2509 = vadd.f32 %v2425, %v2508
    %2510 = vmatprep.mubr.bf16.mxu0 0
    %2511 = vmatmul.mubr.bf16.gmra.mrb[0].mxu0 %v2380
    %v2512 = vpop.f32.mrb[0].mxu0
    %v2513 = vadd.f32 %v2421, %v2512
    %v2514 = vpop.f32.mrb[0].mxu0
    %v2515 = vadd.f32 %v2425, %v2514
    %v2516 = vpop.f32.mrb[0].mxu0
    %v2517 = vadd.f32 %v2421, %v2516
    %v2518 = vpop.f32.mrb[0].mxu0
    %v2519 = vadd.f32 %v2425, %v2518
    %2520 = vmatprep.mubr.bf16.mxu0 0
    %2521 = vmatmul.mubr.bf16.gmra.mrb[0].mxu0 %v2381
    %v2522 = vpop.f32.mrb[0].mxu0
    %v2523 = vadd.f32 %v2421, %v2522
    %v2524 = vpop.f32.mrb[0].mxu0
    %v2525 = vadd.f32 %v2425, %v2524
    %v2526 = vpop.f32.mrb[0].mxu0
    %v2527 = vadd.f32 %v2421, %v2526
    %v2528 = vpop.f32.mrb[0].mxu0
    %v2529 = vadd.f32 %v2425, %v2528
    %2530 = vmatprep.mubr.bf16.mxu0 0
    %2531 = vmatmul.mubr.bf16.gmra.mrb[0].mxu0 %v2382
    %v2532 = vpop.f32.mrb[0].mxu0
    %v2533 = vadd.f32 %v2421, %v2532
    %v2534 = vpop.f32.mrb[0].mxu0
    %v2535 = vadd.f32 %v2425, %v2534
    %v2536 = vpop.f32.mrb[0].mxu0
    %v2537 = vadd.f32 %v2421, %v2536
    %v2538 = vpop.f32.mrb[0].mxu0
    %v2539 = vadd.f32 %v2425, %v2538
    %2540 = vmatprep.mubr.bf16.mxu0 0
    %2541 = vmatmul.mubr.bf16.gmra.mrb[0].mxu0 %v2383
    %v2542 = vpop.f32.mrb[0].mxu0
    %v2543 = vadd.f32 %v2421, %v2542
    %v2544 = vpop.f32.mrb[0].mxu0
    %v2545 = vadd.f32 %v2425, %v2544
    %v2546 = vpop.f32.mrb[0].mxu0
    %v2547 = vadd.f32 %v2421, %v2546
    %v2548 = vpop.f32.mrb[0].mxu0
    %v2549 = vadd.f32 %v2425, %v2548
    %2550 = vdwg.mxu0
    %2551 = vmatprep.subr.bf16.mxu0 %v2387
    %2552 = vmatpush1.bf16.msra.mxu0 %v2386
    %2553 = vmatprep.subr.bf16.mxu0 %v2391
    %2554 = vmatpush1.bf16.msra.mxu0 %v2390
    %2555 = vmatprep.subr.bf16.mxu0 %v2395
    %2556 = vmatpush1.bf16.msra.mxu0 %v2394
    %2557 = vmatprep.subr.bf16.mxu0 %v2399
    %2558 = vmatpush1.bf16.msra.mxu0 %v2398
    %2559 = vmatprep.subr.bf16.mxu0 %v2403
    %2560 = vmatpush1.bf16.msra.mxu0 %v2402
    %2561 = vmatprep.subr.bf16.mxu0 %v2407
    %2562 = vmatpush1.bf16.msra.mxu0 %v2406
    %2563 = vmatprep.subr.bf16.mxu0 %v2411
    %2564 = vmatpush1.bf16.msra.mxu0 %v2410
    %2565 = vmatprep.subr.bf16.mxu0 %v2415
    %2566 = vmatpush1.bf16.msra.mxu0 %v2414
    %2567 = vmatprep.subr.bf16.mxu0 0
    %2568 = vmatpush1.bf16.msra.mxu0 0
    %2569 = vmatprep.subr.bf16.mxu0 0
    %2570 = vmatpush1.bf16.msra.mxu0 0
    %2571 = vmatprep.subr.bf16.mxu0 0
    %2572 = vmatpush1.bf16.msra.mxu0 0
    %2573 = vmatprep.subr.bf16.mxu0 0
    %2574 = vmatpush1.bf16.msra.mxu0 0
    %2575 = vmatprep.subr.bf16.mxu0 0
    %2576 = vmatpush1.bf16.msra.mxu0 0
    %2577 = vmatprep.subr.bf16.mxu0 0
    %2578 = vmatpush1.bf16.msra.mxu0 0
    %2579 = vmatprep.subr.bf16.mxu0 0
    %2580 = vmatpush1.bf16.msra.mxu0 0
    %2581 = vmatprep.subr.bf16.mxu0 0
    %2582 = vmatpush1.bf16.msra.mxu0 0
    %2583 = vmatprep.mubr.bf16.mxu0 0
    %2584 = vmatmul.mubr.bf16.gmra.mrb[0].mxu0 %v2376
    %v2585 = vpop.f32.mrb[0].mxu0
    %v2586 = vadd.f32 %v2429, %v2585
    %v2587 = vpop.f32.mrb[0].mxu0
    %v2588 = vadd.f32 %v2433, %v2587
    %v2589 = vpop.f32.mrb[0].mxu0
    %v2590 = vadd.f32 %v2429, %v2589
    %v2591 = vpop.f32.mrb[0].mxu0
    %v2592 = vadd.f32 %v2433, %v2591
    %2593 = vmatprep.mubr.bf16.mxu0 0
    %2594 = vmatmul.mubr.bf16.gmra.mrb[0].mxu0 %v2377
    %v2595 = vpop.f32.mrb[0].mxu0
    %v2596 = vadd.f32 %v2429, %v2595
    %v2597 = vpop.f32.mrb[0].mxu0
    %v2598 = vadd.f32 %v2433, %v2597
    %v2599 = vpop.f32.mrb[0].mxu0
    %v2600 = vadd.f32 %v2429, %v2599
    %v2601 = vpop.f32.mrb[0].mxu0
    %v2602 = vadd.f32 %v2433, %v2601
    %2603 = vmatprep.mubr.bf16.mxu0 0
    %2604 = vmatmul.mubr.bf16.gmra.mrb[0].mxu0 %v2378
    %v2605 = vpop.f32.mrb[0].mxu0
    %v2606 = vadd.f32 %v2429, %v2605
    %v2607 = vpop.f32.mrb[0].mxu0
    %v2608 = vadd.f32 %v2433, %v2607
    %v2609 = vpop.f32.mrb[0].mxu0
    %v2610 = vadd.f32 %v2429, %v2609
    %v2611 = vpop.f32.mrb[0].mxu0
    %v2612 = vadd.f32 %v2433, %v2611
    %2613 = vmatprep.mubr.bf16.mxu0 0
    %2614 = vmatmul.mubr.bf16.gmra.mrb[0].mxu0 %v2379
    %v2615 = vpop.f32.mrb[0].mxu0
    %v2616 = vadd.f32 %v2429, %v2615
    %v2617 = vpop.f32.mrb[0].mxu0
    %v2618 = vadd.f32 %v2433, %v2617
    %v2619 = vpop.f32.mrb[0].mxu0
    %v2620 = vadd.f32 %v2429, %v2619
    %v2621 = vpop.f32.mrb[0].mxu0
    %v2622 = vadd.f32 %v2433, %v2621
    %2623 = vmatprep.mubr.bf16.mxu0 0
    %2624 = vmatmul.mubr.bf16.gmra.mrb[0].mxu0 %v2380
    %v2625 = vpop.f32.mrb[0].mxu0
    %v2626 = vadd.f32 %v2429, %v2625
    %v2627 = vpop.f32.mrb[0].mxu0
    %v2628 = vadd.f32 %v2433, %v2627
    %v2629 = vpop.f32.mrb[0].mxu0
    %v2630 = vadd.f32 %v2429, %v2629
    %v2631 = vpop.f32.mrb[0].mxu0
    %v2632 = vadd.f32 %v2433, %v2631
    %2633 = vmatprep.mubr.bf16.mxu0 0
    %2634 = vmatmul.mubr.bf16.gmra.mrb[0].mxu0 %v2381
    %v2635 = vpop.f32.mrb[0].mxu0
    %v2636 = vadd.f32 %v2429, %v2635
    %v2637 = vpop.f32.mrb[0].mxu0
    %v2638 = vadd.f32 %v2433, %v2637
    %v2639 = vpop.f32.mrb[0].mxu0
    %v2640 = vadd.f32 %v2429, %v2639
    %v2641 = vpop.f32.mrb[0].mxu0
    %v2642 = vadd.f32 %v2433, %v2641
    %2643 = vmatprep.mubr.bf16.mxu0 0
    %2644 = vmatmul.mubr.bf16.gmra.mrb[0].mxu0 %v2382
    %v2645 = vpop.f32.mrb[0].mxu0
    %v2646 = vadd.f32 %v2429, %v2645
    %v2647 = vpop.f32.mrb[0].mxu0
    %v2648 = vadd.f32 %v2433, %v2647
    %v2649 = vpop.f32.mrb[0].mxu0
    %v2650 = vadd.f32 %v2429, %v2649
    %v2651 = vpop.f32.mrb[0].mxu0
    %v2652 = vadd.f32 %v2433, %v2651
    %2653 = vmatprep.mubr.bf16.mxu0 0
    %2654 = vmatmul.mubr.bf16.gmra.mrb[0].mxu0 %v2383
    %v2655 = vpop.f32.mrb[0].mxu0
    %v2656 = vadd.f32 %v2429, %v2655
    %v2657 = vpop.f32.mrb[0].mxu0
    %v2658 = vadd.f32 %v2433, %v2657
    %v2659 = vpop.f32.mrb[0].mxu0
    %v2660 = vadd.f32 %v2429, %v2659
    %v2661 = vpop.f32.mrb[0].mxu0
    %v2662 = vadd.f32 %v2433, %v2661
    %2663 = vdwg.mxu0
    %2664 = vst [vmem:[#allocation4] sm:$0xff] %v2473
    %2665 = vst [vmem:[#allocation4 + $0x8] sm:$0xff] %v2475
    %2666 = vst [vmem:[#allocation4 + $0x10] sm:$0xff] %v2586
    %2667 = vst [vmem:[#allocation4 + $0x18] sm:$0xff] %v2588
    %2668 = vst [vmem:[#allocation4 + $0x20] sm:$0xff] %v2477
    %2669 = vst [vmem:[#allocation4 + $0x28] sm:$0xff] %v2479
    %2670 = vst [vmem:[#allocation4 + $0x30] sm:$0xff] %v2590
    %2671 = vst [vmem:[#allocation4 + $0x38] sm:$0xff] %v2592
    %2672 = vst [vmem:[#allocation4 + $0x40] sm:$0xff] %v2483
    %2673 = vst [vmem:[#allocation4 + $0x48] sm:$0xff] %v2485
    %2674 = vst [vmem:[#allocation4 + $0x50] sm:$0xff] %v2596
    %2675 = vst [vmem:[#allocation4 + $0x58] sm:$0xff] %v2598
    %2676 = vst [vmem:[#allocation4 + $0x60] sm:$0xff] %v2487
    %2677 = vst [vmem:[#allocation4 + $0x68] sm:$0xff] %v2489
    %2678 = vst [vmem:[#allocation4 + $0x70] sm:$0xff] %v2600
    %2679 = vst [vmem:[#allocation4 + $0x78] sm:$0xff] %v2602
    %2680 = vst [vmem:[#allocation4 + $0x80] sm:$0xff] %v2493
    %2681 = vst [vmem:[#allocation4 + $0x88] sm:$0xff] %v2495
    %2682 = vst [vmem:[#allocation4 + $0x90] sm:$0xff] %v2606
    %2683 = vst [vmem:[#allocation4 + $0x98] sm:$0xff] %v2608
    %2684 = vst [vmem:[#allocation4 + $0xa0] sm:$0xff] %v2497
    %2685 = vst [vmem:[#allocation4 + $0xa8] sm:$0xff] %v2499
    %2686 = vst [vmem:[#allocation4 + $0xb0] sm:$0xff] %v2610
    %2687 = vst [vmem:[#allocation4 + $0xb8] sm:$0xff] %v2612
    %2688 = vst [vmem:[#allocation4 + $0xc0] sm:$0xff] %v2503
    %2689 = vst [vmem:[#allocation4 + $0xc8] sm:$0xff] %v2505
    %2690 = vst [vmem:[#allocation4 + $0xd0] sm:$0xff] %v2616
    %2691 = vst [vmem:[#allocation4 + $0xd8] sm:$0xff] %v2618
    %2692 = vst [vmem:[#allocation4 + $0xe0] sm:$0xff] %v2507
    %2693 = vst [vmem:[#allocation4 + $0xe8] sm:$0xff] %v2509
    %2694 = vst [vmem:[#allocation4 + $0xf0] sm:$0xff] %v2620
    %2695 = vst [vmem:[#allocation4 + $0xf8] sm:$0xff] %v2622
    %2696 = vst [vmem:[#allocation4 + $0x100] sm:$0xff] %v2513
    %2697 = vst [vmem:[#allocation4 + $0x108] sm:$0xff] %v2515
    %2698 = vst [vmem:[#allocation4 + $0x110] sm:$0xff] %v2626
    %2699 = vst [vmem:[#allocation4 + $0x118] sm:$0xff] %v2628
    %2700 = vst [vmem:[#allocation4 + $0x120] sm:$0xff] %v2517
    %2701 = vst [vmem:[#allocation4 + $0x128] sm:$0xff] %v2519
    %2702 = vst [vmem:[#allocation4 + $0x130] sm:$0xff] %v2630
    %2703 = vst [vmem:[#allocation4 + $0x138] sm:$0xff] %v2632
    %2704 = vst [vmem:[#allocation4 + $0x140] sm:$0xff] %v2523
    %2705 = vst [vmem:[#allocation4 + $0x148] sm:$0xff] %v2525
    %2706 = vst [vmem:[#allocation4 + $0x150] sm:$0xff] %v2636
    %2707 = vst [vmem:[#allocation4 + $0x158] sm:$0xff] %v2638
    %2708 = vst [vmem:[#allocation4 + $0x160] sm:$0xff] %v2527
    %2709 = vst [vmem:[#allocation4 + $0x168] sm:$0xff] %v2529
    %2710 = vst [vmem:[#allocation4 + $0x170] sm:$0xff] %v2640
    %2711 = vst [vmem:[#allocation4 + $0x178] sm:$0xff] %v2642
    %2712 = vst [vmem:[#allocation4 + $0x180] sm:$0xff] %v2533
    %2713 = vst [vmem:[#allocation4 + $0x188] sm:$0xff] %v2535
    %2714 = vst [vmem:[#allocation4 + $0x190] sm:$0xff] %v2646
    %2715 = vst [vmem:[#allocation4 + $0x198] sm:$0xff] %v2648
    %2716 = vst [vmem:[#allocation4 + $0x1a0] sm:$0xff] %v2537
    %2717 = vst [vmem:[#allocation4 + $0x1a8] sm:$0xff] %v2539
    %2718 = vst [vmem:[#allocation4 + $0x1b0] sm:$0xff] %v2650
    %2719 = vst [vmem:[#allocation4 + $0x1b8] sm:$0xff] %v2652
    %2720 = vst [vmem:[#allocation4 + $0x1c0] sm:$0xff] %v2543
    %2721 = vst [vmem:[#allocation4 + $0x1c8] sm:$0xff] %v2545
    %2722 = vst [vmem:[#allocation4 + $0x1d0] sm:$0xff] %v2656
    %2723 = vst [vmem:[#allocation4 + $0x1d8] sm:$0xff] %v2658
    %2724 = vst [vmem:[#allocation4 + $0x1e0] sm:$0xff] %v2547
    %2725 = vst [vmem:[#allocation4 + $0x1e8] sm:$0xff] %v2549
    %2726 = vst [vmem:[#allocation4 + $0x1f0] sm:$0xff] %v2660
    %2727 = vst [vmem:[#allocation4 + $0x1f8] sm:$0xff] %v2662
    %v2728 = vld [vmem:[%s838] sm:$0xff]
    %v2729 = vld [vmem:[%s838 + $0x8] sm:$0xff]
    %v2730 = vld [vmem:[%s838 + $0x10] sm:$0xff]
    %v2731 = vld [vmem:[%s838 + $0x18] sm:$0xff]
    %v2732 = vld [vmem:[%s838 + $0x20] sm:$0xff]
    %v2733 = vld [vmem:[%s838 + $0x28] sm:$0xff]
    %v2734 = vld [vmem:[%s838 + $0x30] sm:$0xff]
    %v2735 = vld [vmem:[%s838 + $0x38] sm:$0xff]
    %v2736 = vld [vmem:[%s403] sm:$0xff]
    %v2737 = vld [vmem:[%s403 + $0x8] sm:$0xff]
    %v2738 = vld [vmem:[%s403 + $0x10] sm:$0xff]
    %v2739 = vld [vmem:[%s403 + $0x18] sm:$0xff]
    %v2740 = vld [vmem:[%s403 + $0x20] sm:$0xff]
    %v2741 = vld [vmem:[%s403 + $0x28] sm:$0xff]
    %v2742 = vld [vmem:[%s403 + $0x30] sm:$0xff]
    %v2743 = vld [vmem:[%s403 + $0x38] sm:$0xff]
    %v2744 = vld [vmem:[%s403 + $0x40] sm:$0xff]
    %v2745 = vld [vmem:[%s403 + $0x48] sm:$0xff]
    %v2746 = vld [vmem:[%s403 + $0x50] sm:$0xff]
    %v2747 = vld [vmem:[%s403 + $0x58] sm:$0xff]
    %v2748 = vld [vmem:[%s403 + $0x60] sm:$0xff]
    %v2749 = vld [vmem:[%s403 + $0x68] sm:$0xff]
    %v2750 = vld [vmem:[%s403 + $0x70] sm:$0xff]
    %v2751 = vld [vmem:[%s403 + $0x78] sm:$0xff]
    %v2752 = vld [vmem:[%s403 + $0x80] sm:$0xff]
    %v2753 = vld [vmem:[%s403 + $0x88] sm:$0xff]
    %v2754 = vld [vmem:[%s403 + $0x90] sm:$0xff]
    %v2755 = vld [vmem:[%s403 + $0x98] sm:$0xff]
    %v2756 = vld [vmem:[%s403 + $0xa0] sm:$0xff]
    %v2757 = vld [vmem:[%s403 + $0xa8] sm:$0xff]
    %v2758 = vld [vmem:[%s403 + $0xb0] sm:$0xff]
    %v2759 = vld [vmem:[%s403 + $0xb8] sm:$0xff]
    %v2760 = vld [vmem:[%s403 + $0xc0] sm:$0xff]
    %v2761 = vld [vmem:[%s403 + $0xc8] sm:$0xff]
    %v2762 = vld [vmem:[%s403 + $0xd0] sm:$0xff]
    %v2763 = vld [vmem:[%s403 + $0xd8] sm:$0xff]
    %v2764 = vld [vmem:[%s403 + $0xe0] sm:$0xff]
    %v2765 = vld [vmem:[%s403 + $0xe8] sm:$0xff]
    %v2766 = vld [vmem:[%s403 + $0xf0] sm:$0xff]
    %v2767 = vld [vmem:[%s403 + $0xf8] sm:$0xff]
    %2768 = vmatprep.subr.bf16.mxu0 %v2737
    %2769 = vmatpush1.bf16.msra.mxu0 %v2736
    %2770 = vmatprep.subr.bf16.mxu0 %v2741
    %2771 = vmatpush1.bf16.msra.mxu0 %v2740
    %2772 = vmatprep.subr.bf16.mxu0 %v2745
    %2773 = vmatpush1.bf16.msra.mxu0 %v2744
    %2774 = vmatprep.subr.bf16.mxu0 %v2749
    %2775 = vmatpush1.bf16.msra.mxu0 %v2748
    %2776 = vmatprep.subr.bf16.mxu0 %v2753
    %2777 = vmatpush1.bf16.msra.mxu0 %v2752
    %2778 = vmatprep.subr.bf16.mxu0 %v2757
    %2779 = vmatpush1.bf16.msra.mxu0 %v2756
    %2780 = vmatprep.subr.bf16.mxu0 %v2761
    %2781 = vmatpush1.bf16.msra.mxu0 %v2760
    %2782 = vmatprep.subr.bf16.mxu0 %v2765
    %2783 = vmatpush1.bf16.msra.mxu0 %v2764
    %2784 = vmatprep.subr.bf16.mxu0 0
    %2785 = vmatpush1.bf16.msra.mxu0 0
    %2786 = vmatprep.subr.bf16.mxu0 0
    %2787 = vmatpush1.bf16.msra.mxu0 0
    %2788 = vmatprep.subr.bf16.mxu0 0
    %2789 = vmatpush1.bf16.msra.mxu0 0
    %2790 = vmatprep.subr.bf16.mxu0 0
    %2791 = vmatpush1.bf16.msra.mxu0 0
    %2792 = vmatprep.subr.bf16.mxu0 0
    %2793 = vmatpush1.bf16.msra.mxu0 0
    %2794 = vmatprep.subr.bf16.mxu0 0
    %2795 = vmatpush1.bf16.msra.mxu0 0
    %2796 = vmatprep.subr.bf16.mxu0 0
    %2797 = vmatpush1.bf16.msra.mxu0 0
    %2798 = vmatprep.subr.bf16.mxu0 0
    %2799 = vmatpush1.bf16.msra.mxu0 0
    %2800 = vmatprep.mubr.bf16.mxu0 0
    %2801 = vmatmul.mubr.bf16.gmra.mrb[0].mxu0 0
    %v2802 = vpop.f32.mrb[0].mxu0
    %v2803 = vadd.f32 0.0, %v2802
    %v2804 = vpop.f32.mrb[0].mxu0
    %v2805 = vadd.f32 0.0, %v2804
    %v2806 = vpop.f32.mrb[0].mxu0
    %v2807 = vadd.f32 0.0, %v2806
    %v2808 = vpop.f32.mrb[0].mxu0
    %v2809 = vadd.f32 0.0, %v2808
    %2810 = vdwg.mxu0
    %2811 = vmatprep.subr.bf16.mxu0 %v2739
    %2812 = vmatpush1.bf16.msra.mxu0 %v2738
    %2813 = vmatprep.subr.bf16.mxu0 %v2743
    %2814 = vmatpush1.bf16.msra.mxu0 %v2742
    %2815 = vmatprep.subr.bf16.mxu0 %v2747
    %2816 = vmatpush1.bf16.msra.mxu0 %v2746
    %2817 = vmatprep.subr.bf16.mxu0 %v2751
    %2818 = vmatpush1.bf16.msra.mxu0 %v2750
    %2819 = vmatprep.subr.bf16.mxu0 %v2755
    %2820 = vmatpush1.bf16.msra.mxu0 %v2754
    %2821 = vmatprep.subr.bf16.mxu0 %v2759
    %2822 = vmatpush1.bf16.msra.mxu0 %v2758
    %2823 = vmatprep.subr.bf16.mxu0 %v2763
    %2824 = vmatpush1.bf16.msra.mxu0 %v2762
    %2825 = vmatprep.subr.bf16.mxu0 %v2767
    %2826 = vmatpush1.bf16.msra.mxu0 %v2766
    %2827 = vmatprep.subr.bf16.mxu0 0
    %2828 = vmatpush1.bf16.msra.mxu0 0
    %2829 = vmatprep.subr.bf16.mxu0 0
    %2830 = vmatpush1.bf16.msra.mxu0 0
    %2831 = vmatprep.subr.bf16.mxu0 0
    %2832 = vmatpush1.bf16.msra.mxu0 0
    %2833 = vmatprep.subr.bf16.mxu0 0
    %2834 = vmatpush1.bf16.msra.mxu0 0
    %2835 = vmatprep.subr.bf16.mxu0 0
    %2836 = vmatpush1.bf16.msra.mxu0 0
    %2837 = vmatprep.subr.bf16.mxu0 0
    %2838 = vmatpush1.bf16.msra.mxu0 0
    %2839 = vmatprep.subr.bf16.mxu0 0
    %2840 = vmatpush1.bf16.msra.mxu0 0
    %2841 = vmatprep.subr.bf16.mxu0 0
    %2842 = vmatpush1.bf16.msra.mxu0 0
    %2843 = vmatprep.mubr.bf16.mxu0 0
    %2844 = vmatmul.mubr.bf16.gmra.mrb[0].mxu0 0
    %v2845 = vpop.f32.mrb[0].mxu0
    %v2846 = vadd.f32 0.0, %v2845
    %v2847 = vpop.f32.mrb[0].mxu0
    %v2848 = vadd.f32 0.0, %v2847
    %v2849 = vpop.f32.mrb[0].mxu0
    %v2850 = vadd.f32 0.0, %v2849
    %v2851 = vpop.f32.mrb[0].mxu0
    %v2852 = vadd.f32 0.0, %v2851
    %2853 = vdwg.mxu0
    %v2854 = vadd.f32 %v2728, %v2803
    %v2855 = vadd.f32 %v2729, %v2805
    %v2856 = vadd.f32 %v2730, %v2846
    %v2857 = vadd.f32 %v2731, %v2848
    %v2858 = vadd.f32 %v2732, %v2807
    %v2859 = vadd.f32 %v2733, %v2809
    %v2860 = vadd.f32 %v2734, %v2850
    %v2861 = vadd.f32 %v2735, %v2852
    %v2862 = vxor.u32 %v2854, 2147483648
    %v2863 = vxor.u32 %v2858, 2147483648
    %v2864 = vmul.f32 %v2862, 1.442695
    %v2865 = vpow.pop %v2864
    %v2866 = vmul.f32 %v2863, 1.442695
    %v2867 = vpow.pop %v2866
    %v2868 = vadd.f32 %v2865, 1.0
    %v2869 = vadd.f32 %v2867, 1.0
    %v2870 = vrcp.pop %v2868
    %v2871 = vmul.f32 1.0, %v2870
    %v2872 = vrcp.pop %v2869
    %v2873 = vmul.f32 1.0, %v2872
    %v2874 = vxor.u32 %v2855, 2147483648
    %v2875 = vxor.u32 %v2859, 2147483648
    %v2876 = vmul.f32 %v2874, 1.442695
    %v2877 = vpow.pop %v2876
    %v2878 = vmul.f32 %v2875, 1.442695
    %v2879 = vpow.pop %v2878
    %v2880 = vadd.f32 %v2877, 1.0
    %v2881 = vadd.f32 %v2879, 1.0
    %v2882 = vrcp.pop %v2880
    %v2883 = vmul.f32 1.0, %v2882
    %v2884 = vrcp.pop %v2881
    %v2885 = vmul.f32 1.0, %v2884
    %v2886 = vtanh.pop %v2856
    %v2887 = vtanh.pop %v2860
    %v2888 = vxor.u32 %v2857, 2147483648
    %v2889 = vxor.u32 %v2861, 2147483648
    %v2890 = vmul.f32 %v2888, 1.442695
    %v2891 = vpow.pop %v2890
    %v2892 = vmul.f32 %v2889, 1.442695
    %v2893 = vpow.pop %v2892
    %v2894 = vadd.f32 %v2891, 1.0
    %v2895 = vadd.f32 %v2893, 1.0
    %v2896 = vrcp.pop %v2894
    %v2897 = vmul.f32 1.0, %v2896
    %v2898 = vrcp.pop %v2895
    %v2899 = vmul.f32 1.0, %v2898
    %v2900 = vmul.f32 %v2883, 0.0
    %v2901 = vmul.f32 %v2885, 0.0
    %v2902 = vmul.f32 %v2871, %v2886
    %v2903 = vmul.f32 %v2873, %v2887
    %v2904 = vadd.f32 %v2900, %v2902
    %v2905 = vadd.f32 %v2901, %v2903
    %v2906 = vtanh.pop %v2904
    %v2907 = vtanh.pop %v2905
    %v2908 = vmul.f32 %v2897, %v2906
    %v2909 = vmul.f32 %v2899, %v2907
    %v2910 = vld [vmem:[%s1030] sm:$0xff]
    %v2911 = vld [vmem:[%s1030 + $0x8] sm:$0xff]
    %v2912 = vld [vmem:[%s1030 + $0x10] sm:$0xff]
    %v2913 = vld [vmem:[%s1030 + $0x18] sm:$0xff]
    %v2914 = vld [vmem:[%s1030 + $0x20] sm:$0xff]
    %v2915 = vld [vmem:[%s1030 + $0x28] sm:$0xff]
    %v2916 = vld [vmem:[%s1030 + $0x30] sm:$0xff]
    %v2917 = vld [vmem:[%s1030 + $0x38] sm:$0xff]
    %v2918 = vpack.c.bf16 %v2909, %v2908
    %2919 = vmatprep.subr.bf16.mxu0 %v2737
    %2920 = vmatpush1.bf16.msra.mxu0 %v2736
    %2921 = vmatprep.subr.bf16.mxu0 %v2741
    %2922 = vmatpush1.bf16.msra.mxu0 %v2740
    %2923 = vmatprep.subr.bf16.mxu0 %v2745
    %2924 = vmatpush1.bf16.msra.mxu0 %v2744
    %2925 = vmatprep.subr.bf16.mxu0 %v2749
    %2926 = vmatpush1.bf16.msra.mxu0 %v2748
    %2927 = vmatprep.subr.bf16.mxu0 %v2753
    %2928 = vmatpush1.bf16.msra.mxu0 %v2752
    %2929 = vmatprep.subr.bf16.mxu0 %v2757
    %2930 = vmatpush1.bf16.msra.mxu0 %v2756
    %2931 = vmatprep.subr.bf16.mxu0 %v2761
    %2932 = vmatpush1.bf16.msra.mxu0 %v2760
    %2933 = vmatprep.subr.bf16.mxu0 %v2765
    %2934 = vmatpush1.bf16.msra.mxu0 %v2764
    %2935 = vmatprep.subr.bf16.mxu0 0
    %2936 = vmatpush1.bf16.msra.mxu0 0
    %2937 = vmatprep.subr.bf16.mxu0 0
    %2938 = vmatpush1.bf16.msra.mxu0 0
    %2939 = vmatprep.subr.bf16.mxu0 0
    %2940 = vmatpush1.bf16.msra.mxu0 0
    %2941 = vmatprep.subr.bf16.mxu0 0
    %2942 = vmatpush1.bf16.msra.mxu0 0
    %2943 = vmatprep.subr.bf16.mxu0 0
    %2944 = vmatpush1.bf16.msra.mxu0 0
    %2945 = vmatprep.subr.bf16.mxu0 0
    %2946 = vmatpush1.bf16.msra.mxu0 0
    %2947 = vmatprep.subr.bf16.mxu0 0
    %2948 = vmatpush1.bf16.msra.mxu0 0
    %2949 = vmatprep.subr.bf16.mxu0 0
    %2950 = vmatpush1.bf16.msra.mxu0 0
    %2951 = vmatprep.mubr.bf16.mxu0 0
    %2952 = vmatmul.mubr.bf16.gmra.mrb[0].mxu0 %v2918
    %v2953 = vpop.f32.mrb[0].mxu0
    %v2954 = vadd.f32 0.0, %v2953
    %v2955 = vpop.f32.mrb[0].mxu0
    %v2956 = vadd.f32 0.0, %v2955
    %v2957 = vpop.f32.mrb[0].mxu0
    %v2958 = vadd.f32 0.0, %v2957
    %v2959 = vpop.f32.mrb[0].mxu0
    %v2960 = vadd.f32 0.0, %v2959
    %2961 = vdwg.mxu0
    %2962 = vmatprep.subr.bf16.mxu0 %v2739
    %2963 = vmatpush1.bf16.msra.mxu0 %v2738
    %2964 = vmatprep.subr.bf16.mxu0 %v2743
    %2965 = vmatpush1.bf16.msra.mxu0 %v2742
    %2966 = vmatprep.subr.bf16.mxu0 %v2747
    %2967 = vmatpush1.bf16.msra.mxu0 %v2746
    %2968 = vmatprep.subr.bf16.mxu0 %v2751
    %2969 = vmatpush1.bf16.msra.mxu0 %v2750
    %2970 = vmatprep.subr.bf16.mxu0 %v2755
    %2971 = vmatpush1.bf16.msra.mxu0 %v2754
    %2972 = vmatprep.subr.bf16.mxu0 %v2759
    %2973 = vmatpush1.bf16.msra.mxu0 %v2758
    %2974 = vmatprep.subr.bf16.mxu0 %v2763
    %2975 = vmatpush1.bf16.msra.mxu0 %v2762
    %2976 = vmatprep.subr.bf16.mxu0 %v2767
    %2977 = vmatpush1.bf16.msra.mxu0 %v2766
    %2978 = vmatprep.subr.bf16.mxu0 0
    %2979 = vmatpush1.bf16.msra.mxu0 0
    %2980 = vmatprep.subr.bf16.mxu0 0
    %2981 = vmatpush1.bf16.msra.mxu0 0
    %2982 = vmatprep.subr.bf16.mxu0 0
    %2983 = vmatpush1.bf16.msra.mxu0 0
    %2984 = vmatprep.subr.bf16.mxu0 0
    %2985 = vmatpush1.bf16.msra.mxu0 0
    %2986 = vmatprep.subr.bf16.mxu0 0
    %2987 = vmatpush1.bf16.msra.mxu0 0
    %2988 = vmatprep.subr.bf16.mxu0 0
    %2989 = vmatpush1.bf16.msra.mxu0 0
    %2990 = vmatprep.subr.bf16.mxu0 0
    %2991 = vmatpush1.bf16.msra.mxu0 0
    %2992 = vmatprep.subr.bf16.mxu0 0
    %2993 = vmatpush1.bf16.msra.mxu0 0
    %2994 = vmatprep.mubr.bf16.mxu0 0
    %2995 = vmatmul.mubr.bf16.gmra.mrb[0].mxu0 %v2918
    %v2996 = vpop.f32.mrb[0].mxu0
    %v2997 = vadd.f32 0.0, %v2996
    %v2998 = vpop.f32.mrb[0].mxu0
    %v2999 = vadd.f32 0.0, %v2998
    %v3000 = vpop.f32.mrb[0].mxu0
    %v3001 = vadd.f32 0.0, %v3000
    %v3002 = vpop.f32.mrb[0].mxu0
    %v3003 = vadd.f32 0.0, %v3002
    %3004 = vdwg.mxu0
    %v3005 = vadd.f32 %v2910, %v2954
    %v3006 = vadd.f32 %v2911, %v2956
    %v3007 = vadd.f32 %v2912, %v2997
    %v3008 = vadd.f32 %v2913, %v2999
    %v3009 = vadd.f32 %v2914, %v2958
    %v3010 = vadd.f32 %v2915, %v2960
    %v3011 = vadd.f32 %v2916, %v3001
    %v3012 = vadd.f32 %v2917, %v3003
    %v3013 = vxor.u32 %v3005, 2147483648
    %v3014 = vxor.u32 %v3009, 2147483648
    %v3015 = vmul.f32 %v3013, 1.442695
    %v3016 = vpow.pop %v3015
    %v3017 = vmul.f32 %v3014, 1.442695
    %v3018 = vpow.pop %v3017
    %v3019 = vadd.f32 %v3016, 1.0
    %v3020 = vadd.f32 %v3018, 1.0
    %v3021 = vrcp.pop %v3019
    %v3022 = vmul.f32 1.0, %v3021
    %v3023 = vrcp.pop %v3020
    %v3024 = vmul.f32 1.0, %v3023
    %v3025 = vxor.u32 %v3006, 2147483648
    %v3026 = vxor.u32 %v3010, 2147483648
    %v3027 = vmul.f32 %v3025, 1.442695
    %v3028 = vpow.pop %v3027
    %v3029 = vmul.f32 %v3026, 1.442695
    %v3030 = vpow.pop %v3029
    %v3031 = vadd.f32 %v3028, 1.0
    %v3032 = vadd.f32 %v3030, 1.0
    %v3033 = vrcp.pop %v3031
    %v3034 = vmul.f32 1.0, %v3033
    %v3035 = vrcp.pop %v3032
    %v3036 = vmul.f32 1.0, %v3035
    %v3037 = vtanh.pop %v3007
    %v3038 = vtanh.pop %v3011
    %v3039 = vxor.u32 %v3008, 2147483648
    %v3040 = vxor.u32 %v3012, 2147483648
    %v3041 = vmul.f32 %v3039, 1.442695
    %v3042 = vpow.pop %v3041
    %v3043 = vmul.f32 %v3040, 1.442695
    %v3044 = vpow.pop %v3043
    %v3045 = vadd.f32 %v3042, 1.0
    %v3046 = vadd.f32 %v3044, 1.0
    %v3047 = vrcp.pop %v3045
    %v3048 = vmul.f32 1.0, %v3047
    %v3049 = vrcp.pop %v3046
    %v3050 = vmul.f32 1.0, %v3049
    %v3051 = vmul.f32 %v3034, %v2904
    %v3052 = vmul.f32 %v3036, %v2905
    %v3053 = vmul.f32 %v3022, %v3037
    %v3054 = vmul.f32 %v3024, %v3038
    %v3055 = vadd.f32 %v3051, %v3053
    %v3056 = vadd.f32 %v3052, %v3054
    %v3057 = vtanh.pop %v3055
    %v3058 = vtanh.pop %v3056
    %v3059 = vmul.f32 %v3048, %v3057
    %v3060 = vmul.f32 %v3050, %v3058
    %v3061 = vld [vmem:[%s1222] sm:$0xff]
    %v3062 = vld [vmem:[%s1222 + $0x8] sm:$0xff]
    %v3063 = vld [vmem:[%s1222 + $0x10] sm:$0xff]
    %v3064 = vld [vmem:[%s1222 + $0x18] sm:$0xff]
    %v3065 = vld [vmem:[%s1222 + $0x20] sm:$0xff]
    %v3066 = vld [vmem:[%s1222 + $0x28] sm:$0xff]
    %v3067 = vld [vmem:[%s1222 + $0x30] sm:$0xff]
    %v3068 = vld [vmem:[%s1222 + $0x38] sm:$0xff]
    %v3069 = vpack.c.bf16 %v3060, %v3059
    %3070 = vmatprep.subr.bf16.mxu0 %v2737
    %3071 = vmatpush1.bf16.msra.mxu0 %v2736
    %3072 = vmatprep.subr.bf16.mxu0 %v2741
    %3073 = vmatpush1.bf16.msra.mxu0 %v2740
    %3074 = vmatprep.subr.bf16.mxu0 %v2745
    %3075 = vmatpush1.bf16.msra.mxu0 %v2744
    %3076 = vmatprep.subr.bf16.mxu0 %v2749
    %3077 = vmatpush1.bf16.msra.mxu0 %v2748
    %3078 = vmatprep.subr.bf16.mxu0 %v2753
    %3079 = vmatpush1.bf16.msra.mxu0 %v2752
    %3080 = vmatprep.subr.bf16.mxu0 %v2757
    %3081 = vmatpush1.bf16.msra.mxu0 %v2756
    %3082 = vmatprep.subr.bf16.mxu0 %v2761
    %3083 = vmatpush1.bf16.msra.mxu0 %v2760
    %3084 = vmatprep.subr.bf16.mxu0 %v2765
    %3085 = vmatpush1.bf16.msra.mxu0 %v2764
    %3086 = vmatprep.subr.bf16.mxu0 0
    %3087 = vmatpush1.bf16.msra.mxu0 0
    %3088 = vmatprep.subr.bf16.mxu0 0
    %3089 = vmatpush1.bf16.msra.mxu0 0
    %3090 = vmatprep.subr.bf16.mxu0 0
    %3091 = vmatpush1.bf16.msra.mxu0 0
    %3092 = vmatprep.subr.bf16.mxu0 0
    %3093 = vmatpush1.bf16.msra.mxu0 0
    %3094 = vmatprep.subr.bf16.mxu0 0
    %3095 = vmatpush1.bf16.msra.mxu0 0
    %3096 = vmatprep.subr.bf16.mxu0 0
    %3097 = vmatpush1.bf16.msra.mxu0 0
    %3098 = vmatprep.subr.bf16.mxu0 0
    %3099 = vmatpush1.bf16.msra.mxu0 0
    %3100 = vmatprep.subr.bf16.mxu0 0
    %3101 = vmatpush1.bf16.msra.mxu0 0
    %3102 = vmatprep.mubr.bf16.mxu0 0
    %3103 = vmatmul.mubr.bf16.gmra.mrb[0].mxu0 %v3069
    %v3104 = vpop.f32.mrb[0].mxu0
    %v3105 = vadd.f32 0.0, %v3104
    %v3106 = vpop.f32.mrb[0].mxu0
    %v3107 = vadd.f32 0.0, %v3106
    %v3108 = vpop.f32.mrb[0].mxu0
    %v3109 = vadd.f32 0.0, %v3108
    %v3110 = vpop.f32.mrb[0].mxu0
    %v3111 = vadd.f32 0.0, %v3110
    %3112 = vdwg.mxu0
    %3113 = vmatprep.subr.bf16.mxu0 %v2739
    %3114 = vmatpush1.bf16.msra.mxu0 %v2738
    %3115 = vmatprep.subr.bf16.mxu0 %v2743
    %3116 = vmatpush1.bf16.msra.mxu0 %v2742
    %3117 = vmatprep.subr.bf16.mxu0 %v2747
    %3118 = vmatpush1.bf16.msra.mxu0 %v2746
    %3119 = vmatprep.subr.bf16.mxu0 %v2751
    %3120 = vmatpush1.bf16.msra.mxu0 %v2750
    %3121 = vmatprep.subr.bf16.mxu0 %v2755
    %3122 = vmatpush1.bf16.msra.mxu0 %v2754
    %3123 = vmatprep.subr.bf16.mxu0 %v2759
    %3124 = vmatpush1.bf16.msra.mxu0 %v2758
    %3125 = vmatprep.subr.bf16.mxu0 %v2763
    %3126 = vmatpush1.bf16.msra.mxu0 %v2762
    %3127 = vmatprep.subr.bf16.mxu0 %v2767
    %3128 = vmatpush1.bf16.msra.mxu0 %v2766
    %3129 = vmatprep.subr.bf16.mxu0 0
    %3130 = vmatpush1.bf16.msra.mxu0 0
    %3131 = vmatprep.subr.bf16.mxu0 0
    %3132 = vmatpush1.bf16.msra.mxu0 0
    %3133 = vmatprep.subr.bf16.mxu0 0
    %3134 = vmatpush1.bf16.msra.mxu0 0
    %3135 = vmatprep.subr.bf16.mxu0 0
    %3136 = vmatpush1.bf16.msra.mxu0 0
    %3137 = vmatprep.subr.bf16.mxu0 0
    %3138 = vmatpush1.bf16.msra.mxu0 0
    %3139 = vmatprep.subr.bf16.mxu0 0
    %3140 = vmatpush1.bf16.msra.mxu0 0
    %3141 = vmatprep.subr.bf16.mxu0 0
    %3142 = vmatpush1.bf16.msra.mxu0 0
    %3143 = vmatprep.subr.bf16.mxu0 0
    %3144 = vmatpush1.bf16.msra.mxu0 0
    %3145 = vmatprep.mubr.bf16.mxu0 0
    %3146 = vmatmul.mubr.bf16.gmra.mrb[0].mxu0 %v3069
    %v3147 = vpop.f32.mrb[0].mxu0
    %v3148 = vadd.f32 0.0, %v3147
    %v3149 = vpop.f32.mrb[0].mxu0
    %v3150 = vadd.f32 0.0, %v3149
    %v3151 = vpop.f32.mrb[0].mxu0
    %v3152 = vadd.f32 0.0, %v3151
    %v3153 = vpop.f32.mrb[0].mxu0
    %v3154 = vadd.f32 0.0, %v3153
    %3155 = vdwg.mxu0
    %v3156 = vadd.f32 %v3061, %v3105
    %v3157 = vadd.f32 %v3062, %v3107
    %v3158 = vadd.f32 %v3063, %v3148
    %v3159 = vadd.f32 %v3064, %v3150
    %v3160 = vadd.f32 %v3065, %v3109
    %v3161 = vadd.f32 %v3066, %v3111
    %v3162 = vadd.f32 %v3067, %v3152
    %v3163 = vadd.f32 %v3068, %v3154
    %v3164 = vxor.u32 %v3156, 2147483648
    %v3165 = vxor.u32 %v3160, 2147483648
    %v3166 = vmul.f32 %v3164, 1.442695
    %v3167 = vpow.pop %v3166
    %v3168 = vmul.f32 %v3165, 1.442695
    %v3169 = vpow.pop %v3168
    %v3170 = vadd.f32 %v3167, 1.0
    %v3171 = vadd.f32 %v3169, 1.0
    %v3172 = vrcp.pop %v3170
    %v3173 = vmul.f32 1.0, %v3172
    %v3174 = vrcp.pop %v3171
    %v3175 = vmul.f32 1.0, %v3174
    %v3176 = vxor.u32 %v3157, 2147483648
    %v3177 = vxor.u32 %v3161, 2147483648
    %v3178 = vmul.f32 %v3176, 1.442695
    %v3179 = vpow.pop %v3178
    %v3180 = vmul.f32 %v3177, 1.442695
    %v3181 = vpow.pop %v3180
    %v3182 = vadd.f32 %v3179, 1.0
    %v3183 = vadd.f32 %v3181, 1.0
    %v3184 = vrcp.pop %v3182
    %v3185 = vmul.f32 1.0, %v3184
    %v3186 = vrcp.pop %v3183
    %v3187 = vmul.f32 1.0, %v3186
    %v3188 = vtanh.pop %v3158
    %v3189 = vtanh.pop %v3162
    %v3190 = vxor.u32 %v3159, 2147483648
    %v3191 = vxor.u32 %v3163, 2147483648
    %v3192 = vmul.f32 %v3190, 1.442695
    %v3193 = vpow.pop %v3192
    %v3194 = vmul.f32 %v3191, 1.442695
    %v3195 = vpow.pop %v3194
    %v3196 = vadd.f32 %v3193, 1.0
    %v3197 = vadd.f32 %v3195, 1.0
    %v3198 = vrcp.pop %v3196
    %v3199 = vmul.f32 1.0, %v3198
    %v3200 = vrcp.pop %v3197
    %v3201 = vmul.f32 1.0, %v3200
    %v3202 = vmul.f32 %v3185, %v3055
    %v3203 = vmul.f32 %v3187, %v3056
    %v3204 = vmul.f32 %v3173, %v3188
    %v3205 = vmul.f32 %v3175, %v3189
    %v3206 = vadd.f32 %v3202, %v3204
    %v3207 = vadd.f32 %v3203, %v3205
    %v3208 = vtanh.pop %v3206
    %v3209 = vtanh.pop %v3207
    %v3210 = vmul.f32 %v3199, %v3208
    %v3211 = vmul.f32 %v3201, %v3209
    %v3212 = vld [vmem:[%s1414] sm:$0xff]
    %v3213 = vld [vmem:[%s1414 + $0x8] sm:$0xff]
    %v3214 = vld [vmem:[%s1414 + $0x10] sm:$0xff]
    %v3215 = vld [vmem:[%s1414 + $0x18] sm:$0xff]
    %v3216 = vld [vmem:[%s1414 + $0x20] sm:$0xff]
    %v3217 = vld [vmem:[%s1414 + $0x28] sm:$0xff]
    %v3218 = vld [vmem:[%s1414 + $0x30] sm:$0xff]
    %v3219 = vld [vmem:[%s1414 + $0x38] sm:$0xff]
    %v3220 = vpack.c.bf16 %v3211, %v3210
    %3221 = vmatprep.subr.bf16.mxu0 %v2737
    %3222 = vmatpush1.bf16.msra.mxu0 %v2736
    %3223 = vmatprep.subr.bf16.mxu0 %v2741
    %3224 = vmatpush1.bf16.msra.mxu0 %v2740
    %3225 = vmatprep.subr.bf16.mxu0 %v2745
    %3226 = vmatpush1.bf16.msra.mxu0 %v2744
    %3227 = vmatprep.subr.bf16.mxu0 %v2749
    %3228 = vmatpush1.bf16.msra.mxu0 %v2748
    %3229 = vmatprep.subr.bf16.mxu0 %v2753
    %3230 = vmatpush1.bf16.msra.mxu0 %v2752
    %3231 = vmatprep.subr.bf16.mxu0 %v2757
    %3232 = vmatpush1.bf16.msra.mxu0 %v2756
    %3233 = vmatprep.subr.bf16.mxu0 %v2761
    %3234 = vmatpush1.bf16.msra.mxu0 %v2760
    %3235 = vmatprep.subr.bf16.mxu0 %v2765
    %3236 = vmatpush1.bf16.msra.mxu0 %v2764
    %3237 = vmatprep.subr.bf16.mxu0 0
    %3238 = vmatpush1.bf16.msra.mxu0 0
    %3239 = vmatprep.subr.bf16.mxu0 0
    %3240 = vmatpush1.bf16.msra.mxu0 0
    %3241 = vmatprep.subr.bf16.mxu0 0
    %3242 = vmatpush1.bf16.msra.mxu0 0
    %3243 = vmatprep.subr.bf16.mxu0 0
    %3244 = vmatpush1.bf16.msra.mxu0 0
    %3245 = vmatprep.subr.bf16.mxu0 0
    %3246 = vmatpush1.bf16.msra.mxu0 0
    %3247 = vmatprep.subr.bf16.mxu0 0
    %3248 = vmatpush1.bf16.msra.mxu0 0
    %3249 = vmatprep.subr.bf16.mxu0 0
    %3250 = vmatpush1.bf16.msra.mxu0 0
    %3251 = vmatprep.subr.bf16.mxu0 0
    %3252 = vmatpush1.bf16.msra.mxu0 0
    %3253 = vmatprep.mubr.bf16.mxu0 0
    %3254 = vmatmul.mubr.bf16.gmra.mrb[0].mxu0 %v3220
    %v3255 = vpop.f32.mrb[0].mxu0
    %v3256 = vadd.f32 0.0, %v3255
    %v3257 = vpop.f32.mrb[0].mxu0
    %v3258 = vadd.f32 0.0, %v3257
    %v3259 = vpop.f32.mrb[0].mxu0
    %v3260 = vadd.f32 0.0, %v3259
    %v3261 = vpop.f32.mrb[0].mxu0
    %v3262 = vadd.f32 0.0, %v3261
    %3263 = vdwg.mxu0
    %3264 = vmatprep.subr.bf16.mxu0 %v2739
    %3265 = vmatpush1.bf16.msra.mxu0 %v2738
    %3266 = vmatprep.subr.bf16.mxu0 %v2743
    %3267 = vmatpush1.bf16.msra.mxu0 %v2742
    %3268 = vmatprep.subr.bf16.mxu0 %v2747
    %3269 = vmatpush1.bf16.msra.mxu0 %v2746
    %3270 = vmatprep.subr.bf16.mxu0 %v2751
    %3271 = vmatpush1.bf16.msra.mxu0 %v2750
    %3272 = vmatprep.subr.bf16.mxu0 %v2755
    %3273 = vmatpush1.bf16.msra.mxu0 %v2754
    %3274 = vmatprep.subr.bf16.mxu0 %v2759
    %3275 = vmatpush1.bf16.msra.mxu0 %v2758
    %3276 = vmatprep.subr.bf16.mxu0 %v2763
    %3277 = vmatpush1.bf16.msra.mxu0 %v2762
    %3278 = vmatprep.subr.bf16.mxu0 %v2767
    %3279 = vmatpush1.bf16.msra.mxu0 %v2766
    %3280 = vmatprep.subr.bf16.mxu0 0
    %3281 = vmatpush1.bf16.msra.mxu0 0
    %3282 = vmatprep.subr.bf16.mxu0 0
    %3283 = vmatpush1.bf16.msra.mxu0 0
    %3284 = vmatprep.subr.bf16.mxu0 0
    %3285 = vmatpush1.bf16.msra.mxu0 0
    %3286 = vmatprep.subr.bf16.mxu0 0
    %3287 = vmatpush1.bf16.msra.mxu0 0
    %3288 = vmatprep.subr.bf16.mxu0 0
    %3289 = vmatpush1.bf16.msra.mxu0 0
    %3290 = vmatprep.subr.bf16.mxu0 0
    %3291 = vmatpush1.bf16.msra.mxu0 0
    %3292 = vmatprep.subr.bf16.mxu0 0
    %3293 = vmatpush1.bf16.msra.mxu0 0
    %3294 = vmatprep.subr.bf16.mxu0 0
    %3295 = vmatpush1.bf16.msra.mxu0 0
    %3296 = vmatprep.mubr.bf16.mxu0 0
    %3297 = vmatmul.mubr.bf16.gmra.mrb[0].mxu0 %v3220
    %v3298 = vpop.f32.mrb[0].mxu0
    %v3299 = vadd.f32 0.0, %v3298
    %v3300 = vpop.f32.mrb[0].mxu0
    %v3301 = vadd.f32 0.0, %v3300
    %v3302 = vpop.f32.mrb[0].mxu0
    %v3303 = vadd.f32 0.0, %v3302
    %v3304 = vpop.f32.mrb[0].mxu0
    %v3305 = vadd.f32 0.0, %v3304
    %3306 = vdwg.mxu0
    %v3307 = vadd.f32 %v3212, %v3256
    %v3308 = vadd.f32 %v3213, %v3258
    %v3309 = vadd.f32 %v3214, %v3299
    %v3310 = vadd.f32 %v3215, %v3301
    %v3311 = vadd.f32 %v3216, %v3260
    %v3312 = vadd.f32 %v3217, %v3262
    %v3313 = vadd.f32 %v3218, %v3303
    %v3314 = vadd.f32 %v3219, %v3305
    %v3315 = vxor.u32 %v3307, 2147483648
    %v3316 = vxor.u32 %v3311, 2147483648
    %v3317 = vmul.f32 %v3315, 1.442695
    %v3318 = vpow.pop %v3317
    %v3319 = vmul.f32 %v3316, 1.442695
    %v3320 = vpow.pop %v3319
    %v3321 = vadd.f32 %v3318, 1.0
    %v3322 = vadd.f32 %v3320, 1.0
    %v3323 = vrcp.pop %v3321
    %v3324 = vmul.f32 1.0, %v3323
    %v3325 = vrcp.pop %v3322
    %v3326 = vmul.f32 1.0, %v3325
    %v3327 = vxor.u32 %v3308, 2147483648
    %v3328 = vxor.u32 %v3312, 2147483648
    %v3329 = vmul.f32 %v3327, 1.442695
    %v3330 = vpow.pop %v3329
    %v3331 = vmul.f32 %v3328, 1.442695
    %v3332 = vpow.pop %v3331
    %v3333 = vadd.f32 %v3330, 1.0
    %v3334 = vadd.f32 %v3332, 1.0
    %v3335 = vrcp.pop %v3333
    %v3336 = vmul.f32 1.0, %v3335
    %v3337 = vrcp.pop %v3334
    %v3338 = vmul.f32 1.0, %v3337
    %v3339 = vtanh.pop %v3309
    %v3340 = vtanh.pop %v3313
    %v3341 = vxor.u32 %v3310, 2147483648
    %v3342 = vxor.u32 %v3314, 2147483648
    %v3343 = vmul.f32 %v3341, 1.442695
    %v3344 = vpow.pop %v3343
    %v3345 = vmul.f32 %v3342, 1.442695
    %v3346 = vpow.pop %v3345
    %v3347 = vadd.f32 %v3344, 1.0
    %v3348 = vadd.f32 %v3346, 1.0
    %v3349 = vrcp.pop %v3347
    %v3350 = vmul.f32 1.0, %v3349
    %v3351 = vrcp.pop %v3348
    %v3352 = vmul.f32 1.0, %v3351
    %v3353 = vmul.f32 %v3336, %v3206
    %v3354 = vmul.f32 %v3338, %v3207
    %v3355 = vmul.f32 %v3324, %v3339
    %v3356 = vmul.f32 %v3326, %v3340
    %v3357 = vadd.f32 %v3353, %v3355
    %v3358 = vadd.f32 %v3354, %v3356
    %v3359 = vtanh.pop %v3357
    %v3360 = vtanh.pop %v3358
    %v3361 = vmul.f32 %v3350, %v3359
    %v3362 = vmul.f32 %v3352, %v3360
    %v3363 = vld [vmem:[%s1606] sm:$0xff]
    %v3364 = vld [vmem:[%s1606 + $0x8] sm:$0xff]
    %v3365 = vld [vmem:[%s1606 + $0x10] sm:$0xff]
    %v3366 = vld [vmem:[%s1606 + $0x18] sm:$0xff]
    %v3367 = vld [vmem:[%s1606 + $0x20] sm:$0xff]
    %v3368 = vld [vmem:[%s1606 + $0x28] sm:$0xff]
    %v3369 = vld [vmem:[%s1606 + $0x30] sm:$0xff]
    %v3370 = vld [vmem:[%s1606 + $0x38] sm:$0xff]
    %v3371 = vpack.c.bf16 %v3362, %v3361
    %3372 = vmatprep.subr.bf16.mxu0 %v2737
    %3373 = vmatpush1.bf16.msra.mxu0 %v2736
    %3374 = vmatprep.subr.bf16.mxu0 %v2741
    %3375 = vmatpush1.bf16.msra.mxu0 %v2740
    %3376 = vmatprep.subr.bf16.mxu0 %v2745
    %3377 = vmatpush1.bf16.msra.mxu0 %v2744
    %3378 = vmatprep.subr.bf16.mxu0 %v2749
    %3379 = vmatpush1.bf16.msra.mxu0 %v2748
    %3380 = vmatprep.subr.bf16.mxu0 %v2753
    %3381 = vmatpush1.bf16.msra.mxu0 %v2752
    %3382 = vmatprep.subr.bf16.mxu0 %v2757
    %3383 = vmatpush1.bf16.msra.mxu0 %v2756
    %3384 = vmatprep.subr.bf16.mxu0 %v2761
    %3385 = vmatpush1.bf16.msra.mxu0 %v2760
    %3386 = vmatprep.subr.bf16.mxu0 %v2765
    %3387 = vmatpush1.bf16.msra.mxu0 %v2764
    %3388 = vmatprep.subr.bf16.mxu0 0
    %3389 = vmatpush1.bf16.msra.mxu0 0
    %3390 = vmatprep.subr.bf16.mxu0 0
    %3391 = vmatpush1.bf16.msra.mxu0 0
    %3392 = vmatprep.subr.bf16.mxu0 0
    %3393 = vmatpush1.bf16.msra.mxu0 0
    %3394 = vmatprep.subr.bf16.mxu0 0
    %3395 = vmatpush1.bf16.msra.mxu0 0
    %3396 = vmatprep.subr.bf16.mxu0 0
    %3397 = vmatpush1.bf16.msra.mxu0 0
    %3398 = vmatprep.subr.bf16.mxu0 0
    %3399 = vmatpush1.bf16.msra.mxu0 0
    %3400 = vmatprep.subr.bf16.mxu0 0
    %3401 = vmatpush1.bf16.msra.mxu0 0
    %3402 = vmatprep.subr.bf16.mxu0 0
    %3403 = vmatpush1.bf16.msra.mxu0 0
    %3404 = vmatprep.mubr.bf16.mxu0 0
    %3405 = vmatmul.mubr.bf16.gmra.mrb[0].mxu0 %v3371
    %v3406 = vpop.f32.mrb[0].mxu0
    %v3407 = vadd.f32 0.0, %v3406
    %v3408 = vpop.f32.mrb[0].mxu0
    %v3409 = vadd.f32 0.0, %v3408
    %v3410 = vpop.f32.mrb[0].mxu0
    %v3411 = vadd.f32 0.0, %v3410
    %v3412 = vpop.f32.mrb[0].mxu0
    %v3413 = vadd.f32 0.0, %v3412
    %3414 = vdwg.mxu0
    %3415 = vmatprep.subr.bf16.mxu0 %v2739
    %3416 = vmatpush1.bf16.msra.mxu0 %v2738
    %3417 = vmatprep.subr.bf16.mxu0 %v2743
    %3418 = vmatpush1.bf16.msra.mxu0 %v2742
    %3419 = vmatprep.subr.bf16.mxu0 %v2747
    %3420 = vmatpush1.bf16.msra.mxu0 %v2746
    %3421 = vmatprep.subr.bf16.mxu0 %v2751
    %3422 = vmatpush1.bf16.msra.mxu0 %v2750
    %3423 = vmatprep.subr.bf16.mxu0 %v2755
    %3424 = vmatpush1.bf16.msra.mxu0 %v2754
    %3425 = vmatprep.subr.bf16.mxu0 %v2759
    %3426 = vmatpush1.bf16.msra.mxu0 %v2758
    %3427 = vmatprep.subr.bf16.mxu0 %v2763
    %3428 = vmatpush1.bf16.msra.mxu0 %v2762
    %3429 = vmatprep.subr.bf16.mxu0 %v2767
    %3430 = vmatpush1.bf16.msra.mxu0 %v2766
    %3431 = vmatprep.subr.bf16.mxu0 0
    %3432 = vmatpush1.bf16.msra.mxu0 0
    %3433 = vmatprep.subr.bf16.mxu0 0
    %3434 = vmatpush1.bf16.msra.mxu0 0
    %3435 = vmatprep.subr.bf16.mxu0 0
    %3436 = vmatpush1.bf16.msra.mxu0 0
    %3437 = vmatprep.subr.bf16.mxu0 0
    %3438 = vmatpush1.bf16.msra.mxu0 0
    %3439 = vmatprep.subr.bf16.mxu0 0
    %3440 = vmatpush1.bf16.msra.mxu0 0
    %3441 = vmatprep.subr.bf16.mxu0 0
    %3442 = vmatpush1.bf16.msra.mxu0 0
    %3443 = vmatprep.subr.bf16.mxu0 0
    %3444 = vmatpush1.bf16.msra.mxu0 0
    %3445 = vmatprep.subr.bf16.mxu0 0
    %3446 = vmatpush1.bf16.msra.mxu0 0
    %3447 = vmatprep.mubr.bf16.mxu0 0
    %3448 = vmatmul.mubr.bf16.gmra.mrb[0].mxu0 %v3371
    %v3449 = vpop.f32.mrb[0].mxu0
    %v3450 = vadd.f32 0.0, %v3449
    %v3451 = vpop.f32.mrb[0].mxu0
    %v3452 = vadd.f32 0.0, %v3451
    %v3453 = vpop.f32.mrb[0].mxu0
    %v3454 = vadd.f32 0.0, %v3453
    %v3455 = vpop.f32.mrb[0].mxu0
    %v3456 = vadd.f32 0.0, %v3455
    %3457 = vdwg.mxu0
    %v3458 = vadd.f32 %v3363, %v3407
    %v3459 = vadd.f32 %v3364, %v3409
    %v3460 = vadd.f32 %v3365, %v3450
    %v3461 = vadd.f32 %v3366, %v3452
    %v3462 = vadd.f32 %v3367, %v3411
    %v3463 = vadd.f32 %v3368, %v3413
    %v3464 = vadd.f32 %v3369, %v3454
    %v3465 = vadd.f32 %v3370, %v3456
    %v3466 = vxor.u32 %v3458, 2147483648
    %v3467 = vxor.u32 %v3462, 2147483648
    %v3468 = vmul.f32 %v3466, 1.442695
    %v3469 = vpow.pop %v3468
    %v3470 = vmul.f32 %v3467, 1.442695
    %v3471 = vpow.pop %v3470
    %v3472 = vadd.f32 %v3469, 1.0
    %v3473 = vadd.f32 %v3471, 1.0
    %v3474 = vrcp.pop %v3472
    %v3475 = vmul.f32 1.0, %v3474
    %v3476 = vrcp.pop %v3473
    %v3477 = vmul.f32 1.0, %v3476
    %v3478 = vxor.u32 %v3459, 2147483648
    %v3479 = vxor.u32 %v3463, 2147483648
    %v3480 = vmul.f32 %v3478, 1.442695
    %v3481 = vpow.pop %v3480
    %v3482 = vmul.f32 %v3479, 1.442695
    %v3483 = vpow.pop %v3482
    %v3484 = vadd.f32 %v3481, 1.0
    %v3485 = vadd.f32 %v3483, 1.0
    %v3486 = vrcp.pop %v3484
    %v3487 = vmul.f32 1.0, %v3486
    %v3488 = vrcp.pop %v3485
    %v3489 = vmul.f32 1.0, %v3488
    %v3490 = vtanh.pop %v3460
    %v3491 = vtanh.pop %v3464
    %v3492 = vxor.u32 %v3461, 2147483648
    %v3493 = vxor.u32 %v3465, 2147483648
    %v3494 = vmul.f32 %v3492, 1.442695
    %v3495 = vpow.pop %v3494
    %v3496 = vmul.f32 %v3493, 1.442695
    %v3497 = vpow.pop %v3496
    %v3498 = vadd.f32 %v3495, 1.0
    %v3499 = vadd.f32 %v3497, 1.0
    %v3500 = vrcp.pop %v3498
    %v3501 = vmul.f32 1.0, %v3500
    %v3502 = vrcp.pop %v3499
    %v3503 = vmul.f32 1.0, %v3502
    %v3504 = vmul.f32 %v3487, %v3357
    %v3505 = vmul.f32 %v3489, %v3358
    %v3506 = vmul.f32 %v3475, %v3490
    %v3507 = vmul.f32 %v3477, %v3491
    %v3508 = vadd.f32 %v3504, %v3506
    %v3509 = vadd.f32 %v3505, %v3507
    %v3510 = vtanh.pop %v3508
    %v3511 = vtanh.pop %v3509
    %v3512 = vmul.f32 %v3501, %v3510
    %v3513 = vmul.f32 %v3503, %v3511
    %v3514 = vld [vmem:[%s1798] sm:$0xff]
    %v3515 = vld [vmem:[%s1798 + $0x8] sm:$0xff]
    %v3516 = vld [vmem:[%s1798 + $0x10] sm:$0xff]
    %v3517 = vld [vmem:[%s1798 + $0x18] sm:$0xff]
    %v3518 = vld [vmem:[%s1798 + $0x20] sm:$0xff]
    %v3519 = vld [vmem:[%s1798 + $0x28] sm:$0xff]
    %v3520 = vld [vmem:[%s1798 + $0x30] sm:$0xff]
    %v3521 = vld [vmem:[%s1798 + $0x38] sm:$0xff]
    %v3522 = vpack.c.bf16 %v3513, %v3512
    %3523 = vmatprep.subr.bf16.mxu0 %v2737
    %3524 = vmatpush1.bf16.msra.mxu0 %v2736
    %3525 = vmatprep.subr.bf16.mxu0 %v2741
    %3526 = vmatpush1.bf16.msra.mxu0 %v2740
    %3527 = vmatprep.subr.bf16.mxu0 %v2745
    %3528 = vmatpush1.bf16.msra.mxu0 %v2744
    %3529 = vmatprep.subr.bf16.mxu0 %v2749
    %3530 = vmatpush1.bf16.msra.mxu0 %v2748
    %3531 = vmatprep.subr.bf16.mxu0 %v2753
    %3532 = vmatpush1.bf16.msra.mxu0 %v2752
    %3533 = vmatprep.subr.bf16.mxu0 %v2757
    %3534 = vmatpush1.bf16.msra.mxu0 %v2756
    %3535 = vmatprep.subr.bf16.mxu0 %v2761
    %3536 = vmatpush1.bf16.msra.mxu0 %v2760
    %3537 = vmatprep.subr.bf16.mxu0 %v2765
    %3538 = vmatpush1.bf16.msra.mxu0 %v2764
    %3539 = vmatprep.subr.bf16.mxu0 0
    %3540 = vmatpush1.bf16.msra.mxu0 0
    %3541 = vmatprep.subr.bf16.mxu0 0
    %3542 = vmatpush1.bf16.msra.mxu0 0
    %3543 = vmatprep.subr.bf16.mxu0 0
    %3544 = vmatpush1.bf16.msra.mxu0 0
    %3545 = vmatprep.subr.bf16.mxu0 0
    %3546 = vmatpush1.bf16.msra.mxu0 0
    %3547 = vmatprep.subr.bf16.mxu0 0
    %3548 = vmatpush1.bf16.msra.mxu0 0
    %3549 = vmatprep.subr.bf16.mxu0 0
    %3550 = vmatpush1.bf16.msra.mxu0 0
    %3551 = vmatprep.subr.bf16.mxu0 0
    %3552 = vmatpush1.bf16.msra.mxu0 0
    %3553 = vmatprep.subr.bf16.mxu0 0
    %3554 = vmatpush1.bf16.msra.mxu0 0
    %3555 = vmatprep.mubr.bf16.mxu0 0
    %3556 = vmatmul.mubr.bf16.gmra.mrb[0].mxu0 %v3522
    %v3557 = vpop.f32.mrb[0].mxu0
    %v3558 = vadd.f32 0.0, %v3557
    %v3559 = vpop.f32.mrb[0].mxu0
    %v3560 = vadd.f32 0.0, %v3559
    %v3561 = vpop.f32.mrb[0].mxu0
    %v3562 = vadd.f32 0.0, %v3561
    %v3563 = vpop.f32.mrb[0].mxu0
    %v3564 = vadd.f32 0.0, %v3563
    %3565 = vdwg.mxu0
    %3566 = vmatprep.subr.bf16.mxu0 %v2739
    %3567 = vmatpush1.bf16.msra.mxu0 %v2738
    %3568 = vmatprep.subr.bf16.mxu0 %v2743
    %3569 = vmatpush1.bf16.msra.mxu0 %v2742
    %3570 = vmatprep.subr.bf16.mxu0 %v2747
    %3571 = vmatpush1.bf16.msra.mxu0 %v2746
    %3572 = vmatprep.subr.bf16.mxu0 %v2751
    %3573 = vmatpush1.bf16.msra.mxu0 %v2750
    %3574 = vmatprep.subr.bf16.mxu0 %v2755
    %3575 = vmatpush1.bf16.msra.mxu0 %v2754
    %3576 = vmatprep.subr.bf16.mxu0 %v2759
    %3577 = vmatpush1.bf16.msra.mxu0 %v2758
    %3578 = vmatprep.subr.bf16.mxu0 %v2763
    %3579 = vmatpush1.bf16.msra.mxu0 %v2762
    %3580 = vmatprep.subr.bf16.mxu0 %v2767
    %3581 = vmatpush1.bf16.msra.mxu0 %v2766
    %3582 = vmatprep.subr.bf16.mxu0 0
    %3583 = vmatpush1.bf16.msra.mxu0 0
    %3584 = vmatprep.subr.bf16.mxu0 0
    %3585 = vmatpush1.bf16.msra.mxu0 0
    %3586 = vmatprep.subr.bf16.mxu0 0
    %3587 = vmatpush1.bf16.msra.mxu0 0
    %3588 = vmatprep.subr.bf16.mxu0 0
    %3589 = vmatpush1.bf16.msra.mxu0 0
    %3590 = vmatprep.subr.bf16.mxu0 0
    %3591 = vmatpush1.bf16.msra.mxu0 0
    %3592 = vmatprep.subr.bf16.mxu0 0
    %3593 = vmatpush1.bf16.msra.mxu0 0
    %3594 = vmatprep.subr.bf16.mxu0 0
    %3595 = vmatpush1.bf16.msra.mxu0 0
    %3596 = vmatprep.subr.bf16.mxu0 0
    %3597 = vmatpush1.bf16.msra.mxu0 0
    %3598 = vmatprep.mubr.bf16.mxu0 0
    %3599 = vmatmul.mubr.bf16.gmra.mrb[0].mxu0 %v3522
    %v3600 = vpop.f32.mrb[0].mxu0
    %v3601 = vadd.f32 0.0, %v3600
    %v3602 = vpop.f32.mrb[0].mxu0
    %v3603 = vadd.f32 0.0, %v3602
    %v3604 = vpop.f32.mrb[0].mxu0
    %v3605 = vadd.f32 0.0, %v3604
    %v3606 = vpop.f32.mrb[0].mxu0
    %v3607 = vadd.f32 0.0, %v3606
    %3608 = vdwg.mxu0
    %v3609 = vadd.f32 %v3514, %v3558
    %v3610 = vadd.f32 %v3515, %v3560
    %v3611 = vadd.f32 %v3516, %v3601
    %v3612 = vadd.f32 %v3517, %v3603
    %v3613 = vadd.f32 %v3518, %v3562
    %v3614 = vadd.f32 %v3519, %v3564
    %v3615 = vadd.f32 %v3520, %v3605
    %v3616 = vadd.f32 %v3521, %v3607
    %v3617 = vxor.u32 %v3609, 2147483648
    %v3618 = vxor.u32 %v3613, 2147483648
    %v3619 = vmul.f32 %v3617, 1.442695
    %v3620 = vpow.pop %v3619
    %v3621 = vmul.f32 %v3618, 1.442695
    %v3622 = vpow.pop %v3621
    %v3623 = vadd.f32 %v3620, 1.0
    %v3624 = vadd.f32 %v3622, 1.0
    %v3625 = vrcp.pop %v3623
    %v3626 = vmul.f32 1.0, %v3625
    %v3627 = vrcp.pop %v3624
    %v3628 = vmul.f32 1.0, %v3627
    %v3629 = vxor.u32 %v3610, 2147483648
    %v3630 = vxor.u32 %v3614, 2147483648
    %v3631 = vmul.f32 %v3629, 1.442695
    %v3632 = vpow.pop %v3631
    %v3633 = vmul.f32 %v3630, 1.442695
    %v3634 = vpow.pop %v3633
    %v3635 = vadd.f32 %v3632, 1.0
    %v3636 = vadd.f32 %v3634, 1.0
    %v3637 = vrcp.pop %v3635
    %v3638 = vmul.f32 1.0, %v3637
    %v3639 = vrcp.pop %v3636
    %v3640 = vmul.f32 1.0, %v3639
    %v3641 = vtanh.pop %v3611
    %v3642 = vtanh.pop %v3615
    %v3643 = vxor.u32 %v3612, 2147483648
    %v3644 = vxor.u32 %v3616, 2147483648
    %v3645 = vmul.f32 %v3643, 1.442695
    %v3646 = vpow.pop %v3645
    %v3647 = vmul.f32 %v3644, 1.442695
    %v3648 = vpow.pop %v3647
    %v3649 = vadd.f32 %v3646, 1.0
    %v3650 = vadd.f32 %v3648, 1.0
    %v3651 = vrcp.pop %v3649
    %v3652 = vmul.f32 1.0, %v3651
    %v3653 = vrcp.pop %v3650
    %v3654 = vmul.f32 1.0, %v3653
    %v3655 = vmul.f32 %v3638, %v3508
    %v3656 = vmul.f32 %v3640, %v3509
    %v3657 = vmul.f32 %v3626, %v3641
    %v3658 = vmul.f32 %v3628, %v3642
    %v3659 = vadd.f32 %v3655, %v3657
    %v3660 = vadd.f32 %v3656, %v3658
    %v3661 = vtanh.pop %v3659
    %v3662 = vtanh.pop %v3660
    %v3663 = vmul.f32 %v3652, %v3661
    %v3664 = vmul.f32 %v3654, %v3662
    %v3665 = vld [vmem:[%s1990] sm:$0xff]
    %v3666 = vld [vmem:[%s1990 + $0x8] sm:$0xff]
    %v3667 = vld [vmem:[%s1990 + $0x10] sm:$0xff]
    %v3668 = vld [vmem:[%s1990 + $0x18] sm:$0xff]
    %v3669 = vld [vmem:[%s1990 + $0x20] sm:$0xff]
    %v3670 = vld [vmem:[%s1990 + $0x28] sm:$0xff]
    %v3671 = vld [vmem:[%s1990 + $0x30] sm:$0xff]
    %v3672 = vld [vmem:[%s1990 + $0x38] sm:$0xff]
    %v3673 = vpack.c.bf16 %v3664, %v3663
    %3674 = vmatprep.subr.bf16.mxu0 %v2737
    %3675 = vmatpush1.bf16.msra.mxu0 %v2736
    %3676 = vmatprep.subr.bf16.mxu0 %v2741
    %3677 = vmatpush1.bf16.msra.mxu0 %v2740
    %3678 = vmatprep.subr.bf16.mxu0 %v2745
    %3679 = vmatpush1.bf16.msra.mxu0 %v2744
    %3680 = vmatprep.subr.bf16.mxu0 %v2749
    %3681 = vmatpush1.bf16.msra.mxu0 %v2748
    %3682 = vmatprep.subr.bf16.mxu0 %v2753
    %3683 = vmatpush1.bf16.msra.mxu0 %v2752
    %3684 = vmatprep.subr.bf16.mxu0 %v2757
    %3685 = vmatpush1.bf16.msra.mxu0 %v2756
    %3686 = vmatprep.subr.bf16.mxu0 %v2761
    %3687 = vmatpush1.bf16.msra.mxu0 %v2760
    %3688 = vmatprep.subr.bf16.mxu0 %v2765
    %3689 = vmatpush1.bf16.msra.mxu0 %v2764
    %3690 = vmatprep.subr.bf16.mxu0 0
    %3691 = vmatpush1.bf16.msra.mxu0 0
    %3692 = vmatprep.subr.bf16.mxu0 0
    %3693 = vmatpush1.bf16.msra.mxu0 0
    %3694 = vmatprep.subr.bf16.mxu0 0
    %3695 = vmatpush1.bf16.msra.mxu0 0
    %3696 = vmatprep.subr.bf16.mxu0 0
    %3697 = vmatpush1.bf16.msra.mxu0 0
    %3698 = vmatprep.subr.bf16.mxu0 0
    %3699 = vmatpush1.bf16.msra.mxu0 0
    %3700 = vmatprep.subr.bf16.mxu0 0
    %3701 = vmatpush1.bf16.msra.mxu0 0
    %3702 = vmatprep.subr.bf16.mxu0 0
    %3703 = vmatpush1.bf16.msra.mxu0 0
    %3704 = vmatprep.subr.bf16.mxu0 0
    %3705 = vmatpush1.bf16.msra.mxu0 0
    %3706 = vmatprep.mubr.bf16.mxu0 0
    %3707 = vmatmul.mubr.bf16.gmra.mrb[0].mxu0 %v3673
    %v3708 = vpop.f32.mrb[0].mxu0
    %v3709 = vadd.f32 0.0, %v3708
    %v3710 = vpop.f32.mrb[0].mxu0
    %v3711 = vadd.f32 0.0, %v3710
    %v3712 = vpop.f32.mrb[0].mxu0
    %v3713 = vadd.f32 0.0, %v3712
    %v3714 = vpop.f32.mrb[0].mxu0
    %v3715 = vadd.f32 0.0, %v3714
    %3716 = vdwg.mxu0
    %3717 = vmatprep.subr.bf16.mxu0 %v2739
    %3718 = vmatpush1.bf16.msra.mxu0 %v2738
    %3719 = vmatprep.subr.bf16.mxu0 %v2743
    %3720 = vmatpush1.bf16.msra.mxu0 %v2742
    %3721 = vmatprep.subr.bf16.mxu0 %v2747
    %3722 = vmatpush1.bf16.msra.mxu0 %v2746
    %3723 = vmatprep.subr.bf16.mxu0 %v2751
    %3724 = vmatpush1.bf16.msra.mxu0 %v2750
    %3725 = vmatprep.subr.bf16.mxu0 %v2755
    %3726 = vmatpush1.bf16.msra.mxu0 %v2754
    %3727 = vmatprep.subr.bf16.mxu0 %v2759
    %3728 = vmatpush1.bf16.msra.mxu0 %v2758
    %3729 = vmatprep.subr.bf16.mxu0 %v2763
    %3730 = vmatpush1.bf16.msra.mxu0 %v2762
    %3731 = vmatprep.subr.bf16.mxu0 %v2767
    %3732 = vmatpush1.bf16.msra.mxu0 %v2766
    %3733 = vmatprep.subr.bf16.mxu0 0
    %3734 = vmatpush1.bf16.msra.mxu0 0
    %3735 = vmatprep.subr.bf16.mxu0 0
    %3736 = vmatpush1.bf16.msra.mxu0 0
    %3737 = vmatprep.subr.bf16.mxu0 0
    %3738 = vmatpush1.bf16.msra.mxu0 0
    %3739 = vmatprep.subr.bf16.mxu0 0
    %3740 = vmatpush1.bf16.msra.mxu0 0
    %3741 = vmatprep.subr.bf16.mxu0 0
    %3742 = vmatpush1.bf16.msra.mxu0 0
    %3743 = vmatprep.subr.bf16.mxu0 0
    %3744 = vmatpush1.bf16.msra.mxu0 0
    %3745 = vmatprep.subr.bf16.mxu0 0
    %3746 = vmatpush1.bf16.msra.mxu0 0
    %3747 = vmatprep.subr.bf16.mxu0 0
    %3748 = vmatpush1.bf16.msra.mxu0 0
    %3749 = vmatprep.mubr.bf16.mxu0 0
    %3750 = vmatmul.mubr.bf16.gmra.mrb[0].mxu0 %v3673
    %v3751 = vpop.f32.mrb[0].mxu0
    %v3752 = vadd.f32 0.0, %v3751
    %v3753 = vpop.f32.mrb[0].mxu0
    %v3754 = vadd.f32 0.0, %v3753
    %v3755 = vpop.f32.mrb[0].mxu0
    %v3756 = vadd.f32 0.0, %v3755
    %v3757 = vpop.f32.mrb[0].mxu0
    %v3758 = vadd.f32 0.0, %v3757
    %3759 = vdwg.mxu0
    %v3760 = vadd.f32 %v3665, %v3709
    %v3761 = vadd.f32 %v3666, %v3711
    %v3762 = vadd.f32 %v3667, %v3752
    %v3763 = vadd.f32 %v3668, %v3754
    %v3764 = vadd.f32 %v3669, %v3713
    %v3765 = vadd.f32 %v3670, %v3715
    %v3766 = vadd.f32 %v3671, %v3756
    %v3767 = vadd.f32 %v3672, %v3758
    %v3768 = vxor.u32 %v3760, 2147483648
    %v3769 = vxor.u32 %v3764, 2147483648
    %v3770 = vmul.f32 %v3768, 1.442695
    %v3771 = vpow.pop %v3770
    %v3772 = vmul.f32 %v3769, 1.442695
    %v3773 = vpow.pop %v3772
    %v3774 = vadd.f32 %v3771, 1.0
    %v3775 = vadd.f32 %v3773, 1.0
    %v3776 = vrcp.pop %v3774
    %v3777 = vmul.f32 1.0, %v3776
    %v3778 = vrcp.pop %v3775
    %v3779 = vmul.f32 1.0, %v3778
    %v3780 = vxor.u32 %v3761, 2147483648
    %v3781 = vxor.u32 %v3765, 2147483648
    %v3782 = vmul.f32 %v3780, 1.442695
    %v3783 = vpow.pop %v3782
    %v3784 = vmul.f32 %v3781, 1.442695
    %v3785 = vpow.pop %v3784
    %v3786 = vadd.f32 %v3783, 1.0
    %v3787 = vadd.f32 %v3785, 1.0
    %v3788 = vrcp.pop %v3786
    %v3789 = vmul.f32 1.0, %v3788
    %v3790 = vrcp.pop %v3787
    %v3791 = vmul.f32 1.0, %v3790
    %v3792 = vtanh.pop %v3762
    %v3793 = vtanh.pop %v3766
    %v3794 = vxor.u32 %v3763, 2147483648
    %v3795 = vxor.u32 %v3767, 2147483648
    %v3796 = vmul.f32 %v3794, 1.442695
    %v3797 = vpow.pop %v3796
    %v3798 = vmul.f32 %v3795, 1.442695
    %v3799 = vpow.pop %v3798
    %v3800 = vadd.f32 %v3797, 1.0
    %v3801 = vadd.f32 %v3799, 1.0
    %v3802 = vrcp.pop %v3800
    %v3803 = vmul.f32 1.0, %v3802
    %v3804 = vrcp.pop %v3801
    %v3805 = vmul.f32 1.0, %v3804
    %v3806 = vmul.f32 %v3789, %v3659
    %v3807 = vmul.f32 %v3791, %v3660
    %v3808 = vmul.f32 %v3777, %v3792
    %v3809 = vmul.f32 %v3779, %v3793
    %v3810 = vadd.f32 %v3806, %v3808
    %v3811 = vadd.f32 %v3807, %v3809
    %v3812 = vtanh.pop %v3810
    %v3813 = vtanh.pop %v3811
    %v3814 = vmul.f32 %v3803, %v3812
    %v3815 = vmul.f32 %v3805, %v3813
    %v3816 = vld [vmem:[%s2182] sm:$0xff]
    %v3817 = vld [vmem:[%s2182 + $0x8] sm:$0xff]
    %v3818 = vld [vmem:[%s2182 + $0x10] sm:$0xff]
    %v3819 = vld [vmem:[%s2182 + $0x18] sm:$0xff]
    %v3820 = vld [vmem:[%s2182 + $0x20] sm:$0xff]
    %v3821 = vld [vmem:[%s2182 + $0x28] sm:$0xff]
    %v3822 = vld [vmem:[%s2182 + $0x30] sm:$0xff]
    %v3823 = vld [vmem:[%s2182 + $0x38] sm:$0xff]
    %v3824 = vpack.c.bf16 %v3815, %v3814
    %3825 = vmatprep.subr.bf16.mxu0 %v2737
    %3826 = vmatpush1.bf16.msra.mxu0 %v2736
    %3827 = vmatprep.subr.bf16.mxu0 %v2741
    %3828 = vmatpush1.bf16.msra.mxu0 %v2740
    %3829 = vmatprep.subr.bf16.mxu0 %v2745
    %3830 = vmatpush1.bf16.msra.mxu0 %v2744
    %3831 = vmatprep.subr.bf16.mxu0 %v2749
    %3832 = vmatpush1.bf16.msra.mxu0 %v2748
    %3833 = vmatprep.subr.bf16.mxu0 %v2753
    %3834 = vmatpush1.bf16.msra.mxu0 %v2752
    %3835 = vmatprep.subr.bf16.mxu0 %v2757
    %3836 = vmatpush1.bf16.msra.mxu0 %v2756
    %3837 = vmatprep.subr.bf16.mxu0 %v2761
    %3838 = vmatpush1.bf16.msra.mxu0 %v2760
    %3839 = vmatprep.subr.bf16.mxu0 %v2765
    %3840 = vmatpush1.bf16.msra.mxu0 %v2764
    %3841 = vmatprep.subr.bf16.mxu0 0
    %3842 = vmatpush1.bf16.msra.mxu0 0
    %3843 = vmatprep.subr.bf16.mxu0 0
    %3844 = vmatpush1.bf16.msra.mxu0 0
    %3845 = vmatprep.subr.bf16.mxu0 0
    %3846 = vmatpush1.bf16.msra.mxu0 0
    %3847 = vmatprep.subr.bf16.mxu0 0
    %3848 = vmatpush1.bf16.msra.mxu0 0
    %3849 = vmatprep.subr.bf16.mxu0 0
    %3850 = vmatpush1.bf16.msra.mxu0 0
    %3851 = vmatprep.subr.bf16.mxu0 0
    %3852 = vmatpush1.bf16.msra.mxu0 0
    %3853 = vmatprep.subr.bf16.mxu0 0
    %3854 = vmatpush1.bf16.msra.mxu0 0
    %3855 = vmatprep.subr.bf16.mxu0 0
    %3856 = vmatpush1.bf16.msra.mxu0 0
    %3857 = vmatprep.mubr.bf16.mxu0 0
    %3858 = vmatmul.mubr.bf16.gmra.mrb[0].mxu0 %v3824
    %v3859 = vpop.f32.mrb[0].mxu0
    %v3860 = vadd.f32 0.0, %v3859
    %v3861 = vpop.f32.mrb[0].mxu0
    %v3862 = vadd.f32 0.0, %v3861
    %v3863 = vpop.f32.mrb[0].mxu0
    %v3864 = vadd.f32 0.0, %v3863
    %v3865 = vpop.f32.mrb[0].mxu0
    %v3866 = vadd.f32 0.0, %v3865
    %3867 = vdwg.mxu0
    %3868 = vmatprep.subr.bf16.mxu0 %v2739
    %3869 = vmatpush1.bf16.msra.mxu0 %v2738
    %3870 = vmatprep.subr.bf16.mxu0 %v2743
    %3871 = vmatpush1.bf16.msra.mxu0 %v2742
    %3872 = vmatprep.subr.bf16.mxu0 %v2747
    %3873 = vmatpush1.bf16.msra.mxu0 %v2746
    %3874 = vmatprep.subr.bf16.mxu0 %v2751
    %3875 = vmatpush1.bf16.msra.mxu0 %v2750
    %3876 = vmatprep.subr.bf16.mxu0 %v2755
    %3877 = vmatpush1.bf16.msra.mxu0 %v2754
    %3878 = vmatprep.subr.bf16.mxu0 %v2759
    %3879 = vmatpush1.bf16.msra.mxu0 %v2758
    %3880 = vmatprep.subr.bf16.mxu0 %v2763
    %3881 = vmatpush1.bf16.msra.mxu0 %v2762
    %3882 = vmatprep.subr.bf16.mxu0 %v2767
    %3883 = vmatpush1.bf16.msra.mxu0 %v2766
    %3884 = vmatprep.subr.bf16.mxu0 0
    %3885 = vmatpush1.bf16.msra.mxu0 0
    %3886 = vmatprep.subr.bf16.mxu0 0
    %3887 = vmatpush1.bf16.msra.mxu0 0
    %3888 = vmatprep.subr.bf16.mxu0 0
    %3889 = vmatpush1.bf16.msra.mxu0 0
    %3890 = vmatprep.subr.bf16.mxu0 0
    %3891 = vmatpush1.bf16.msra.mxu0 0
    %3892 = vmatprep.subr.bf16.mxu0 0
    %3893 = vmatpush1.bf16.msra.mxu0 0
    %3894 = vmatprep.subr.bf16.mxu0 0
    %3895 = vmatpush1.bf16.msra.mxu0 0
    %3896 = vmatprep.subr.bf16.mxu0 0
    %3897 = vmatpush1.bf16.msra.mxu0 0
    %3898 = vmatprep.subr.bf16.mxu0 0
    %3899 = vmatpush1.bf16.msra.mxu0 0
    %3900 = vmatprep.mubr.bf16.mxu0 0
    %3901 = vmatmul.mubr.bf16.gmra.mrb[0].mxu0 %v3824
    %v3902 = vpop.f32.mrb[0].mxu0
    %v3903 = vadd.f32 0.0, %v3902
    %v3904 = vpop.f32.mrb[0].mxu0
    %v3905 = vadd.f32 0.0, %v3904
    %v3906 = vpop.f32.mrb[0].mxu0
    %v3907 = vadd.f32 0.0, %v3906
    %v3908 = vpop.f32.mrb[0].mxu0
    %v3909 = vadd.f32 0.0, %v3908
    %3910 = vdwg.mxu0
    %v3911 = vadd.f32 %v3816, %v3860
    %v3912 = vadd.f32 %v3817, %v3862
    %v3913 = vadd.f32 %v3818, %v3903
    %v3914 = vadd.f32 %v3819, %v3905
    %v3915 = vadd.f32 %v3820, %v3864
    %v3916 = vadd.f32 %v3821, %v3866
    %v3917 = vadd.f32 %v3822, %v3907
    %v3918 = vadd.f32 %v3823, %v3909
    %v3919 = vxor.u32 %v3911, 2147483648
    %v3920 = vxor.u32 %v3915, 2147483648
    %v3921 = vmul.f32 %v3919, 1.442695
    %v3922 = vpow.pop %v3921
    %v3923 = vmul.f32 %v3920, 1.442695
    %v3924 = vpow.pop %v3923
    %v3925 = vadd.f32 %v3922, 1.0
    %v3926 = vadd.f32 %v3924, 1.0
    %v3927 = vrcp.pop %v3925
    %v3928 = vmul.f32 1.0, %v3927
    %v3929 = vrcp.pop %v3926
    %v3930 = vmul.f32 1.0, %v3929
    %v3931 = vxor.u32 %v3912, 2147483648
    %v3932 = vxor.u32 %v3916, 2147483648
    %v3933 = vmul.f32 %v3931, 1.442695
    %v3934 = vpow.pop %v3933
    %v3935 = vmul.f32 %v3932, 1.442695
    %v3936 = vpow.pop %v3935
    %v3937 = vadd.f32 %v3934, 1.0
    %v3938 = vadd.f32 %v3936, 1.0
    %v3939 = vrcp.pop %v3937
    %v3940 = vmul.f32 1.0, %v3939
    %v3941 = vrcp.pop %v3938
    %v3942 = vmul.f32 1.0, %v3941
    %v3943 = vtanh.pop %v3913
    %v3944 = vtanh.pop %v3917
    %v3945 = vxor.u32 %v3914, 2147483648
    %v3946 = vxor.u32 %v3918, 2147483648
    %v3947 = vmul.f32 %v3945, 1.442695
    %v3948 = vpow.pop %v3947
    %v3949 = vmul.f32 %v3946, 1.442695
    %v3950 = vpow.pop %v3949
    %v3951 = vadd.f32 %v3948, 1.0
    %v3952 = vadd.f32 %v3950, 1.0
    %v3953 = vrcp.pop %v3951
    %v3954 = vmul.f32 1.0, %v3953
    %v3955 = vrcp.pop %v3952
    %v3956 = vmul.f32 1.0, %v3955
    %v3957 = vmul.f32 %v3940, %v3810
    %v3958 = vmul.f32 %v3942, %v3811
    %v3959 = vmul.f32 %v3928, %v3943
    %v3960 = vmul.f32 %v3930, %v3944
    %v3961 = vadd.f32 %v3957, %v3959
    %v3962 = vadd.f32 %v3958, %v3960
    %v3963 = vtanh.pop %v3961
    %v3964 = vtanh.pop %v3962
    %v3965 = vmul.f32 %v3954, %v3963
    %v3966 = vmul.f32 %v3956, %v3964
    %v3967 = vld [vmem:[%s7] sm:$0xff]
    %v3968 = vld [vmem:[%s7 + $0x8] sm:$0xff]
    %v3969 = vld [vmem:[%s7 + $0x10] sm:$0xff]
    %v3970 = vld [vmem:[%s7 + $0x18] sm:$0xff]
    %v3971 = vld [vmem:[%s7 + $0x20] sm:$0xff]
    %v3972 = vld [vmem:[%s7 + $0x28] sm:$0xff]
    %v3973 = vld [vmem:[%s7 + $0x30] sm:$0xff]
    %v3974 = vld [vmem:[%s7 + $0x38] sm:$0xff]
    %v3975 = vld [vmem:[%s7 + $0x40] sm:$0xff]
    %v3976 = vld [vmem:[%s7 + $0x48] sm:$0xff]
    %v3977 = vld [vmem:[%s7 + $0x50] sm:$0xff]
    %v3978 = vld [vmem:[%s7 + $0x58] sm:$0xff]
    %v3979 = vld [vmem:[%s7 + $0x60] sm:$0xff]
    %v3980 = vld [vmem:[%s7 + $0x68] sm:$0xff]
    %v3981 = vld [vmem:[%s7 + $0x70] sm:$0xff]
    %v3982 = vld [vmem:[%s7 + $0x78] sm:$0xff]
    %v3983 = vld [vmem:[%s8] sm:$0x1]
    %v3985 = vlaneseq
    %v3986 = vshrl.u32 %v3985, 7
    %v3987 = vsub.s32 0, %v3986
    %v3988 = vrot.slane %v3983, %v3987
    %3990 = vmatprep.subr.mxu0 0.0
    %3991 = vmatpush1.msra.mxu0 %v3967
    %3992 = vmatprep.subr.mxu0 0.0
    %3993 = vmatpush1.msra.mxu0 %v3968
    %3994 = vmatprep.subr.mxu0 0.0
    %3995 = vmatpush1.msra.mxu0 %v3969
    %3996 = vmatprep.subr.mxu0 0.0
    %3997 = vmatpush1.msra.mxu0 %v3970
    %3998 = vmatprep.subr.mxu0 0.0
    %3999 = vmatpush1.msra.mxu0 %v3971
    %4000 = vmatprep.subr.mxu0 0.0
    %4001 = vmatpush1.msra.mxu0 %v3972
    %4002 = vmatprep.subr.mxu0 0.0
    %4003 = vmatpush1.msra.mxu0 %v3973
    %4004 = vmatprep.subr.mxu0 0.0
    %4005 = vmatpush1.msra.mxu0 %v3974
    %4006 = vmatprep.subr.mxu0 0.0
    %4007 = vmatpush1.msra.mxu0 %v3975
    %4008 = vmatprep.subr.mxu0 0.0
    %4009 = vmatpush1.msra.mxu0 %v3976
    %4010 = vmatprep.subr.mxu0 0.0
    %4011 = vmatpush1.msra.mxu0 %v3977
    %4012 = vmatprep.subr.mxu0 0.0
    %4013 = vmatpush1.msra.mxu0 %v3978
    %4014 = vmatprep.subr.mxu0 0.0
    %4015 = vmatpush1.msra.mxu0 %v3979
    %4016 = vmatprep.subr.mxu0 0.0
    %4017 = vmatpush1.msra.mxu0 %v3980
    %4018 = vmatprep.subr.mxu0 0.0
    %4019 = vmatpush1.msra.mxu0 %v3981
    %4020 = vmatprep.subr.mxu0 0.0
    %4021 = vmatpush1.msra.mxu0 %v3982
    %4022 = vmatprep.subr.mxu0 0.0
    %4023 = vmatpush1.msra.mxu0 0.0
    %4024 = vmatprep.subr.mxu0 0.0
    %4025 = vmatpush1.msra.mxu0 0.0
    %4026 = vmatprep.subr.mxu0 0.0
    %4027 = vmatpush1.msra.mxu0 0.0
    %4028 = vmatprep.subr.mxu0 0.0
    %4029 = vmatpush1.msra.mxu0 0.0
    %4030 = vmatprep.subr.mxu0 0.0
    %4031 = vmatpush1.msra.mxu0 0.0
    %4032 = vmatprep.subr.mxu0 0.0
    %4033 = vmatpush1.msra.mxu0 0.0
    %4034 = vmatprep.subr.mxu0 0.0
    %4035 = vmatpush1.msra.mxu0 0.0
    %4036 = vmatprep.subr.mxu0 0.0
    %4037 = vmatpush1.msra.mxu0 0.0
    %4038 = vmatprep.subr.mxu0 0.0
    %4039 = vmatpush1.msra.mxu0 0.0
    %4040 = vmatprep.subr.mxu0 0.0
    %4041 = vmatpush1.msra.mxu0 0.0
    %4042 = vmatprep.subr.mxu0 0.0
    %4043 = vmatpush1.msra.mxu0 0.0
    %4044 = vmatprep.subr.mxu0 0.0
    %4045 = vmatpush1.msra.mxu0 0.0
    %4046 = vmatprep.subr.mxu0 0.0
    %4047 = vmatpush1.msra.mxu0 0.0
    %4048 = vmatprep.subr.mxu0 0.0
    %4049 = vmatpush1.msra.mxu0 0.0
    %4050 = vmatprep.subr.mxu0 0.0
    %4051 = vmatpush1.msra.mxu0 0.0
    %4052 = vmatprep.subr.mxu0 0.0
    %4053 = vmatpush1.msra.mxu0 0.0
    %4054 = vmatprep.mubr.f32.mxu0 0.0
    %4055 = vmatmul.mubr.f32.gmra.mrb[0].mxu0 %v3965
    %v4056 = vpop.f32.mrb[0].mxu0
    %v4057 = vadd.f32 %v3988, %v4056
    %v4058 = vpop.f32.mrb[0].mxu0
    %4059 = vmatprep.mubr.f32.mxu0 0.0
    %4060 = vmatmul.mubr.f32.gmra.mrb[0].mxu0 %v3966
    %v4061 = vpop.f32.mrb[0].mxu0
    %v4062 = vadd.f32 %v3988, %v4061
    %v4063 = vpop.f32.mrb[0].mxu0
    %4064 = vdwg.mxu0
    %v4065 = vlaneseq
    %v4066 = vand.u32 %v4065, 127
    %vm4067 = vcmp.ge.s32.totalorder %v4066, 4
    %v4068 = vmul.f32 %v4057, 1.442695
    %v4069 = vpow.pop %v4068
    %v4070 = vmul.f32 %v4062, 1.442695
    %v4071 = vpow.pop %v4070
    %v4072 = vsel %vm4067, %v4069, %v4057
    %v4073 = vsel %vm4067, %v4071, %v4062
    %vm4074 = vcmask 64512
    %4075 = vst.msk [vmem:[%s9] sm:$0xff] %vm4074, %v4072
    %4076 = vst.msk [vmem:[%s9 + $0x8] sm:$0xff] %vm4074, %v4073
    // Predicated region
    $region59: #{lstm_bnn_forward.1} parent=1 // pred_check
      _
    $region60: #{lstm_bnn_forward.1} parent=1 // pred_check_branch
      %4078 = sbr.rel (0) target = $region62
    $region61: #{lstm_bnn_forward.1} parent=1 // pred_region
      _
    $region62: #{lstm_bnn_forward.1} parent=1 // pred_fallthru
      _
    // Predicated region
    $region63: #{lstm_bnn_forward.1} parent=1 // pred_check
      _
    $region64: #{lstm_bnn_forward.1} parent=1 // pred_check_branch
      %4080 = sbr.rel (0) target = $region66
    $region65: #{lstm_bnn_forward.1} parent=1 // pred_region
      _
    $region66: #{lstm_bnn_forward.1} parent=1 // pred_fallthru
      _
  %4081 = vsyncmov [#allocation6]
  %s4082 = vpop.sfrf %4081
  %p4083 = scmp.eq.s32.totalorder %s4082, 0
  %p4084 = pneg %p4083
  %4086 = shalt.err (%p4084)
  %s4087 = scalar_lea.sflag [#allocation6], 1
  %4088 = vsyncmov %s4087
  %s4089 = vpop.sfrf %4088
  %p4090 = scmp.eq.s32.totalorder %s4089, 0
  %p4091 = pneg %p4090
  %4093 = shalt.err (%p4091)
  %s4094 = scalar_lea.sflag [#allocation6], 2
  %4095 = vsyncmov %s4094
  %s4096 = vpop.sfrf %4095
  %p4097 = scmp.eq.s32.totalorder %s4096, 0
  %p4098 = pneg %p4097
  %4100 = shalt.err (%p4098)
  %s4101 = scalar_lea.sflag [#allocation6], 3
  %4102 = vsyncmov %s4101
  %s4103 = vpop.sfrf %4102
  %p4104 = scmp.eq.s32.totalorder %s4103, 0
  %p4105 = pneg %p4104
  %4107 = shalt.err (%p4105)

</llo_original>
